<compile_context>
chip_gen: v7x
topology: tpu7x:2x2x1
jax: 0.10.0
libtpu: 0.0.40
codegen_flags: <defaults>
</compile_context>

<pallas_src>
import functools

import jax
import jax.numpy as jnp
from jax.experimental import pallas as pl
from jax.experimental.pallas import tpu as pltpu


# ----------------------------------------------------------------------------
# Fused Pallas kernel: num_layers x LSTM (interleaved) + relu -> fc1 -> relu -> fc2
# ----------------------------------------------------------------------------
def fused_lstm_head_kernel(x_ref, *refs, hidden, seq_len, batch, input_size,
                           num_layers):
    """Refs layout:
        x_ref                      x      (B, T, Din)  batch-first, as in PyTorch
        refs[3*l .. 3*l+2]         per-layer (W_ih^T, W_hh^T, bias)
                                   shapes (Din_l, 4H), (H, 4H), (1, 4H)
                                   gate column order: i, f, o, g
        refs[3L .. 3L+3]           fc1_w (H,H), fc1_b (1,H), fc2_w (H,1), fc2_b (1,1)
        refs[3L+4]                 out    (B, 1)
    """
    H, T, B, L = hidden, seq_len, batch, num_layers
    w_refs = refs[:3 * L]
    fc1w_ref, fc1b_ref, fc2w_ref, fc2b_ref = refs[3 * L:3 * L + 4]
    out_ref = refs[3 * L + 4]

    # Load the (tiny) weights once; reused across all unrolled steps.
    wih = [w_refs[3 * l][...] for l in range(L)]        # (Din_l, 4H)
    whh = [w_refs[3 * l + 1][...] for l in range(L)]    # (H,     4H)
    bias = [w_refs[3 * l + 2][...] for l in range(L)]   # (1,     4H)

    # ---- Layer-0 input projection hoisted for all timesteps (off the serial
    # chain).  (B,T,Din)->(B*T,Din) and back are layout-preserving reshapes
    # (T == 8 sublanes), so this is one MXU pass, no data movement.
    x_flat = x_ref[...].reshape(B * T, input_size)
    pre0 = jnp.dot(x_flat, wih[0], preferred_element_type=jnp.float32) + bias[0]
    pre0 = pre0.reshape(B, T, 4 * H)   # batch-major; [:, t, :] slices are off-chain

    def lstm_cell(base, h_prev, c_prev, whh_l):
        """One LSTM step.  `base` = x_t @ W_ih^T + b, gate order (i, f, o, g)."""
        gates = base + jnp.dot(h_prev, whh_l, preferred_element_type=jnp.float32)
        # Full 128-lane EUP ops (no masked sub-vreg sigmoid/tanh), then cheap
        # static lane slices for the individual gates.
        sg = jax.nn.sigmoid(gates)
        th = jnp.tanh(gates)
        i_g = sg[:, 0 * H:1 * H]
        f_g = sg[:, 1 * H:2 * H]
        o_g = sg[:, 2 * H:3 * H]
        g_g = th[:, 3 * H:4 * H]
        c_new = f_g * c_prev + i_g * g_g
        h_new = o_g * jnp.tanh(c_new)
        return h_new, c_new

    h = [jnp.zeros((B, H), jnp.float32) for _ in range(L)]
    c = [jnp.zeros((B, H), jnp.float32) for _ in range(L)]

    # ---- Wavefront-interleaved recurrence: at skew step s, layer l runs time
    # step t = s - l.  Work items within one skew step belong to different
    # layers and are mutually independent -> L overlapping dependency chains.
    # Layers are visited in DESCENDING order so layer l consumes h[l-1] from
    # step t before layer l-1 overwrites it with step t+1 (Python/SSA order;
    # the hardware schedule is driven purely by the data deps).
    for s in range(T + L - 1):
        for l in range(L - 1, -1, -1):
            t = s - l
            if 0 <= t < T:
                if l == 0:
                    base = pre0[:, t, :]                             # (B, 4H)
                else:
                    # Input projection of the layer below's fresh h_t; this is
                    # NOT on layer l's own serial chain (overlaps freely).
                    base = bias[l] + jnp.dot(
                        h[l - 1], wih[l], preferred_element_type=jnp.float32)
                h[l], c[l] = lstm_cell(base, h[l], c[l], whh[l])

    # ---- Head: relu(h_last) -> fc1 -> relu -> fc2
    z = jnp.maximum(h[L - 1], 0.0)
    z = jnp.dot(z, fc1w_ref[...], preferred_element_type=jnp.float32) + fc1b_ref[...]
    z = jnp.maximum(z, 0.0)
    out_ref[...] = (
        jnp.dot(z, fc2w_ref[...], preferred_element_type=jnp.float32) + fc2b_ref[...]
    )


# ----------------------------------------------------------------------------
# One-time weight layout prep (outside the per-call path)
# ----------------------------------------------------------------------------
def _reorder_gates(w, hidden):
    """Reorder PyTorch gate blocks (i, f, g, o) -> (i, f, o, g) along axis 0."""
    H = hidden
    return jnp.concatenate([w[0:H], w[H:2 * H], w[3 * H:4 * H], w[2 * H:3 * H]],
                           axis=0)


def prepare_params(params, hidden):
    H = hidden
    prepped = {"layers": []}
    for (w_ih, w_hh, b_ih, b_hh) in params["lstm"]:
        wih_t = _reorder_gates(w_ih, H).T                        # (Din, 4H)
        whh_t = _reorder_gates(w_hh, H).T                        # (H,   4H)
        b = _reorder_gates(b_ih + b_hh, H).reshape(1, 4 * H)     # (1,   4H)
        prepped["layers"].append((wih_t, whh_t, b))
    prepped["fc1_w"] = params["fc1_w"].T                         # (H, H)
    prepped["fc1_b"] = params["fc1_b"].reshape(1, -1)            # (1, H)
    prepped["fc2_w"] = params["fc2_w"].T                         # (H, 1)
    prepped["fc2_b"] = params["fc2_b"].reshape(1, -1)            # (1, 1)
    return prepped


# ----------------------------------------------------------------------------
# Wrapper (no per-call layout work: x goes into the kernel as-is)
# ----------------------------------------------------------------------------
@functools.partial(jax.jit, static_argnames=("hidden", "num_layers"))
def enhanced_lstm_forward(x, prepped, hidden, num_layers):
    """x: (B, T, input_size) batch-first, like the PyTorch module."""
    B, T, Din = x.shape

    flat_w = []
    for (wih, whh, b) in prepped["layers"]:
        flat_w += [wih, whh, b]

    kernel = functools.partial(
        fused_lstm_head_kernel,
        hidden=hidden, seq_len=T, batch=B, input_size=Din, num_layers=num_layers)

    n_inputs = 1 + 3 * num_layers + 4
    return pl.pallas_call(
        kernel,
        out_shape=jax.ShapeDtypeStruct((B, 1), jnp.float32),
        in_specs=[pl.BlockSpec(memory_space=pltpu.MemorySpace.VMEM)] * n_inputs,
        out_specs=pl.BlockSpec(memory_space=pltpu.MemorySpace.VMEM),
    )(x, *flat_w, prepped["fc1_w"], prepped["fc1_b"],
      prepped["fc2_w"], prepped["fc2_b"])


# ----------------------------------------------------------------------------
# Pure-JAX reference (PyTorch layout / gate order) for correctness check
# ----------------------------------------------------------------------------
def reference_forward(x, params, hidden, num_layers):
    B, T, _ = x.shape
    out = x
    for layer in range(num_layers):
        w_ih, w_hh, b_ih, b_hh = params["lstm"][layer]
        h = jnp.zeros((B, hidden), jnp.float32)
        c = jnp.zeros((B, hidden), jnp.float32)
        hs = []
        for t in range(T):
            gates = out[:, t, :] @ w_ih.T + h @ w_hh.T + b_ih + b_hh
            i_g = jax.nn.sigmoid(gates[:, 0 * hidden:1 * hidden])
            f_g = jax.nn.sigmoid(gates[:, 1 * hidden:2 * hidden])
            g_g = jnp.tanh(gates[:, 2 * hidden:3 * hidden])
            o_g = jax.nn.sigmoid(gates[:, 3 * hidden:4 * hidden])
            c = f_g * c + i_g * g_g
            h = o_g * jnp.tanh(c)
            hs.append(h)
        out = jnp.stack(hs, axis=1)
    z = jnp.maximum(out[:, -1, :], 0.0)
    z = jnp.maximum(z @ params["fc1_w"].T + params["fc1_b"], 0.0)
    return z @ params["fc2_w"].T + params["fc2_b"]


# ----------------------------------------------------------------------------
# Deterministic parameter init (PyTorch-style uniform(-1/sqrt(H), 1/sqrt(H)))
# ----------------------------------------------------------------------------
def init_params(key, input_size, hidden, num_layers):
    k = 1.0 / jnp.sqrt(jnp.float32(hidden))
    params = {"lstm": []}
    for layer in range(num_layers):
        din = input_size if layer == 0 else hidden
        key, k1, k2, k3, k4 = jax.random.split(key, 5)
        params["lstm"].append((
            jax.random.uniform(k1, (4 * hidden, din), jnp.float32, -k, k),
            jax.random.uniform(k2, (4 * hidden, hidden), jnp.float32, -k, k),
            jax.random.uniform(k3, (4 * hidden,), jnp.float32, -k, k),
            jax.random.uniform(k4, (4 * hidden,), jnp.float32, -k, k),
        ))
    key, k1, k2, k3, k4 = jax.random.split(key, 5)
    params["fc1_w"] = jax.random.uniform(k1, (hidden, hidden), jnp.float32, -k, k)
    params["fc1_b"] = jax.random.uniform(k2, (hidden,), jnp.float32, -k, k)
    params["fc2_w"] = jax.random.uniform(k3, (1, hidden), jnp.float32, -k, k)
    params["fc2_b"] = jax.random.uniform(k4, (1,), jnp.float32, -k, k)
    return params


if __name__ == "__main__":
    B, T, INPUT_SIZE, HIDDEN, NUM_LAYERS = 2, 8, 16, 32, 2

    key = jax.random.PRNGKey(0)
    key_x, key_p = jax.random.split(key)
    x = jax.random.normal(key_x, (B, T, INPUT_SIZE), jnp.float32)
    params = init_params(key_p, INPUT_SIZE, HIDDEN, NUM_LAYERS)
    prepped = prepare_params(params, HIDDEN)   # one-time weight layout prep

    out = enhanced_lstm_forward(x, prepped, HIDDEN, NUM_LAYERS)
    out = jax.block_until_ready(out)

    ref = reference_forward(x, params, HIDDEN, NUM_LAYERS)
    assert out.shape == (B, 1), out.shape
    assert jnp.allclose(out, ref, atol=1e-3, rtol=1e-3), (out, ref)

    print("KERNEL_OK")
</pallas_src>

<mosaic_0001>
module attributes {stable_mosaic.version = 11 : i64} {
  func.func @fused_lstm_head_kernel(%arg0: memref<2x8x16xf32, #tpu.memory_space<vmem>>, %arg1: memref<16x128xf32, #tpu.memory_space<vmem>>, %arg2: memref<32x128xf32, #tpu.memory_space<vmem>>, %arg3: memref<1x128xf32, #tpu.memory_space<vmem>>, %arg4: memref<32x128xf32, #tpu.memory_space<vmem>>, %arg5: memref<32x128xf32, #tpu.memory_space<vmem>>, %arg6: memref<1x128xf32, #tpu.memory_space<vmem>>, %arg7: memref<32x32xf32, #tpu.memory_space<vmem>>, %arg8: memref<1x32xf32, #tpu.memory_space<vmem>>, %arg9: memref<32x1xf32, #tpu.memory_space<vmem>>, %arg10: memref<1x1xf32, #tpu.memory_space<vmem>>, %arg11: memref<2x1xf32, #tpu.memory_space<vmem>>) attributes {dimension_semantics = [], scalar_prefetch = 0 : i64, scratch_operands = 0 : i64, tpu.core_type = #tpu.core_type<tc>} {
    %c0 = arith.constant 0 : index
    %c0_0 = arith.constant 0 : index
    %0 = vector.load %arg1[%c0, %c0_0] : memref<16x128xf32, #tpu.memory_space<vmem>>, vector<16x128xf32>
    %c0_1 = arith.constant 0 : index
    %c0_2 = arith.constant 0 : index
    %1 = vector.load %arg4[%c0_1, %c0_2] : memref<32x128xf32, #tpu.memory_space<vmem>>, vector<32x128xf32>
    %c0_3 = arith.constant 0 : index
    %c0_4 = arith.constant 0 : index
    %2 = vector.load %arg2[%c0_3, %c0_4] : memref<32x128xf32, #tpu.memory_space<vmem>>, vector<32x128xf32>
    %c0_5 = arith.constant 0 : index
    %c0_6 = arith.constant 0 : index
    %3 = vector.load %arg5[%c0_5, %c0_6] : memref<32x128xf32, #tpu.memory_space<vmem>>, vector<32x128xf32>
    %c0_7 = arith.constant 0 : index
    %c0_8 = arith.constant 0 : index
    %4 = vector.load %arg3[%c0_7, %c0_8] : memref<1x128xf32, #tpu.memory_space<vmem>>, vector<1x128xf32>
    %c0_9 = arith.constant 0 : index
    %c0_10 = arith.constant 0 : index
    %5 = vector.load %arg6[%c0_9, %c0_10] : memref<1x128xf32, #tpu.memory_space<vmem>>, vector<1x128xf32>
    %c0_11 = arith.constant 0 : index
    %c0_12 = arith.constant 0 : index
    %c0_13 = arith.constant 0 : index
    %6 = vector.load %arg0[%c0_11, %c0_12, %c0_13] : memref<2x8x16xf32, #tpu.memory_space<vmem>>, vector<2x8x16xf32>
    %7 = vector.shape_cast %6 : vector<2x8x16xf32> to vector<16x16xf32>
    %cst = arith.constant dense<0.000000e+00> : vector<16x128xf32>
    %8 = tpu.matmul %7, %0, %cst {dimension_numbers = #tpu.dot_dimension_numbers<[1], [0], [0], [1], [0, 0, 1, 1], [], []>} : vector<16x16xf32>, vector<16x128xf32>, vector<16x128xf32> -> vector<16x128xf32>
    %9 = vector.broadcast %4 : vector<1x128xf32> to vector<16x128xf32>
    %10 = arith.addf %8, %9 : vector<16x128xf32>
    %11 = vector.shape_cast %10 : vector<16x128xf32> to vector<2x8x128xf32>
    %cst_14 = arith.constant 0.000000e+00 : f32
    %12 = vector.broadcast %cst_14 : f32 to vector<2x32xf32>
    %cst_15 = arith.constant 0.000000e+00 : f32
    %13 = vector.broadcast %cst_15 : f32 to vector<2x32xf32>
    %cst_16 = arith.constant 0.000000e+00 : f32
    %14 = vector.broadcast %cst_16 : f32 to vector<2x32xf32>
    %cst_17 = arith.constant 0.000000e+00 : f32
    %15 = vector.broadcast %cst_17 : f32 to vector<2x32xf32>
    %16 = vector.extract_strided_slice %11 {offsets = [0, 0, 0], sizes = [2, 1, 128], strides = [1, 1, 1]} : vector<2x8x128xf32> to vector<2x1x128xf32>
    %17 = vector.shape_cast %16 : vector<2x1x128xf32> to vector<2x128xf32>
    %cst_18 = arith.constant dense<0.000000e+00> : vector<2x128xf32>
    %18 = tpu.matmul %12, %2, %cst_18 {dimension_numbers = #tpu.dot_dimension_numbers<[1], [0], [0], [1], [0, 0, 1, 1], [], []>} : vector<2x32xf32>, vector<32x128xf32>, vector<2x128xf32> -> vector<2x128xf32>
    %19 = arith.addf %17, %18 : vector<2x128xf32>
    %20 = arith.negf %19 : vector<2x128xf32>
    %21 = math.exp %20 : vector<2x128xf32>
    %cst_19 = arith.constant 1.000000e+00 : f32
    %22 = vector.broadcast %cst_19 : f32 to vector<2x128xf32>
    %23 = arith.addf %22, %21 : vector<2x128xf32>
    %24 = arith.divf %22, %23 : vector<2x128xf32>
    %25 = math.tanh %19 : vector<2x128xf32>
    %26 = vector.extract_strided_slice %24 {offsets = [0, 0], sizes = [2, 32], strides = [1, 1]} : vector<2x128xf32> to vector<2x32xf32>
    %27 = vector.extract_strided_slice %24 {offsets = [0, 32], sizes = [2, 32], strides = [1, 1]} : vector<2x128xf32> to vector<2x32xf32>
    %28 = vector.extract_strided_slice %24 {offsets = [0, 64], sizes = [2, 32], strides = [1, 1]} : vector<2x128xf32> to vector<2x32xf32>
    %29 = vector.extract_strided_slice %25 {offsets = [0, 96], sizes = [2, 32], strides = [1, 1]} : vector<2x128xf32> to vector<2x32xf32>
    %30 = arith.mulf %27, %14 : vector<2x32xf32>
    %31 = arith.mulf %26, %29 : vector<2x32xf32>
    %32 = arith.addf %30, %31 : vector<2x32xf32>
    %33 = math.tanh %32 : vector<2x32xf32>
    %34 = arith.mulf %28, %33 : vector<2x32xf32>
    %cst_20 = arith.constant dense<0.000000e+00> : vector<2x128xf32>
    %35 = tpu.matmul %34, %1, %cst_20 {dimension_numbers = #tpu.dot_dimension_numbers<[1], [0], [0], [1], [0, 0, 1, 1], [], []>} : vector<2x32xf32>, vector<32x128xf32>, vector<2x128xf32> -> vector<2x128xf32>
    %36 = vector.broadcast %5 : vector<1x128xf32> to vector<2x128xf32>
    %37 = arith.addf %36, %35 : vector<2x128xf32>
    %cst_21 = arith.constant dense<0.000000e+00> : vector<2x128xf32>
    %38 = tpu.matmul %13, %3, %cst_21 {dimension_numbers = #tpu.dot_dimension_numbers<[1], [0], [0], [1], [0, 0, 1, 1], [], []>} : vector<2x32xf32>, vector<32x128xf32>, vector<2x128xf32> -> vector<2x128xf32>
    %39 = arith.addf %37, %38 : vector<2x128xf32>
    %40 = arith.negf %39 : vector<2x128xf32>
    %41 = math.exp %40 : vector<2x128xf32>
    %cst_22 = arith.constant 1.000000e+00 : f32
    %42 = vector.broadcast %cst_22 : f32 to vector<2x128xf32>
    %43 = arith.addf %42, %41 : vector<2x128xf32>
    %44 = arith.divf %42, %43 : vector<2x128xf32>
    %45 = math.tanh %39 : vector<2x128xf32>
    %46 = vector.extract_strided_slice %44 {offsets = [0, 0], sizes = [2, 32], strides = [1, 1]} : vector<2x128xf32> to vector<2x32xf32>
    %47 = vector.extract_strided_slice %44 {offsets = [0, 32], sizes = [2, 32], strides = [1, 1]} : vector<2x128xf32> to vector<2x32xf32>
    %48 = vector.extract_strided_slice %44 {offsets = [0, 64], sizes = [2, 32], strides = [1, 1]} : vector<2x128xf32> to vector<2x32xf32>
    %49 = vector.extract_strided_slice %45 {offsets = [0, 96], sizes = [2, 32], strides = [1, 1]} : vector<2x128xf32> to vector<2x32xf32>
    %50 = arith.mulf %47, %15 : vector<2x32xf32>
    %51 = arith.mulf %46, %49 : vector<2x32xf32>
    %52 = arith.addf %50, %51 : vector<2x32xf32>
    %53 = math.tanh %52 : vector<2x32xf32>
    %54 = arith.mulf %48, %53 : vector<2x32xf32>
    %55 = vector.extract_strided_slice %11 {offsets = [0, 1, 0], sizes = [2, 1, 128], strides = [1, 1, 1]} : vector<2x8x128xf32> to vector<2x1x128xf32>
    %56 = vector.shape_cast %55 : vector<2x1x128xf32> to vector<2x128xf32>
    %cst_23 = arith.constant dense<0.000000e+00> : vector<2x128xf32>
    %57 = tpu.matmul %34, %2, %cst_23 {dimension_numbers = #tpu.dot_dimension_numbers<[1], [0], [0], [1], [0, 0, 1, 1], [], []>} : vector<2x32xf32>, vector<32x128xf32>, vector<2x128xf32> -> vector<2x128xf32>
    %58 = arith.addf %56, %57 : vector<2x128xf32>
    %59 = arith.negf %58 : vector<2x128xf32>
    %60 = math.exp %59 : vector<2x128xf32>
    %cst_24 = arith.constant 1.000000e+00 : f32
    %61 = vector.broadcast %cst_24 : f32 to vector<2x128xf32>
    %62 = arith.addf %61, %60 : vector<2x128xf32>
    %63 = arith.divf %61, %62 : vector<2x128xf32>
    %64 = math.tanh %58 : vector<2x128xf32>
    %65 = vector.extract_strided_slice %63 {offsets = [0, 0], sizes = [2, 32], strides = [1, 1]} : vector<2x128xf32> to vector<2x32xf32>
    %66 = vector.extract_strided_slice %63 {offsets = [0, 32], sizes = [2, 32], strides = [1, 1]} : vector<2x128xf32> to vector<2x32xf32>
    %67 = vector.extract_strided_slice %63 {offsets = [0, 64], sizes = [2, 32], strides = [1, 1]} : vector<2x128xf32> to vector<2x32xf32>
    %68 = vector.extract_strided_slice %64 {offsets = [0, 96], sizes = [2, 32], strides = [1, 1]} : vector<2x128xf32> to vector<2x32xf32>
    %69 = arith.mulf %66, %32 : vector<2x32xf32>
    %70 = arith.mulf %65, %68 : vector<2x32xf32>
    %71 = arith.addf %69, %70 : vector<2x32xf32>
    %72 = math.tanh %71 : vector<2x32xf32>
    %73 = arith.mulf %67, %72 : vector<2x32xf32>
    %cst_25 = arith.constant dense<0.000000e+00> : vector<2x128xf32>
    %74 = tpu.matmul %73, %1, %cst_25 {dimension_numbers = #tpu.dot_dimension_numbers<[1], [0], [0], [1], [0, 0, 1, 1], [], []>} : vector<2x32xf32>, vector<32x128xf32>, vector<2x128xf32> -> vector<2x128xf32>
    %75 = vector.broadcast %5 : vector<1x128xf32> to vector<2x128xf32>
    %76 = arith.addf %75, %74 : vector<2x128xf32>
    %cst_26 = arith.constant dense<0.000000e+00> : vector<2x128xf32>
    %77 = tpu.matmul %54, %3, %cst_26 {dimension_numbers = #tpu.dot_dimension_numbers<[1], [0], [0], [1], [0, 0, 1, 1], [], []>} : vector<2x32xf32>, vector<32x128xf32>, vector<2x128xf32> -> vector<2x128xf32>
    %78 = arith.addf %76, %77 : vector<2x128xf32>
    %79 = arith.negf %78 : vector<2x128xf32>
    %80 = math.exp %79 : vector<2x128xf32>
    %cst_27 = arith.constant 1.000000e+00 : f32
    %81 = vector.broadcast %cst_27 : f32 to vector<2x128xf32>
    %82 = arith.addf %81, %80 : vector<2x128xf32>
    %83 = arith.divf %81, %82 : vector<2x128xf32>
    %84 = math.tanh %78 : vector<2x128xf32>
    %85 = vector.extract_strided_slice %83 {offsets = [0, 0], sizes = [2, 32], strides = [1, 1]} : vector<2x128xf32> to vector<2x32xf32>
    %86 = vector.extract_strided_slice %83 {offsets = [0, 32], sizes = [2, 32], strides = [1, 1]} : vector<2x128xf32> to vector<2x32xf32>
    %87 = vector.extract_strided_slice %83 {offsets = [0, 64], sizes = [2, 32], strides = [1, 1]} : vector<2x128xf32> to vector<2x32xf32>
    %88 = vector.extract_strided_slice %84 {offsets = [0, 96], sizes = [2, 32], strides = [1, 1]} : vector<2x128xf32> to vector<2x32xf32>
    %89 = arith.mulf %86, %52 : vector<2x32xf32>
    %90 = arith.mulf %85, %88 : vector<2x32xf32>
    %91 = arith.addf %89, %90 : vector<2x32xf32>
    %92 = math.tanh %91 : vector<2x32xf32>
    %93 = arith.mulf %87, %92 : vector<2x32xf32>
    %94 = vector.extract_strided_slice %11 {offsets = [0, 2, 0], sizes = [2, 1, 128], strides = [1, 1, 1]} : vector<2x8x128xf32> to vector<2x1x128xf32>
    %95 = vector.shape_cast %94 : vector<2x1x128xf32> to vector<2x128xf32>
    %cst_28 = arith.constant dense<0.000000e+00> : vector<2x128xf32>
    %96 = tpu.matmul %73, %2, %cst_28 {dimension_numbers = #tpu.dot_dimension_numbers<[1], [0], [0], [1], [0, 0, 1, 1], [], []>} : vector<2x32xf32>, vector<32x128xf32>, vector<2x128xf32> -> vector<2x128xf32>
    %97 = arith.addf %95, %96 : vector<2x128xf32>
    %98 = arith.negf %97 : vector<2x128xf32>
    %99 = math.exp %98 : vector<2x128xf32>
    %cst_29 = arith.constant 1.000000e+00 : f32
    %100 = vector.broadcast %cst_29 : f32 to vector<2x128xf32>
    %101 = arith.addf %100, %99 : vector<2x128xf32>
    %102 = arith.divf %100, %101 : vector<2x128xf32>
    %103 = math.tanh %97 : vector<2x128xf32>
    %104 = vector.extract_strided_slice %102 {offsets = [0, 0], sizes = [2, 32], strides = [1, 1]} : vector<2x128xf32> to vector<2x32xf32>
    %105 = vector.extract_strided_slice %102 {offsets = [0, 32], sizes = [2, 32], strides = [1, 1]} : vector<2x128xf32> to vector<2x32xf32>
    %106 = vector.extract_strided_slice %102 {offsets = [0, 64], sizes = [2, 32], strides = [1, 1]} : vector<2x128xf32> to vector<2x32xf32>
    %107 = vector.extract_strided_slice %103 {offsets = [0, 96], sizes = [2, 32], strides = [1, 1]} : vector<2x128xf32> to vector<2x32xf32>
    %108 = arith.mulf %105, %71 : vector<2x32xf32>
    %109 = arith.mulf %104, %107 : vector<2x32xf32>
    %110 = arith.addf %108, %109 : vector<2x32xf32>
    %111 = math.tanh %110 : vector<2x32xf32>
    %112 = arith.mulf %106, %111 : vector<2x32xf32>
    %cst_30 = arith.constant dense<0.000000e+00> : vector<2x128xf32>
    %113 = tpu.matmul %112, %1, %cst_30 {dimension_numbers = #tpu.dot_dimension_numbers<[1], [0], [0], [1], [0, 0, 1, 1], [], []>} : vector<2x32xf32>, vector<32x128xf32>, vector<2x128xf32> -> vector<2x128xf32>
    %114 = vector.broadcast %5 : vector<1x128xf32> to vector<2x128xf32>
    %115 = arith.addf %114, %113 : vector<2x128xf32>
    %cst_31 = arith.constant dense<0.000000e+00> : vector<2x128xf32>
    %116 = tpu.matmul %93, %3, %cst_31 {dimension_numbers = #tpu.dot_dimension_numbers<[1], [0], [0], [1], [0, 0, 1, 1], [], []>} : vector<2x32xf32>, vector<32x128xf32>, vector<2x128xf32> -> vector<2x128xf32>
    %117 = arith.addf %115, %116 : vector<2x128xf32>
    %118 = arith.negf %117 : vector<2x128xf32>
    %119 = math.exp %118 : vector<2x128xf32>
    %cst_32 = arith.constant 1.000000e+00 : f32
    %120 = vector.broadcast %cst_32 : f32 to vector<2x128xf32>
    %121 = arith.addf %120, %119 : vector<2x128xf32>
    %122 = arith.divf %120, %121 : vector<2x128xf32>
    %123 = math.tanh %117 : vector<2x128xf32>
    %124 = vector.extract_strided_slice %122 {offsets = [0, 0], sizes = [2, 32], strides = [1, 1]} : vector<2x128xf32> to vector<2x32xf32>
    %125 = vector.extract_strided_slice %122 {offsets = [0, 32], sizes = [2, 32], strides = [1, 1]} : vector<2x128xf32> to vector<2x32xf32>
    %126 = vector.extract_strided_slice %122 {offsets = [0, 64], sizes = [2, 32], strides = [1, 1]} : vector<2x128xf32> to vector<2x32xf32>
    %127 = vector.extract_strided_slice %123 {offsets = [0, 96], sizes = [2, 32], strides = [1, 1]} : vector<2x128xf32> to vector<2x32xf32>
    %128 = arith.mulf %125, %91 : vector<2x32xf32>
    %129 = arith.mulf %124, %127 : vector<2x32xf32>
    %130 = arith.addf %128, %129 : vector<2x32xf32>
    %131 = math.tanh %130 : vector<2x32xf32>
    %132 = arith.mulf %126, %131 : vector<2x32xf32>
    %133 = vector.extract_strided_slice %11 {offsets = [0, 3, 0], sizes = [2, 1, 128], strides = [1, 1, 1]} : vector<2x8x128xf32> to vector<2x1x128xf32>
    %134 = vector.shape_cast %133 : vector<2x1x128xf32> to vector<2x128xf32>
    %cst_33 = arith.constant dense<0.000000e+00> : vector<2x128xf32>
    %135 = tpu.matmul %112, %2, %cst_33 {dimension_numbers = #tpu.dot_dimension_numbers<[1], [0], [0], [1], [0, 0, 1, 1], [], []>} : vector<2x32xf32>, vector<32x128xf32>, vector<2x128xf32> -> vector<2x128xf32>
    %136 = arith.addf %134, %135 : vector<2x128xf32>
    %137 = arith.negf %136 : vector<2x128xf32>
    %138 = math.exp %137 : vector<2x128xf32>
    %cst_34 = arith.constant 1.000000e+00 : f32
    %139 = vector.broadcast %cst_34 : f32 to vector<2x128xf32>
    %140 = arith.addf %139, %138 : vector<2x128xf32>
    %141 = arith.divf %139, %140 : vector<2x128xf32>
    %142 = math.tanh %136 : vector<2x128xf32>
    %143 = vector.extract_strided_slice %141 {offsets = [0, 0], sizes = [2, 32], strides = [1, 1]} : vector<2x128xf32> to vector<2x32xf32>
    %144 = vector.extract_strided_slice %141 {offsets = [0, 32], sizes = [2, 32], strides = [1, 1]} : vector<2x128xf32> to vector<2x32xf32>
    %145 = vector.extract_strided_slice %141 {offsets = [0, 64], sizes = [2, 32], strides = [1, 1]} : vector<2x128xf32> to vector<2x32xf32>
    %146 = vector.extract_strided_slice %142 {offsets = [0, 96], sizes = [2, 32], strides = [1, 1]} : vector<2x128xf32> to vector<2x32xf32>
    %147 = arith.mulf %144, %110 : vector<2x32xf32>
    %148 = arith.mulf %143, %146 : vector<2x32xf32>
    %149 = arith.addf %147, %148 : vector<2x32xf32>
    %150 = math.tanh %149 : vector<2x32xf32>
    %151 = arith.mulf %145, %150 : vector<2x32xf32>
    %cst_35 = arith.constant dense<0.000000e+00> : vector<2x128xf32>
    %152 = tpu.matmul %151, %1, %cst_35 {dimension_numbers = #tpu.dot_dimension_numbers<[1], [0], [0], [1], [0, 0, 1, 1], [], []>} : vector<2x32xf32>, vector<32x128xf32>, vector<2x128xf32> -> vector<2x128xf32>
    %153 = vector.broadcast %5 : vector<1x128xf32> to vector<2x128xf32>
    %154 = arith.addf %153, %152 : vector<2x128xf32>
    %cst_36 = arith.constant dense<0.000000e+00> : vector<2x128xf32>
    %155 = tpu.matmul %132, %3, %cst_36 {dimension_numbers = #tpu.dot_dimension_numbers<[1], [0], [0], [1], [0, 0, 1, 1], [], []>} : vector<2x32xf32>, vector<32x128xf32>, vector<2x128xf32> -> vector<2x128xf32>
    %156 = arith.addf %154, %155 : vector<2x128xf32>
    %157 = arith.negf %156 : vector<2x128xf32>
    %158 = math.exp %157 : vector<2x128xf32>
    %cst_37 = arith.constant 1.000000e+00 : f32
    %159 = vector.broadcast %cst_37 : f32 to vector<2x128xf32>
    %160 = arith.addf %159, %158 : vector<2x128xf32>
    %161 = arith.divf %159, %160 : vector<2x128xf32>
    %162 = math.tanh %156 : vector<2x128xf32>
    %163 = vector.extract_strided_slice %161 {offsets = [0, 0], sizes = [2, 32], strides = [1, 1]} : vector<2x128xf32> to vector<2x32xf32>
    %164 = vector.extract_strided_slice %161 {offsets = [0, 32], sizes = [2, 32], strides = [1, 1]} : vector<2x128xf32> to vector<2x32xf32>
    %165 = vector.extract_strided_slice %161 {offsets = [0, 64], sizes = [2, 32], strides = [1, 1]} : vector<2x128xf32> to vector<2x32xf32>
    %166 = vector.extract_strided_slice %162 {offsets = [0, 96], sizes = [2, 32], strides = [1, 1]} : vector<2x128xf32> to vector<2x32xf32>
    %167 = arith.mulf %164, %130 : vector<2x32xf32>
    %168 = arith.mulf %163, %166 : vector<2x32xf32>
    %169 = arith.addf %167, %168 : vector<2x32xf32>
    %170 = math.tanh %169 : vector<2x32xf32>
    %171 = arith.mulf %165, %170 : vector<2x32xf32>
    %172 = vector.extract_strided_slice %11 {offsets = [0, 4, 0], sizes = [2, 1, 128], strides = [1, 1, 1]} : vector<2x8x128xf32> to vector<2x1x128xf32>
    %173 = vector.shape_cast %172 : vector<2x1x128xf32> to vector<2x128xf32>
    %cst_38 = arith.constant dense<0.000000e+00> : vector<2x128xf32>
    %174 = tpu.matmul %151, %2, %cst_38 {dimension_numbers = #tpu.dot_dimension_numbers<[1], [0], [0], [1], [0, 0, 1, 1], [], []>} : vector<2x32xf32>, vector<32x128xf32>, vector<2x128xf32> -> vector<2x128xf32>
    %175 = arith.addf %173, %174 : vector<2x128xf32>
    %176 = arith.negf %175 : vector<2x128xf32>
    %177 = math.exp %176 : vector<2x128xf32>
    %cst_39 = arith.constant 1.000000e+00 : f32
    %178 = vector.broadcast %cst_39 : f32 to vector<2x128xf32>
    %179 = arith.addf %178, %177 : vector<2x128xf32>
    %180 = arith.divf %178, %179 : vector<2x128xf32>
    %181 = math.tanh %175 : vector<2x128xf32>
    %182 = vector.extract_strided_slice %180 {offsets = [0, 0], sizes = [2, 32], strides = [1, 1]} : vector<2x128xf32> to vector<2x32xf32>
    %183 = vector.extract_strided_slice %180 {offsets = [0, 32], sizes = [2, 32], strides = [1, 1]} : vector<2x128xf32> to vector<2x32xf32>
    %184 = vector.extract_strided_slice %180 {offsets = [0, 64], sizes = [2, 32], strides = [1, 1]} : vector<2x128xf32> to vector<2x32xf32>
    %185 = vector.extract_strided_slice %181 {offsets = [0, 96], sizes = [2, 32], strides = [1, 1]} : vector<2x128xf32> to vector<2x32xf32>
    %186 = arith.mulf %183, %149 : vector<2x32xf32>
    %187 = arith.mulf %182, %185 : vector<2x32xf32>
    %188 = arith.addf %186, %187 : vector<2x32xf32>
    %189 = math.tanh %188 : vector<2x32xf32>
    %190 = arith.mulf %184, %189 : vector<2x32xf32>
    %cst_40 = arith.constant dense<0.000000e+00> : vector<2x128xf32>
    %191 = tpu.matmul %190, %1, %cst_40 {dimension_numbers = #tpu.dot_dimension_numbers<[1], [0], [0], [1], [0, 0, 1, 1], [], []>} : vector<2x32xf32>, vector<32x128xf32>, vector<2x128xf32> -> vector<2x128xf32>
    %192 = vector.broadcast %5 : vector<1x128xf32> to vector<2x128xf32>
    %193 = arith.addf %192, %191 : vector<2x128xf32>
    %cst_41 = arith.constant dense<0.000000e+00> : vector<2x128xf32>
    %194 = tpu.matmul %171, %3, %cst_41 {dimension_numbers = #tpu.dot_dimension_numbers<[1], [0], [0], [1], [0, 0, 1, 1], [], []>} : vector<2x32xf32>, vector<32x128xf32>, vector<2x128xf32> -> vector<2x128xf32>
    %195 = arith.addf %193, %194 : vector<2x128xf32>
    %196 = arith.negf %195 : vector<2x128xf32>
    %197 = math.exp %196 : vector<2x128xf32>
    %cst_42 = arith.constant 1.000000e+00 : f32
    %198 = vector.broadcast %cst_42 : f32 to vector<2x128xf32>
    %199 = arith.addf %198, %197 : vector<2x128xf32>
    %200 = arith.divf %198, %199 : vector<2x128xf32>
    %201 = math.tanh %195 : vector<2x128xf32>
    %202 = vector.extract_strided_slice %200 {offsets = [0, 0], sizes = [2, 32], strides = [1, 1]} : vector<2x128xf32> to vector<2x32xf32>
    %203 = vector.extract_strided_slice %200 {offsets = [0, 32], sizes = [2, 32], strides = [1, 1]} : vector<2x128xf32> to vector<2x32xf32>
    %204 = vector.extract_strided_slice %200 {offsets = [0, 64], sizes = [2, 32], strides = [1, 1]} : vector<2x128xf32> to vector<2x32xf32>
    %205 = vector.extract_strided_slice %201 {offsets = [0, 96], sizes = [2, 32], strides = [1, 1]} : vector<2x128xf32> to vector<2x32xf32>
    %206 = arith.mulf %203, %169 : vector<2x32xf32>
    %207 = arith.mulf %202, %205 : vector<2x32xf32>
    %208 = arith.addf %206, %207 : vector<2x32xf32>
    %209 = math.tanh %208 : vector<2x32xf32>
    %210 = arith.mulf %204, %209 : vector<2x32xf32>
    %211 = vector.extract_strided_slice %11 {offsets = [0, 5, 0], sizes = [2, 1, 128], strides = [1, 1, 1]} : vector<2x8x128xf32> to vector<2x1x128xf32>
    %212 = vector.shape_cast %211 : vector<2x1x128xf32> to vector<2x128xf32>
    %cst_43 = arith.constant dense<0.000000e+00> : vector<2x128xf32>
    %213 = tpu.matmul %190, %2, %cst_43 {dimension_numbers = #tpu.dot_dimension_numbers<[1], [0], [0], [1], [0, 0, 1, 1], [], []>} : vector<2x32xf32>, vector<32x128xf32>, vector<2x128xf32> -> vector<2x128xf32>
    %214 = arith.addf %212, %213 : vector<2x128xf32>
    %215 = arith.negf %214 : vector<2x128xf32>
    %216 = math.exp %215 : vector<2x128xf32>
    %cst_44 = arith.constant 1.000000e+00 : f32
    %217 = vector.broadcast %cst_44 : f32 to vector<2x128xf32>
    %218 = arith.addf %217, %216 : vector<2x128xf32>
    %219 = arith.divf %217, %218 : vector<2x128xf32>
    %220 = math.tanh %214 : vector<2x128xf32>
    %221 = vector.extract_strided_slice %219 {offsets = [0, 0], sizes = [2, 32], strides = [1, 1]} : vector<2x128xf32> to vector<2x32xf32>
    %222 = vector.extract_strided_slice %219 {offsets = [0, 32], sizes = [2, 32], strides = [1, 1]} : vector<2x128xf32> to vector<2x32xf32>
    %223 = vector.extract_strided_slice %219 {offsets = [0, 64], sizes = [2, 32], strides = [1, 1]} : vector<2x128xf32> to vector<2x32xf32>
    %224 = vector.extract_strided_slice %220 {offsets = [0, 96], sizes = [2, 32], strides = [1, 1]} : vector<2x128xf32> to vector<2x32xf32>
    %225 = arith.mulf %222, %188 : vector<2x32xf32>
    %226 = arith.mulf %221, %224 : vector<2x32xf32>
    %227 = arith.addf %225, %226 : vector<2x32xf32>
    %228 = math.tanh %227 : vector<2x32xf32>
    %229 = arith.mulf %223, %228 : vector<2x32xf32>
    %cst_45 = arith.constant dense<0.000000e+00> : vector<2x128xf32>
    %230 = tpu.matmul %229, %1, %cst_45 {dimension_numbers = #tpu.dot_dimension_numbers<[1], [0], [0], [1], [0, 0, 1, 1], [], []>} : vector<2x32xf32>, vector<32x128xf32>, vector<2x128xf32> -> vector<2x128xf32>
    %231 = vector.broadcast %5 : vector<1x128xf32> to vector<2x128xf32>
    %232 = arith.addf %231, %230 : vector<2x128xf32>
    %cst_46 = arith.constant dense<0.000000e+00> : vector<2x128xf32>
    %233 = tpu.matmul %210, %3, %cst_46 {dimension_numbers = #tpu.dot_dimension_numbers<[1], [0], [0], [1], [0, 0, 1, 1], [], []>} : vector<2x32xf32>, vector<32x128xf32>, vector<2x128xf32> -> vector<2x128xf32>
    %234 = arith.addf %232, %233 : vector<2x128xf32>
    %235 = arith.negf %234 : vector<2x128xf32>
    %236 = math.exp %235 : vector<2x128xf32>
    %cst_47 = arith.constant 1.000000e+00 : f32
    %237 = vector.broadcast %cst_47 : f32 to vector<2x128xf32>
    %238 = arith.addf %237, %236 : vector<2x128xf32>
    %239 = arith.divf %237, %238 : vector<2x128xf32>
    %240 = math.tanh %234 : vector<2x128xf32>
    %241 = vector.extract_strided_slice %239 {offsets = [0, 0], sizes = [2, 32], strides = [1, 1]} : vector<2x128xf32> to vector<2x32xf32>
    %242 = vector.extract_strided_slice %239 {offsets = [0, 32], sizes = [2, 32], strides = [1, 1]} : vector<2x128xf32> to vector<2x32xf32>
    %243 = vector.extract_strided_slice %239 {offsets = [0, 64], sizes = [2, 32], strides = [1, 1]} : vector<2x128xf32> to vector<2x32xf32>
    %244 = vector.extract_strided_slice %240 {offsets = [0, 96], sizes = [2, 32], strides = [1, 1]} : vector<2x128xf32> to vector<2x32xf32>
    %245 = arith.mulf %242, %208 : vector<2x32xf32>
    %246 = arith.mulf %241, %244 : vector<2x32xf32>
    %247 = arith.addf %245, %246 : vector<2x32xf32>
    %248 = math.tanh %247 : vector<2x32xf32>
    %249 = arith.mulf %243, %248 : vector<2x32xf32>
    %250 = vector.extract_strided_slice %11 {offsets = [0, 6, 0], sizes = [2, 1, 128], strides = [1, 1, 1]} : vector<2x8x128xf32> to vector<2x1x128xf32>
    %251 = vector.shape_cast %250 : vector<2x1x128xf32> to vector<2x128xf32>
    %cst_48 = arith.constant dense<0.000000e+00> : vector<2x128xf32>
    %252 = tpu.matmul %229, %2, %cst_48 {dimension_numbers = #tpu.dot_dimension_numbers<[1], [0], [0], [1], [0, 0, 1, 1], [], []>} : vector<2x32xf32>, vector<32x128xf32>, vector<2x128xf32> -> vector<2x128xf32>
    %253 = arith.addf %251, %252 : vector<2x128xf32>
    %254 = arith.negf %253 : vector<2x128xf32>
    %255 = math.exp %254 : vector<2x128xf32>
    %cst_49 = arith.constant 1.000000e+00 : f32
    %256 = vector.broadcast %cst_49 : f32 to vector<2x128xf32>
    %257 = arith.addf %256, %255 : vector<2x128xf32>
    %258 = arith.divf %256, %257 : vector<2x128xf32>
    %259 = math.tanh %253 : vector<2x128xf32>
    %260 = vector.extract_strided_slice %258 {offsets = [0, 0], sizes = [2, 32], strides = [1, 1]} : vector<2x128xf32> to vector<2x32xf32>
    %261 = vector.extract_strided_slice %258 {offsets = [0, 32], sizes = [2, 32], strides = [1, 1]} : vector<2x128xf32> to vector<2x32xf32>
    %262 = vector.extract_strided_slice %258 {offsets = [0, 64], sizes = [2, 32], strides = [1, 1]} : vector<2x128xf32> to vector<2x32xf32>
    %263 = vector.extract_strided_slice %259 {offsets = [0, 96], sizes = [2, 32], strides = [1, 1]} : vector<2x128xf32> to vector<2x32xf32>
    %264 = arith.mulf %261, %227 : vector<2x32xf32>
    %265 = arith.mulf %260, %263 : vector<2x32xf32>
    %266 = arith.addf %264, %265 : vector<2x32xf32>
    %267 = math.tanh %266 : vector<2x32xf32>
    %268 = arith.mulf %262, %267 : vector<2x32xf32>
    %cst_50 = arith.constant dense<0.000000e+00> : vector<2x128xf32>
    %269 = tpu.matmul %268, %1, %cst_50 {dimension_numbers = #tpu.dot_dimension_numbers<[1], [0], [0], [1], [0, 0, 1, 1], [], []>} : vector<2x32xf32>, vector<32x128xf32>, vector<2x128xf32> -> vector<2x128xf32>
    %270 = vector.broadcast %5 : vector<1x128xf32> to vector<2x128xf32>
    %271 = arith.addf %270, %269 : vector<2x128xf32>
    %cst_51 = arith.constant dense<0.000000e+00> : vector<2x128xf32>
    %272 = tpu.matmul %249, %3, %cst_51 {dimension_numbers = #tpu.dot_dimension_numbers<[1], [0], [0], [1], [0, 0, 1, 1], [], []>} : vector<2x32xf32>, vector<32x128xf32>, vector<2x128xf32> -> vector<2x128xf32>
    %273 = arith.addf %271, %272 : vector<2x128xf32>
    %274 = arith.negf %273 : vector<2x128xf32>
    %275 = math.exp %274 : vector<2x128xf32>
    %cst_52 = arith.constant 1.000000e+00 : f32
    %276 = vector.broadcast %cst_52 : f32 to vector<2x128xf32>
    %277 = arith.addf %276, %275 : vector<2x128xf32>
    %278 = arith.divf %276, %277 : vector<2x128xf32>
    %279 = math.tanh %273 : vector<2x128xf32>
    %280 = vector.extract_strided_slice %278 {offsets = [0, 0], sizes = [2, 32], strides = [1, 1]} : vector<2x128xf32> to vector<2x32xf32>
    %281 = vector.extract_strided_slice %278 {offsets = [0, 32], sizes = [2, 32], strides = [1, 1]} : vector<2x128xf32> to vector<2x32xf32>
    %282 = vector.extract_strided_slice %278 {offsets = [0, 64], sizes = [2, 32], strides = [1, 1]} : vector<2x128xf32> to vector<2x32xf32>
    %283 = vector.extract_strided_slice %279 {offsets = [0, 96], sizes = [2, 32], strides = [1, 1]} : vector<2x128xf32> to vector<2x32xf32>
    %284 = arith.mulf %281, %247 : vector<2x32xf32>
    %285 = arith.mulf %280, %283 : vector<2x32xf32>
    %286 = arith.addf %284, %285 : vector<2x32xf32>
    %287 = math.tanh %286 : vector<2x32xf32>
    %288 = arith.mulf %282, %287 : vector<2x32xf32>
    %289 = vector.extract_strided_slice %11 {offsets = [0, 7, 0], sizes = [2, 1, 128], strides = [1, 1, 1]} : vector<2x8x128xf32> to vector<2x1x128xf32>
    %290 = vector.shape_cast %289 : vector<2x1x128xf32> to vector<2x128xf32>
    %cst_53 = arith.constant dense<0.000000e+00> : vector<2x128xf32>
    %291 = tpu.matmul %268, %2, %cst_53 {dimension_numbers = #tpu.dot_dimension_numbers<[1], [0], [0], [1], [0, 0, 1, 1], [], []>} : vector<2x32xf32>, vector<32x128xf32>, vector<2x128xf32> -> vector<2x128xf32>
    %292 = arith.addf %290, %291 : vector<2x128xf32>
    %293 = arith.negf %292 : vector<2x128xf32>
    %294 = math.exp %293 : vector<2x128xf32>
    %cst_54 = arith.constant 1.000000e+00 : f32
    %295 = vector.broadcast %cst_54 : f32 to vector<2x128xf32>
    %296 = arith.addf %295, %294 : vector<2x128xf32>
    %297 = arith.divf %295, %296 : vector<2x128xf32>
    %298 = math.tanh %292 : vector<2x128xf32>
    %299 = vector.extract_strided_slice %297 {offsets = [0, 0], sizes = [2, 32], strides = [1, 1]} : vector<2x128xf32> to vector<2x32xf32>
    %300 = vector.extract_strided_slice %297 {offsets = [0, 32], sizes = [2, 32], strides = [1, 1]} : vector<2x128xf32> to vector<2x32xf32>
    %301 = vector.extract_strided_slice %297 {offsets = [0, 64], sizes = [2, 32], strides = [1, 1]} : vector<2x128xf32> to vector<2x32xf32>
    %302 = vector.extract_strided_slice %298 {offsets = [0, 96], sizes = [2, 32], strides = [1, 1]} : vector<2x128xf32> to vector<2x32xf32>
    %303 = arith.mulf %300, %266 : vector<2x32xf32>
    %304 = arith.mulf %299, %302 : vector<2x32xf32>
    %305 = arith.addf %303, %304 : vector<2x32xf32>
    %306 = math.tanh %305 : vector<2x32xf32>
    %307 = arith.mulf %301, %306 : vector<2x32xf32>
    %cst_55 = arith.constant dense<0.000000e+00> : vector<2x128xf32>
    %308 = tpu.matmul %307, %1, %cst_55 {dimension_numbers = #tpu.dot_dimension_numbers<[1], [0], [0], [1], [0, 0, 1, 1], [], []>} : vector<2x32xf32>, vector<32x128xf32>, vector<2x128xf32> -> vector<2x128xf32>
    %309 = vector.broadcast %5 : vector<1x128xf32> to vector<2x128xf32>
    %310 = arith.addf %309, %308 : vector<2x128xf32>
    %cst_56 = arith.constant dense<0.000000e+00> : vector<2x128xf32>
    %311 = tpu.matmul %288, %3, %cst_56 {dimension_numbers = #tpu.dot_dimension_numbers<[1], [0], [0], [1], [0, 0, 1, 1], [], []>} : vector<2x32xf32>, vector<32x128xf32>, vector<2x128xf32> -> vector<2x128xf32>
    %312 = arith.addf %310, %311 : vector<2x128xf32>
    %313 = arith.negf %312 : vector<2x128xf32>
    %314 = math.exp %313 : vector<2x128xf32>
    %cst_57 = arith.constant 1.000000e+00 : f32
    %315 = vector.broadcast %cst_57 : f32 to vector<2x128xf32>
    %316 = arith.addf %315, %314 : vector<2x128xf32>
    %317 = arith.divf %315, %316 : vector<2x128xf32>
    %318 = math.tanh %312 : vector<2x128xf32>
    %319 = vector.extract_strided_slice %317 {offsets = [0, 0], sizes = [2, 32], strides = [1, 1]} : vector<2x128xf32> to vector<2x32xf32>
    %320 = vector.extract_strided_slice %317 {offsets = [0, 32], sizes = [2, 32], strides = [1, 1]} : vector<2x128xf32> to vector<2x32xf32>
    %321 = vector.extract_strided_slice %317 {offsets = [0, 64], sizes = [2, 32], strides = [1, 1]} : vector<2x128xf32> to vector<2x32xf32>
    %322 = vector.extract_strided_slice %318 {offsets = [0, 96], sizes = [2, 32], strides = [1, 1]} : vector<2x128xf32> to vector<2x32xf32>
    %323 = arith.mulf %320, %286 : vector<2x32xf32>
    %324 = arith.mulf %319, %322 : vector<2x32xf32>
    %325 = arith.addf %323, %324 : vector<2x32xf32>
    %326 = math.tanh %325 : vector<2x32xf32>
    %327 = arith.mulf %321, %326 : vector<2x32xf32>
    %cst_58 = arith.constant 0.000000e+00 : f32
    %328 = vector.broadcast %cst_58 : f32 to vector<2x32xf32>
    %329 = arith.maximumf %327, %328 : vector<2x32xf32>
    %c0_59 = arith.constant 0 : index
    %c0_60 = arith.constant 0 : index
    %330 = vector.load %arg7[%c0_59, %c0_60] : memref<32x32xf32, #tpu.memory_space<vmem>>, vector<32x32xf32>
    %cst_61 = arith.constant dense<0.000000e+00> : vector<2x32xf32>
    %331 = tpu.matmul %329, %330, %cst_61 {dimension_numbers = #tpu.dot_dimension_numbers<[1], [0], [0], [1], [0, 0, 1, 1], [], []>} : vector<2x32xf32>, vector<32x32xf32>, vector<2x32xf32> -> vector<2x32xf32>
    %c0_62 = arith.constant 0 : index
    %c0_63 = arith.constant 0 : index
    %332 = vector.load %arg8[%c0_62, %c0_63] : memref<1x32xf32, #tpu.memory_space<vmem>>, vector<1x32xf32>
    %333 = vector.broadcast %332 : vector<1x32xf32> to vector<2x32xf32>
    %334 = arith.addf %331, %333 : vector<2x32xf32>
    %cst_64 = arith.constant 0.000000e+00 : f32
    %335 = vector.broadcast %cst_64 : f32 to vector<2x32xf32>
    %336 = arith.maximumf %334, %335 : vector<2x32xf32>
    %c0_65 = arith.constant 0 : index
    %c0_66 = arith.constant 0 : index
    %337 = vector.load %arg9[%c0_65, %c0_66] : memref<32x1xf32, #tpu.memory_space<vmem>>, vector<32x1xf32>
    %cst_67 = arith.constant dense<0.000000e+00> : vector<2x1xf32>
    %338 = tpu.matmul %336, %337, %cst_67 {dimension_numbers = #tpu.dot_dimension_numbers<[1], [0], [0], [1], [0, 0, 1, 1], [], []>} : vector<2x32xf32>, vector<32x1xf32>, vector<2x1xf32> -> vector<2x1xf32>
    %c0_68 = arith.constant 0 : index
    %c0_69 = arith.constant 0 : index
    %339 = vector.load %arg10[%c0_68, %c0_69] : memref<1x1xf32, #tpu.memory_space<vmem>>, vector<1x1xf32>
    %340 = vector.broadcast %339 : vector<1x1xf32> to vector<2x1xf32>
    %341 = arith.addf %338, %340 : vector<2x1xf32>
    %c0_70 = arith.constant 0 : index
    %c0_71 = arith.constant 0 : index
    %342 = vector.load %arg11[%c0_70, %c0_71] : memref<2x1xf32, #tpu.memory_space<vmem>>, vector<2x1xf32>
    tpu.vector_store %arg11[%c0_70, %c0_71], %341 {strides = array<i32>} : memref<2x1xf32, #tpu.memory_space<vmem>>, vector<2x1xf32>,
    return
  }
}

</mosaic_0001>

<llo_original>
// kernel: enhanced_lstm_forward.1
$region0: #{enhanced_lstm_forward.1}
  #allocation0 [shape = 'u32[]', space=smem, size = 0x4, offset = 0x4, fixed_abs, tag = 'smem constant byte address 0x4 - core index']
  #allocation1 [shape = 'u32[144,128]{1,0:T(1,128)}', space=vmem, size = 0x12000, scoped, tag = 'internal scratch']
  #allocation2 [shape = 'f32[1,1]{1,0:T(1,128)S(1)}', space=vmem, size = 0x200, scoped, tag = 'scoped memory for enhanced_lstm_forward.1']
  %s0 = inlined_call_operand.hbm [shape: f32[2,8,16], index: 0, kind: input, shape index: {}]
  %s1 = inlined_call_operand.hbm [shape: f32[16,128], index: 1, kind: input, shape index: {}]
  %s2 = inlined_call_operand.vmem [shape: f32[32,128], index: 2, kind: input, shape index: {}]
  %s3 = inlined_call_operand.vmem [shape: f32[1,128], index: 3, kind: input, shape index: {}]
  %s4 = inlined_call_operand.hbm [shape: f32[32,128], index: 4, kind: input, shape index: {}]
  %s5 = inlined_call_operand.vmem [shape: f32[32,128], index: 5, kind: input, shape index: {}]
  %s6 = inlined_call_operand.vmem [shape: f32[1,128], index: 6, kind: input, shape index: {}]
  %s7 = inlined_call_operand.hbm [shape: f32[32,32], index: 7, kind: input, shape index: {}]
  %s8 = inlined_call_operand.vmem [shape: f32[1,32], index: 8, kind: input, shape index: {}]
  %s9 = inlined_call_operand.vmem [shape: f32[32,1], index: 9, kind: input, shape index: {}]
  %s10 = inlined_call_operand.<no memory space> [shape: f32[1,1], index: 10, kind: input, shape index: {}]
  %s11 = inlined_call_operand.vmem [shape: f32[2,1], index: 11, kind: output, shape index: {}]
  %s12 = sld [smem:[#allocation0]]
  $region70: #{enhanced_lstm_forward.1} parent=0
    _
  %s14 = ssub.s32 1, %s12
  %s15 = scalar_select 0, %s14, %s12
  %v16 = vstv %s10
  %17 = vst [vmem:[#allocation2] sm:$0x1] %v16
  $region1: #{enhanced_lstm_forward.1} parent=0
    #allocation3 [shape = 'u8[8192]{0}', space=vmem, size = 0x2000, scoped, tag = 'input window, operand 0, single buffered']
    #allocation4 [shape = 's32[1]{0}', space=sflag, size = 0x4, scoped, tag = 'scoped memory for enhanced_lstm_forward.1']
    #allocation5 [shape = 'u8[8192]{0}', space=vmem, size = 0x2000, scoped, tag = 'input window, operand 1, single buffered']
    #allocation6 [shape = 's32[1]{0}', space=sflag, size = 0x4, scoped, tag = 'scoped memory for enhanced_lstm_forward.1']
    #allocation7 [shape = 'u8[16384]{0}', space=vmem, size = 0x4000, scoped, tag = 'input window, operand 4, single buffered']
    #allocation8 [shape = 'u8[16384]{0}', space=vmem, size = 0x4000, scoped, tag = 'input window, operand 7, single buffered']
    #allocation9 [shape = 's32[1]{0}', space=sflag, size = 0x4, scoped, tag = 'scoped memory for enhanced_lstm_forward.1']
    %18 = vsyncpa [#allocation4], 0
    %19 = vsyncpa [#allocation6], 0
    %20 = vsyncpa [#allocation9], 0
    // Predicated region
    $region2: #{enhanced_lstm_forward.1} parent=1 // pred_check
      _
    $region3: #{enhanced_lstm_forward.1} parent=1 // pred_check_branch
      %22 = sbr.rel (0) target = $region5
    $region4: #{enhanced_lstm_forward.1} parent=1 // pred_region
      %s24 = ssub.s32 256, 256
      %25 = vsyncadd [#allocation4], %s24
      %s26 = sshll.u32 [#allocation3], 4
      %s27 = int_to_ptr.vmem [resolvable:$true] %s26
      %32 = dma.hbm_to_vmem [thread:$0]  %s0, 256, %s27, [#allocation4], 128, 128, 8
    $region5: #{enhanced_lstm_forward.1} parent=1 // pred_fallthru
      _
    // Predicated region
    $region6: #{enhanced_lstm_forward.1} parent=1 // pred_check
      _
    $region7: #{enhanced_lstm_forward.1} parent=1 // pred_check_branch
      %34 = sbr.rel (0) target = $region9
    $region8: #{enhanced_lstm_forward.1} parent=1 // pred_region
      %s36 = ssub.s32 256, 256
      %37 = vsyncadd [#allocation6], %s36
      %s38 = sshll.u32 [#allocation5], 4
      %s39 = int_to_ptr.vmem [resolvable:$true] %s38
      %44 = dma.hbm_to_vmem [thread:$0]  %s1, 256, %s39, [#allocation6], 128, 128, 8
    $region9: #{enhanced_lstm_forward.1} parent=1 // pred_fallthru
      _
    // Predicated region
    $region10: #{enhanced_lstm_forward.1} parent=1 // pred_check
      _
    $region11: #{enhanced_lstm_forward.1} parent=1 // pred_check_branch
      %46 = sbr.rel (0) target = $region13
    $region12: #{enhanced_lstm_forward.1} parent=1 // pred_region
      _
    $region13: #{enhanced_lstm_forward.1} parent=1 // pred_fallthru
      _
    // Predicated region
    $region14: #{enhanced_lstm_forward.1} parent=1 // pred_check
      _
    $region15: #{enhanced_lstm_forward.1} parent=1 // pred_check_branch
      %48 = sbr.rel (0) target = $region17
    $region16: #{enhanced_lstm_forward.1} parent=1 // pred_region
      _
    $region17: #{enhanced_lstm_forward.1} parent=1 // pred_fallthru
      _
    // Predicated region
    $region18: #{enhanced_lstm_forward.1} parent=1 // pred_check
      _
    $region19: #{enhanced_lstm_forward.1} parent=1 // pred_check_branch
      %50 = sbr.rel (0) target = $region21
    $region20: #{enhanced_lstm_forward.1} parent=1 // pred_region
      %s52 = ssub.s32 512, 512
      %53 = vsyncadd [#allocation6], %s52
      %s54 = sshll.u32 [#allocation7], 4
      %s55 = int_to_ptr.vmem [resolvable:$true] %s54
      %60 = dma.hbm_to_vmem [thread:$0]  %s4, 512, %s55, [#allocation6], 128, 128, 8
    $region21: #{enhanced_lstm_forward.1} parent=1 // pred_fallthru
      _
    // Predicated region
    $region22: #{enhanced_lstm_forward.1} parent=1 // pred_check
      _
    $region23: #{enhanced_lstm_forward.1} parent=1 // pred_check_branch
      %62 = sbr.rel (0) target = $region25
    $region24: #{enhanced_lstm_forward.1} parent=1 // pred_region
      _
    $region25: #{enhanced_lstm_forward.1} parent=1 // pred_fallthru
      _
    // Predicated region
    $region26: #{enhanced_lstm_forward.1} parent=1 // pred_check
      _
    $region27: #{enhanced_lstm_forward.1} parent=1 // pred_check_branch
      %64 = sbr.rel (0) target = $region29
    $region28: #{enhanced_lstm_forward.1} parent=1 // pred_region
      _
    $region29: #{enhanced_lstm_forward.1} parent=1 // pred_fallthru
      _
    // Predicated region
    $region30: #{enhanced_lstm_forward.1} parent=1 // pred_check
      _
    $region31: #{enhanced_lstm_forward.1} parent=1 // pred_check_branch
      %66 = sbr.rel (0) target = $region33
    $region32: #{enhanced_lstm_forward.1} parent=1 // pred_region
      %s68 = ssub.s32 512, 512
      %69 = vsyncadd [#allocation9], %s68
      %s70 = sshll.u32 [#allocation8], 4
      %s71 = int_to_ptr.vmem [resolvable:$true] %s70
      %76 = dma.hbm_to_vmem [thread:$0]  %s7, 512, %s71, [#allocation9], 128, 128, 8
    $region33: #{enhanced_lstm_forward.1} parent=1 // pred_fallthru
      _
    // Predicated region
    $region34: #{enhanced_lstm_forward.1} parent=1 // pred_check
      _
    $region35: #{enhanced_lstm_forward.1} parent=1 // pred_check_branch
      %78 = sbr.rel (0) target = $region37
    $region36: #{enhanced_lstm_forward.1} parent=1 // pred_region
      _
    $region37: #{enhanced_lstm_forward.1} parent=1 // pred_fallthru
      _
    // Predicated region
    $region38: #{enhanced_lstm_forward.1} parent=1 // pred_check
      _
    $region39: #{enhanced_lstm_forward.1} parent=1 // pred_check_branch
      %80 = sbr.rel (0) target = $region41
    $region40: #{enhanced_lstm_forward.1} parent=1 // pred_region
      _
    $region41: #{enhanced_lstm_forward.1} parent=1 // pred_fallthru
      _
    // Predicated region
    $region42: #{enhanced_lstm_forward.1} parent=1 // pred_check
      _
    $region43: #{enhanced_lstm_forward.1} parent=1 // pred_check_branch
      %82 = sbr.rel (0) target = $region45
    $region44: #{enhanced_lstm_forward.1} parent=1 // pred_region
      _
    $region45: #{enhanced_lstm_forward.1} parent=1 // pred_fallthru
      _
    // Predicated region
    $region46: #{enhanced_lstm_forward.1} parent=1 // pred_check
      _
    $region47: #{enhanced_lstm_forward.1} parent=1 // pred_check_branch
      %84 = sbr.rel (0) target = $region49
    $region48: #{enhanced_lstm_forward.1} parent=1 // pred_region
      %85 = dma.done [#allocation4], 256
    $region49: #{enhanced_lstm_forward.1} parent=1 // pred_fallthru
      _
    // Predicated region
    $region50: #{enhanced_lstm_forward.1} parent=1 // pred_check
      _
    $region51: #{enhanced_lstm_forward.1} parent=1 // pred_check_branch
      %87 = sbr.rel (0) target = $region53
    $region52: #{enhanced_lstm_forward.1} parent=1 // pred_region
      %88 = dma.done [#allocation6], 256
    $region53: #{enhanced_lstm_forward.1} parent=1 // pred_fallthru
      _
    // Predicated region
    $region54: #{enhanced_lstm_forward.1} parent=1 // pred_check
      _
    $region55: #{enhanced_lstm_forward.1} parent=1 // pred_check_branch
      %90 = sbr.rel (0) target = $region57
    $region56: #{enhanced_lstm_forward.1} parent=1 // pred_region
      %91 = dma.done [#allocation6], 512
    $region57: #{enhanced_lstm_forward.1} parent=1 // pred_fallthru
      _
    // Predicated region
    $region58: #{enhanced_lstm_forward.1} parent=1 // pred_check
      _
    $region59: #{enhanced_lstm_forward.1} parent=1 // pred_check_branch
      %93 = sbr.rel (0) target = $region61
    $region60: #{enhanced_lstm_forward.1} parent=1 // pred_region
      %94 = dma.done [#allocation9], 512
    $region61: #{enhanced_lstm_forward.1} parent=1 // pred_fallthru
      _
    %v95 = vld [vmem:[#allocation5] sm:$0xff]
    %v96 = vld [vmem:[#allocation5 + $0x8] sm:$0xff]
    %v97 = vld [vmem:[#allocation7] sm:$0xff]
    %v98 = vld [vmem:[#allocation7 + $0x8] sm:$0xff]
    %v99 = vld [vmem:[#allocation7 + $0x10] sm:$0xff]
    %v100 = vld [vmem:[#allocation7 + $0x18] sm:$0xff]
    %v101 = vld [vmem:[%s2] sm:$0xff]
    %v102 = vld [vmem:[%s2 + $0x8] sm:$0xff]
    %v103 = vld [vmem:[%s2 + $0x10] sm:$0xff]
    %v104 = vld [vmem:[%s2 + $0x18] sm:$0xff]
    %v105 = vld [vmem:[%s5] sm:$0xff]
    %v106 = vld [vmem:[%s5 + $0x8] sm:$0xff]
    %v107 = vld [vmem:[%s5 + $0x10] sm:$0xff]
    %v108 = vld [vmem:[%s5 + $0x18] sm:$0xff]
    %v109 = vld [vmem:[%s3] sm:$0x1]
    %v110 = vld [vmem:[%s6] sm:$0x1]
    %v111 = vld [vmem:[#allocation3] sm:$0xff]
    %v112 = vld [vmem:[#allocation3 + $0x8] sm:$0xff]
    %v114 = vlaneseq
    %v115 = vshrl.u32 %v114, 7
    %v116 = vsub.s32 0, %v115
    %v117 = vrot.slane %v109, %v116
    %vm119 = vcmask 130048
    %v121 = vsel %vm119, %v111, 0
    %v124 = vsel %vm119, %v112, 0
    %126 = vmatprep.subr.mxu0 0.0
    %127 = vmatpush1.msra.mxu0 %v95
    %128 = vmatprep.subr.mxu0 0.0
    %129 = vmatpush1.msra.mxu0 %v96
    %130 = vmatprep.subr.mxu0 0.0
    %131 = vmatpush1.msra.mxu0 0.0
    %132 = vmatprep.subr.mxu0 0.0
    %133 = vmatpush1.msra.mxu0 0.0
    %134 = vmatprep.subr.mxu0 0.0
    %135 = vmatpush1.msra.mxu0 0.0
    %136 = vmatprep.subr.mxu0 0.0
    %137 = vmatpush1.msra.mxu0 0.0
    %138 = vmatprep.subr.mxu0 0.0
    %139 = vmatpush1.msra.mxu0 0.0
    %140 = vmatprep.subr.mxu0 0.0
    %141 = vmatpush1.msra.mxu0 0.0
    %142 = vmatprep.subr.mxu0 0.0
    %143 = vmatpush1.msra.mxu0 0.0
    %144 = vmatprep.subr.mxu0 0.0
    %145 = vmatpush1.msra.mxu0 0.0
    %146 = vmatprep.subr.mxu0 0.0
    %147 = vmatpush1.msra.mxu0 0.0
    %148 = vmatprep.subr.mxu0 0.0
    %149 = vmatpush1.msra.mxu0 0.0
    %150 = vmatprep.subr.mxu0 0.0
    %151 = vmatpush1.msra.mxu0 0.0
    %152 = vmatprep.subr.mxu0 0.0
    %153 = vmatpush1.msra.mxu0 0.0
    %154 = vmatprep.subr.mxu0 0.0
    %155 = vmatpush1.msra.mxu0 0.0
    %156 = vmatprep.subr.mxu0 0.0
    %157 = vmatpush1.msra.mxu0 0.0
    %158 = vmatprep.subr.mxu0 0.0
    %159 = vmatpush1.msra.mxu0 0.0
    %160 = vmatprep.subr.mxu0 0.0
    %161 = vmatpush1.msra.mxu0 0.0
    %162 = vmatprep.subr.mxu0 0.0
    %163 = vmatpush1.msra.mxu0 0.0
    %164 = vmatprep.subr.mxu0 0.0
    %165 = vmatpush1.msra.mxu0 0.0
    %166 = vmatprep.subr.mxu0 0.0
    %167 = vmatpush1.msra.mxu0 0.0
    %168 = vmatprep.subr.mxu0 0.0
    %169 = vmatpush1.msra.mxu0 0.0
    %170 = vmatprep.subr.mxu0 0.0
    %171 = vmatpush1.msra.mxu0 0.0
    %172 = vmatprep.subr.mxu0 0.0
    %173 = vmatpush1.msra.mxu0 0.0
    %174 = vmatprep.subr.mxu0 0.0
    %175 = vmatpush1.msra.mxu0 0.0
    %176 = vmatprep.subr.mxu0 0.0
    %177 = vmatpush1.msra.mxu0 0.0
    %178 = vmatprep.subr.mxu0 0.0
    %179 = vmatpush1.msra.mxu0 0.0
    %180 = vmatprep.subr.mxu0 0.0
    %181 = vmatpush1.msra.mxu0 0.0
    %182 = vmatprep.subr.mxu0 0.0
    %183 = vmatpush1.msra.mxu0 0.0
    %184 = vmatprep.subr.mxu0 0.0
    %185 = vmatpush1.msra.mxu0 0.0
    %186 = vmatprep.subr.mxu0 0.0
    %187 = vmatpush1.msra.mxu0 0.0
    %188 = vmatprep.subr.mxu0 0.0
    %189 = vmatpush1.msra.mxu0 0.0
    %190 = vmatprep.mubr.f32.mxu0 0.0
    %191 = vmatmul.mubr.f32.gmra.mrb[0].mxu0 %v121
    %v192 = vpop.f32.mrb[0].mxu0
    %v193 = vadd.f32 %v117, %v192
    %v194 = vpop.f32.mrb[0].mxu0
    %195 = vmatprep.mubr.f32.mxu0 0.0
    %196 = vmatmul.mubr.f32.gmra.mrb[0].mxu0 %v124
    %v197 = vpop.f32.mrb[0].mxu0
    %v198 = vadd.f32 %v117, %v197
    %v199 = vpop.f32.mrb[0].mxu0
    %200 = vdwg.mxu0
    %vm201 = vcmask 261120
    %v203 = vsel %vm201, 0.0, 0
    %205 = vmatprep.subr.mxu0 0.0
    %206 = vmatpush1.msra.mxu0 %v101
    %207 = vmatprep.subr.mxu0 0.0
    %208 = vmatpush1.msra.mxu0 %v102
    %209 = vmatprep.subr.mxu0 0.0
    %210 = vmatpush1.msra.mxu0 %v103
    %211 = vmatprep.subr.mxu0 0.0
    %212 = vmatpush1.msra.mxu0 %v104
    %213 = vmatprep.subr.mxu0 0.0
    %214 = vmatpush1.msra.mxu0 0.0
    %215 = vmatprep.subr.mxu0 0.0
    %216 = vmatpush1.msra.mxu0 0.0
    %217 = vmatprep.subr.mxu0 0.0
    %218 = vmatpush1.msra.mxu0 0.0
    %219 = vmatprep.subr.mxu0 0.0
    %220 = vmatpush1.msra.mxu0 0.0
    %221 = vmatprep.subr.mxu0 0.0
    %222 = vmatpush1.msra.mxu0 0.0
    %223 = vmatprep.subr.mxu0 0.0
    %224 = vmatpush1.msra.mxu0 0.0
    %225 = vmatprep.subr.mxu0 0.0
    %226 = vmatpush1.msra.mxu0 0.0
    %227 = vmatprep.subr.mxu0 0.0
    %228 = vmatpush1.msra.mxu0 0.0
    %229 = vmatprep.subr.mxu0 0.0
    %230 = vmatpush1.msra.mxu0 0.0
    %231 = vmatprep.subr.mxu0 0.0
    %232 = vmatpush1.msra.mxu0 0.0
    %233 = vmatprep.subr.mxu0 0.0
    %234 = vmatpush1.msra.mxu0 0.0
    %235 = vmatprep.subr.mxu0 0.0
    %236 = vmatpush1.msra.mxu0 0.0
    %237 = vmatprep.subr.mxu0 0.0
    %238 = vmatpush1.msra.mxu0 0.0
    %239 = vmatprep.subr.mxu0 0.0
    %240 = vmatpush1.msra.mxu0 0.0
    %241 = vmatprep.subr.mxu0 0.0
    %242 = vmatpush1.msra.mxu0 0.0
    %243 = vmatprep.subr.mxu0 0.0
    %244 = vmatpush1.msra.mxu0 0.0
    %245 = vmatprep.subr.mxu0 0.0
    %246 = vmatpush1.msra.mxu0 0.0
    %247 = vmatprep.subr.mxu0 0.0
    %248 = vmatpush1.msra.mxu0 0.0
    %249 = vmatprep.subr.mxu0 0.0
    %250 = vmatpush1.msra.mxu0 0.0
    %251 = vmatprep.subr.mxu0 0.0
    %252 = vmatpush1.msra.mxu0 0.0
    %253 = vmatprep.subr.mxu0 0.0
    %254 = vmatpush1.msra.mxu0 0.0
    %255 = vmatprep.subr.mxu0 0.0
    %256 = vmatpush1.msra.mxu0 0.0
    %257 = vmatprep.subr.mxu0 0.0
    %258 = vmatpush1.msra.mxu0 0.0
    %259 = vmatprep.subr.mxu0 0.0
    %260 = vmatpush1.msra.mxu0 0.0
    %261 = vmatprep.subr.mxu0 0.0
    %262 = vmatpush1.msra.mxu0 0.0
    %263 = vmatprep.subr.mxu0 0.0
    %264 = vmatpush1.msra.mxu0 0.0
    %265 = vmatprep.subr.mxu0 0.0
    %266 = vmatpush1.msra.mxu0 0.0
    %267 = vmatprep.subr.mxu0 0.0
    %268 = vmatpush1.msra.mxu0 0.0
    %269 = vmatprep.mubr.f32.mxu0 0.0
    %270 = vmatmul.mubr.f32.gmra.mrb[0].mxu0 %v203
    %v271 = vpop.f32.mrb[0].mxu0
    %v272 = vadd.f32 0.0, %v271
    %v273 = vpop.f32.mrb[0].mxu0
    %274 = vdwg.mxu0
    %v276 = vrot.slane %v272, 1
    %v279 = vadd.f32 %v193, %v272
    %v280 = vadd.f32 %v198, %v276
    %v281 = vxor.u32 %v279, 2147483648
    %v282 = vxor.u32 %v280, 2147483648
    %v283 = vmul.f32 %v281, 1.442695
    %v284 = vpow.pop %v283
    %v285 = vmul.f32 %v282, 1.442695
    %v286 = vpow.pop %v285
    %v287 = vadd.f32 %v284, 1.0
    %v288 = vadd.f32 %v286, 1.0
    %v289 = vrcp.pop %v287
    %v290 = vmul.f32 1.0, %v289
    %v291 = vrcp.pop %v288
    %v292 = vmul.f32 1.0, %v291
    %v293 = vtanh.pop %v279
    %v294 = vtanh.pop %v280
    %v295 = vmul.f32 %v290, 0.0
    %v296 = vmul.f32 %v292, 0.0
    %299 = vrot.lane.b32.xlu0 %v293, 32
    %v300 = vpop.permute.xlu0 %299
    %301 = vrot.lane.b32.xlu0 %v294, 32
    %v302 = vpop.permute.xlu0 %301
    %v305 = vmul.f32 %v290, %v300
    %v306 = vmul.f32 %v292, %v302
    %309 = vrot.lane.b32.xlu0 %v305, 32
    %v310 = vpop.permute.xlu0 %309
    %311 = vrot.lane.b32.xlu0 %v306, 32
    %v312 = vpop.permute.xlu0 %311
    %v315 = vadd.f32 %v295, %v310
    %v316 = vadd.f32 %v296, %v312
    %v317 = vtanh.pop %v315
    %v318 = vtanh.pop %v316
    %321 = vrot.lane.b32.xlu0 %v317, 32
    %v322 = vpop.permute.xlu0 %321
    %323 = vrot.lane.b32.xlu0 %v318, 32
    %v324 = vpop.permute.xlu0 %323
    %v327 = vmul.f32 %v290, %v322
    %v328 = vmul.f32 %v292, %v324
    %v331 = vrot.slane %v328, 7
    %vm332 = vcmask 1041409
    %v333 = vsel %vm332, %v331, %v327
    %334 = vrot.lane.b32.xlu0 %v333, 64
    %v335 = vpop.permute.xlu0 %334
    %v336 = vsel %vm201, %v335, 0
    %338 = vmatprep.subr.mxu0 0.0
    %339 = vmatpush1.msra.mxu0 %v97
    %340 = vmatprep.subr.mxu0 0.0
    %341 = vmatpush1.msra.mxu0 %v98
    %342 = vmatprep.subr.mxu0 0.0
    %343 = vmatpush1.msra.mxu0 %v99
    %344 = vmatprep.subr.mxu0 0.0
    %345 = vmatpush1.msra.mxu0 %v100
    %346 = vmatprep.subr.mxu0 0.0
    %347 = vmatpush1.msra.mxu0 0.0
    %348 = vmatprep.subr.mxu0 0.0
    %349 = vmatpush1.msra.mxu0 0.0
    %350 = vmatprep.subr.mxu0 0.0
    %351 = vmatpush1.msra.mxu0 0.0
    %352 = vmatprep.subr.mxu0 0.0
    %353 = vmatpush1.msra.mxu0 0.0
    %354 = vmatprep.subr.mxu0 0.0
    %355 = vmatpush1.msra.mxu0 0.0
    %356 = vmatprep.subr.mxu0 0.0
    %357 = vmatpush1.msra.mxu0 0.0
    %358 = vmatprep.subr.mxu0 0.0
    %359 = vmatpush1.msra.mxu0 0.0
    %360 = vmatprep.subr.mxu0 0.0
    %361 = vmatpush1.msra.mxu0 0.0
    %362 = vmatprep.subr.mxu0 0.0
    %363 = vmatpush1.msra.mxu0 0.0
    %364 = vmatprep.subr.mxu0 0.0
    %365 = vmatpush1.msra.mxu0 0.0
    %366 = vmatprep.subr.mxu0 0.0
    %367 = vmatpush1.msra.mxu0 0.0
    %368 = vmatprep.subr.mxu0 0.0
    %369 = vmatpush1.msra.mxu0 0.0
    %370 = vmatprep.subr.mxu0 0.0
    %371 = vmatpush1.msra.mxu0 0.0
    %372 = vmatprep.subr.mxu0 0.0
    %373 = vmatpush1.msra.mxu0 0.0
    %374 = vmatprep.subr.mxu0 0.0
    %375 = vmatpush1.msra.mxu0 0.0
    %376 = vmatprep.subr.mxu0 0.0
    %377 = vmatpush1.msra.mxu0 0.0
    %378 = vmatprep.subr.mxu0 0.0
    %379 = vmatpush1.msra.mxu0 0.0
    %380 = vmatprep.subr.mxu0 0.0
    %381 = vmatpush1.msra.mxu0 0.0
    %382 = vmatprep.subr.mxu0 0.0
    %383 = vmatpush1.msra.mxu0 0.0
    %384 = vmatprep.subr.mxu0 0.0
    %385 = vmatpush1.msra.mxu0 0.0
    %386 = vmatprep.subr.mxu0 0.0
    %387 = vmatpush1.msra.mxu0 0.0
    %388 = vmatprep.subr.mxu0 0.0
    %389 = vmatpush1.msra.mxu0 0.0
    %390 = vmatprep.subr.mxu0 0.0
    %391 = vmatpush1.msra.mxu0 0.0
    %392 = vmatprep.subr.mxu0 0.0
    %393 = vmatpush1.msra.mxu0 0.0
    %394 = vmatprep.subr.mxu0 0.0
    %395 = vmatpush1.msra.mxu0 0.0
    %396 = vmatprep.subr.mxu0 0.0
    %397 = vmatpush1.msra.mxu0 0.0
    %398 = vmatprep.subr.mxu0 0.0
    %399 = vmatpush1.msra.mxu0 0.0
    %400 = vmatprep.subr.mxu0 0.0
    %401 = vmatpush1.msra.mxu0 0.0
    %402 = vmatprep.mubr.f32.mxu0 0.0
    %403 = vmatmul.mubr.f32.gmra.mrb[0].mxu0 %v336
    %v404 = vpop.f32.mrb[0].mxu0
    %v405 = vadd.f32 0.0, %v404
    %v406 = vpop.f32.mrb[0].mxu0
    %407 = vdwg.mxu0
    %v409 = vlaneseq
    %v410 = vshrl.u32 %v409, 7
    %v411 = vsub.s32 0, %v410
    %v412 = vrot.slane %v110, %v411
    %v414 = vadd.f32 %v412, %v405
    %415 = vmatprep.subr.mxu0 0.0
    %416 = vmatpush1.msra.mxu0 %v105
    %417 = vmatprep.subr.mxu0 0.0
    %418 = vmatpush1.msra.mxu0 %v106
    %419 = vmatprep.subr.mxu0 0.0
    %420 = vmatpush1.msra.mxu0 %v107
    %421 = vmatprep.subr.mxu0 0.0
    %422 = vmatpush1.msra.mxu0 %v108
    %423 = vmatprep.subr.mxu0 0.0
    %424 = vmatpush1.msra.mxu0 0.0
    %425 = vmatprep.subr.mxu0 0.0
    %426 = vmatpush1.msra.mxu0 0.0
    %427 = vmatprep.subr.mxu0 0.0
    %428 = vmatpush1.msra.mxu0 0.0
    %429 = vmatprep.subr.mxu0 0.0
    %430 = vmatpush1.msra.mxu0 0.0
    %431 = vmatprep.subr.mxu0 0.0
    %432 = vmatpush1.msra.mxu0 0.0
    %433 = vmatprep.subr.mxu0 0.0
    %434 = vmatpush1.msra.mxu0 0.0
    %435 = vmatprep.subr.mxu0 0.0
    %436 = vmatpush1.msra.mxu0 0.0
    %437 = vmatprep.subr.mxu0 0.0
    %438 = vmatpush1.msra.mxu0 0.0
    %439 = vmatprep.subr.mxu0 0.0
    %440 = vmatpush1.msra.mxu0 0.0
    %441 = vmatprep.subr.mxu0 0.0
    %442 = vmatpush1.msra.mxu0 0.0
    %443 = vmatprep.subr.mxu0 0.0
    %444 = vmatpush1.msra.mxu0 0.0
    %445 = vmatprep.subr.mxu0 0.0
    %446 = vmatpush1.msra.mxu0 0.0
    %447 = vmatprep.subr.mxu0 0.0
    %448 = vmatpush1.msra.mxu0 0.0
    %449 = vmatprep.subr.mxu0 0.0
    %450 = vmatpush1.msra.mxu0 0.0
    %451 = vmatprep.subr.mxu0 0.0
    %452 = vmatpush1.msra.mxu0 0.0
    %453 = vmatprep.subr.mxu0 0.0
    %454 = vmatpush1.msra.mxu0 0.0
    %455 = vmatprep.subr.mxu0 0.0
    %456 = vmatpush1.msra.mxu0 0.0
    %457 = vmatprep.subr.mxu0 0.0
    %458 = vmatpush1.msra.mxu0 0.0
    %459 = vmatprep.subr.mxu0 0.0
    %460 = vmatpush1.msra.mxu0 0.0
    %461 = vmatprep.subr.mxu0 0.0
    %462 = vmatpush1.msra.mxu0 0.0
    %463 = vmatprep.subr.mxu0 0.0
    %464 = vmatpush1.msra.mxu0 0.0
    %465 = vmatprep.subr.mxu0 0.0
    %466 = vmatpush1.msra.mxu0 0.0
    %467 = vmatprep.subr.mxu0 0.0
    %468 = vmatpush1.msra.mxu0 0.0
    %469 = vmatprep.subr.mxu0 0.0
    %470 = vmatpush1.msra.mxu0 0.0
    %471 = vmatprep.subr.mxu0 0.0
    %472 = vmatpush1.msra.mxu0 0.0
    %473 = vmatprep.subr.mxu0 0.0
    %474 = vmatpush1.msra.mxu0 0.0
    %475 = vmatprep.subr.mxu0 0.0
    %476 = vmatpush1.msra.mxu0 0.0
    %477 = vmatprep.subr.mxu0 0.0
    %478 = vmatpush1.msra.mxu0 0.0
    %479 = vmatprep.mubr.f32.mxu0 0.0
    %480 = vmatmul.mubr.f32.gmra.mrb[0].mxu0 %v203
    %v481 = vpop.f32.mrb[0].mxu0
    %v482 = vadd.f32 0.0, %v481
    %v483 = vpop.f32.mrb[0].mxu0
    %484 = vdwg.mxu0
    %v485 = vadd.f32 %v414, %v482
    %v486 = vxor.u32 %v485, 2147483648
    %v487 = vmul.f32 %v486, 1.442695
    %v488 = vpow.pop %v487
    %v489 = vadd.f32 %v488, 1.0
    %v490 = vrcp.pop %v489
    %v491 = vmul.f32 1.0, %v490
    %v492 = vtanh.pop %v485
    %v493 = vmul.f32 %v491, 0.0
    %495 = vrot.lane.b32.xlu0 %v492, 32
    %v496 = vpop.permute.xlu0 %495
    %v498 = vmul.f32 %v491, %v496
    %500 = vrot.lane.b32.xlu0 %v498, 32
    %v501 = vpop.permute.xlu0 %500
    %v503 = vadd.f32 %v493, %v501
    %v504 = vtanh.pop %v503
    %506 = vrot.lane.b32.xlu0 %v504, 32
    %v507 = vpop.permute.xlu0 %506
    %v509 = vmul.f32 %v491, %v507
    %510 = vmatprep.subr.mxu0 0.0
    %511 = vmatpush1.msra.mxu0 %v101
    %512 = vmatprep.subr.mxu0 0.0
    %513 = vmatpush1.msra.mxu0 %v102
    %514 = vmatprep.subr.mxu0 0.0
    %515 = vmatpush1.msra.mxu0 %v103
    %516 = vmatprep.subr.mxu0 0.0
    %517 = vmatpush1.msra.mxu0 %v104
    %518 = vmatprep.subr.mxu0 0.0
    %519 = vmatpush1.msra.mxu0 0.0
    %520 = vmatprep.subr.mxu0 0.0
    %521 = vmatpush1.msra.mxu0 0.0
    %522 = vmatprep.subr.mxu0 0.0
    %523 = vmatpush1.msra.mxu0 0.0
    %524 = vmatprep.subr.mxu0 0.0
    %525 = vmatpush1.msra.mxu0 0.0
    %526 = vmatprep.subr.mxu0 0.0
    %527 = vmatpush1.msra.mxu0 0.0
    %528 = vmatprep.subr.mxu0 0.0
    %529 = vmatpush1.msra.mxu0 0.0
    %530 = vmatprep.subr.mxu0 0.0
    %531 = vmatpush1.msra.mxu0 0.0
    %532 = vmatprep.subr.mxu0 0.0
    %533 = vmatpush1.msra.mxu0 0.0
    %534 = vmatprep.subr.mxu0 0.0
    %535 = vmatpush1.msra.mxu0 0.0
    %536 = vmatprep.subr.mxu0 0.0
    %537 = vmatpush1.msra.mxu0 0.0
    %538 = vmatprep.subr.mxu0 0.0
    %539 = vmatpush1.msra.mxu0 0.0
    %540 = vmatprep.subr.mxu0 0.0
    %541 = vmatpush1.msra.mxu0 0.0
    %542 = vmatprep.subr.mxu0 0.0
    %543 = vmatpush1.msra.mxu0 0.0
    %544 = vmatprep.subr.mxu0 0.0
    %545 = vmatpush1.msra.mxu0 0.0
    %546 = vmatprep.subr.mxu0 0.0
    %547 = vmatpush1.msra.mxu0 0.0
    %548 = vmatprep.subr.mxu0 0.0
    %549 = vmatpush1.msra.mxu0 0.0
    %550 = vmatprep.subr.mxu0 0.0
    %551 = vmatpush1.msra.mxu0 0.0
    %552 = vmatprep.subr.mxu0 0.0
    %553 = vmatpush1.msra.mxu0 0.0
    %554 = vmatprep.subr.mxu0 0.0
    %555 = vmatpush1.msra.mxu0 0.0
    %556 = vmatprep.subr.mxu0 0.0
    %557 = vmatpush1.msra.mxu0 0.0
    %558 = vmatprep.subr.mxu0 0.0
    %559 = vmatpush1.msra.mxu0 0.0
    %560 = vmatprep.subr.mxu0 0.0
    %561 = vmatpush1.msra.mxu0 0.0
    %562 = vmatprep.subr.mxu0 0.0
    %563 = vmatpush1.msra.mxu0 0.0
    %564 = vmatprep.subr.mxu0 0.0
    %565 = vmatpush1.msra.mxu0 0.0
    %566 = vmatprep.subr.mxu0 0.0
    %567 = vmatpush1.msra.mxu0 0.0
    %568 = vmatprep.subr.mxu0 0.0
    %569 = vmatpush1.msra.mxu0 0.0
    %570 = vmatprep.subr.mxu0 0.0
    %571 = vmatpush1.msra.mxu0 0.0
    %572 = vmatprep.subr.mxu0 0.0
    %573 = vmatpush1.msra.mxu0 0.0
    %574 = vmatprep.mubr.f32.mxu0 0.0
    %575 = vmatmul.mubr.f32.gmra.mrb[0].mxu0 %v336
    %v576 = vpop.f32.mrb[0].mxu0
    %v577 = vadd.f32 0.0, %v576
    %v578 = vpop.f32.mrb[0].mxu0
    %579 = vdwg.mxu0
    %v581 = vrot.slane %v577, 7
    %v584 = vadd.f32 %v193, %v581
    %v585 = vadd.f32 %v198, %v577
    %v586 = vxor.u32 %v584, 2147483648
    %v587 = vxor.u32 %v585, 2147483648
    %v588 = vmul.f32 %v586, 1.442695
    %v589 = vpow.pop %v588
    %v590 = vmul.f32 %v587, 1.442695
    %v591 = vpow.pop %v590
    %v592 = vadd.f32 %v589, 1.0
    %v593 = vadd.f32 %v591, 1.0
    %v594 = vrcp.pop %v592
    %v595 = vmul.f32 1.0, %v594
    %v596 = vrcp.pop %v593
    %v597 = vmul.f32 1.0, %v596
    %v598 = vtanh.pop %v584
    %v599 = vtanh.pop %v585
    %v602 = vrot.slane %v315, 7
    %v603 = vrot.slane %v316, 7
    %v606 = vmul.f32 %v595, %v602
    %v607 = vmul.f32 %v597, %v603
    %610 = vrot.lane.b32.xlu0 %v598, 32
    %v611 = vpop.permute.xlu0 %610
    %612 = vrot.lane.b32.xlu0 %v599, 32
    %v613 = vpop.permute.xlu0 %612
    %v616 = vmul.f32 %v595, %v611
    %v617 = vmul.f32 %v597, %v613
    %620 = vrot.lane.b32.xlu0 %v616, 32
    %v621 = vpop.permute.xlu0 %620
    %622 = vrot.lane.b32.xlu0 %v617, 32
    %v623 = vpop.permute.xlu0 %622
    %v626 = vadd.f32 %v606, %v621
    %v627 = vadd.f32 %v607, %v623
    %v628 = vtanh.pop %v626
    %v629 = vtanh.pop %v627
    %632 = vrot.lane.b32.xlu0 %v628, 32
    %v633 = vpop.permute.xlu0 %632
    %634 = vrot.lane.b32.xlu0 %v629, 32
    %v635 = vpop.permute.xlu0 %634
    %v638 = vmul.f32 %v595, %v633
    %v639 = vmul.f32 %v597, %v635
    %v642 = vrot.slane %v638, 1
    %v643 = vsel %vm332, %v639, %v642
    %644 = vrot.lane.b32.xlu0 %v643, 64
    %v645 = vpop.permute.xlu0 %644
    %v646 = vsel %vm201, %v645, 0
    %648 = vmatprep.subr.mxu0 0.0
    %649 = vmatpush1.msra.mxu0 %v97
    %650 = vmatprep.subr.mxu0 0.0
    %651 = vmatpush1.msra.mxu0 %v98
    %652 = vmatprep.subr.mxu0 0.0
    %653 = vmatpush1.msra.mxu0 %v99
    %654 = vmatprep.subr.mxu0 0.0
    %655 = vmatpush1.msra.mxu0 %v100
    %656 = vmatprep.subr.mxu0 0.0
    %657 = vmatpush1.msra.mxu0 0.0
    %658 = vmatprep.subr.mxu0 0.0
    %659 = vmatpush1.msra.mxu0 0.0
    %660 = vmatprep.subr.mxu0 0.0
    %661 = vmatpush1.msra.mxu0 0.0
    %662 = vmatprep.subr.mxu0 0.0
    %663 = vmatpush1.msra.mxu0 0.0
    %664 = vmatprep.subr.mxu0 0.0
    %665 = vmatpush1.msra.mxu0 0.0
    %666 = vmatprep.subr.mxu0 0.0
    %667 = vmatpush1.msra.mxu0 0.0
    %668 = vmatprep.subr.mxu0 0.0
    %669 = vmatpush1.msra.mxu0 0.0
    %670 = vmatprep.subr.mxu0 0.0
    %671 = vmatpush1.msra.mxu0 0.0
    %672 = vmatprep.subr.mxu0 0.0
    %673 = vmatpush1.msra.mxu0 0.0
    %674 = vmatprep.subr.mxu0 0.0
    %675 = vmatpush1.msra.mxu0 0.0
    %676 = vmatprep.subr.mxu0 0.0
    %677 = vmatpush1.msra.mxu0 0.0
    %678 = vmatprep.subr.mxu0 0.0
    %679 = vmatpush1.msra.mxu0 0.0
    %680 = vmatprep.subr.mxu0 0.0
    %681 = vmatpush1.msra.mxu0 0.0
    %682 = vmatprep.subr.mxu0 0.0
    %683 = vmatpush1.msra.mxu0 0.0
    %684 = vmatprep.subr.mxu0 0.0
    %685 = vmatpush1.msra.mxu0 0.0
    %686 = vmatprep.subr.mxu0 0.0
    %687 = vmatpush1.msra.mxu0 0.0
    %688 = vmatprep.subr.mxu0 0.0
    %689 = vmatpush1.msra.mxu0 0.0
    %690 = vmatprep.subr.mxu0 0.0
    %691 = vmatpush1.msra.mxu0 0.0
    %692 = vmatprep.subr.mxu0 0.0
    %693 = vmatpush1.msra.mxu0 0.0
    %694 = vmatprep.subr.mxu0 0.0
    %695 = vmatpush1.msra.mxu0 0.0
    %696 = vmatprep.subr.mxu0 0.0
    %697 = vmatpush1.msra.mxu0 0.0
    %698 = vmatprep.subr.mxu0 0.0
    %699 = vmatpush1.msra.mxu0 0.0
    %700 = vmatprep.subr.mxu0 0.0
    %701 = vmatpush1.msra.mxu0 0.0
    %702 = vmatprep.subr.mxu0 0.0
    %703 = vmatpush1.msra.mxu0 0.0
    %704 = vmatprep.subr.mxu0 0.0
    %705 = vmatpush1.msra.mxu0 0.0
    %706 = vmatprep.subr.mxu0 0.0
    %707 = vmatpush1.msra.mxu0 0.0
    %708 = vmatprep.subr.mxu0 0.0
    %709 = vmatpush1.msra.mxu0 0.0
    %710 = vmatprep.subr.mxu0 0.0
    %711 = vmatpush1.msra.mxu0 0.0
    %712 = vmatprep.mubr.f32.mxu0 0.0
    %713 = vmatmul.mubr.f32.gmra.mrb[0].mxu0 %v646
    %v714 = vpop.f32.mrb[0].mxu0
    %v715 = vadd.f32 0.0, %v714
    %v716 = vpop.f32.mrb[0].mxu0
    %717 = vdwg.mxu0
    %v718 = vadd.f32 %v412, %v715
    %720 = vrot.lane.b32.xlu0 %v509, 64
    %v721 = vpop.permute.xlu0 %720
    %v722 = vsel %vm201, %v721, 0
    %724 = vmatprep.subr.mxu0 0.0
    %725 = vmatpush1.msra.mxu0 %v105
    %726 = vmatprep.subr.mxu0 0.0
    %727 = vmatpush1.msra.mxu0 %v106
    %728 = vmatprep.subr.mxu0 0.0
    %729 = vmatpush1.msra.mxu0 %v107
    %730 = vmatprep.subr.mxu0 0.0
    %731 = vmatpush1.msra.mxu0 %v108
    %732 = vmatprep.subr.mxu0 0.0
    %733 = vmatpush1.msra.mxu0 0.0
    %734 = vmatprep.subr.mxu0 0.0
    %735 = vmatpush1.msra.mxu0 0.0
    %736 = vmatprep.subr.mxu0 0.0
    %737 = vmatpush1.msra.mxu0 0.0
    %738 = vmatprep.subr.mxu0 0.0
    %739 = vmatpush1.msra.mxu0 0.0
    %740 = vmatprep.subr.mxu0 0.0
    %741 = vmatpush1.msra.mxu0 0.0
    %742 = vmatprep.subr.mxu0 0.0
    %743 = vmatpush1.msra.mxu0 0.0
    %744 = vmatprep.subr.mxu0 0.0
    %745 = vmatpush1.msra.mxu0 0.0
    %746 = vmatprep.subr.mxu0 0.0
    %747 = vmatpush1.msra.mxu0 0.0
    %748 = vmatprep.subr.mxu0 0.0
    %749 = vmatpush1.msra.mxu0 0.0
    %750 = vmatprep.subr.mxu0 0.0
    %751 = vmatpush1.msra.mxu0 0.0
    %752 = vmatprep.subr.mxu0 0.0
    %753 = vmatpush1.msra.mxu0 0.0
    %754 = vmatprep.subr.mxu0 0.0
    %755 = vmatpush1.msra.mxu0 0.0
    %756 = vmatprep.subr.mxu0 0.0
    %757 = vmatpush1.msra.mxu0 0.0
    %758 = vmatprep.subr.mxu0 0.0
    %759 = vmatpush1.msra.mxu0 0.0
    %760 = vmatprep.subr.mxu0 0.0
    %761 = vmatpush1.msra.mxu0 0.0
    %762 = vmatprep.subr.mxu0 0.0
    %763 = vmatpush1.msra.mxu0 0.0
    %764 = vmatprep.subr.mxu0 0.0
    %765 = vmatpush1.msra.mxu0 0.0
    %766 = vmatprep.subr.mxu0 0.0
    %767 = vmatpush1.msra.mxu0 0.0
    %768 = vmatprep.subr.mxu0 0.0
    %769 = vmatpush1.msra.mxu0 0.0
    %770 = vmatprep.subr.mxu0 0.0
    %771 = vmatpush1.msra.mxu0 0.0
    %772 = vmatprep.subr.mxu0 0.0
    %773 = vmatpush1.msra.mxu0 0.0
    %774 = vmatprep.subr.mxu0 0.0
    %775 = vmatpush1.msra.mxu0 0.0
    %776 = vmatprep.subr.mxu0 0.0
    %777 = vmatpush1.msra.mxu0 0.0
    %778 = vmatprep.subr.mxu0 0.0
    %779 = vmatpush1.msra.mxu0 0.0
    %780 = vmatprep.subr.mxu0 0.0
    %781 = vmatpush1.msra.mxu0 0.0
    %782 = vmatprep.subr.mxu0 0.0
    %783 = vmatpush1.msra.mxu0 0.0
    %784 = vmatprep.subr.mxu0 0.0
    %785 = vmatpush1.msra.mxu0 0.0
    %786 = vmatprep.subr.mxu0 0.0
    %787 = vmatpush1.msra.mxu0 0.0
    %788 = vmatprep.mubr.f32.mxu0 0.0
    %789 = vmatmul.mubr.f32.gmra.mrb[0].mxu0 %v722
    %v790 = vpop.f32.mrb[0].mxu0
    %v791 = vadd.f32 0.0, %v790
    %v792 = vpop.f32.mrb[0].mxu0
    %793 = vdwg.mxu0
    %v794 = vadd.f32 %v718, %v791
    %v795 = vxor.u32 %v794, 2147483648
    %v796 = vmul.f32 %v795, 1.442695
    %v797 = vpow.pop %v796
    %v798 = vadd.f32 %v797, 1.0
    %v799 = vrcp.pop %v798
    %v800 = vmul.f32 1.0, %v799
    %v801 = vtanh.pop %v794
    %v802 = vmul.f32 %v800, %v503
    %804 = vrot.lane.b32.xlu0 %v801, 32
    %v805 = vpop.permute.xlu0 %804
    %v807 = vmul.f32 %v800, %v805
    %809 = vrot.lane.b32.xlu0 %v807, 32
    %v810 = vpop.permute.xlu0 %809
    %v812 = vadd.f32 %v802, %v810
    %v813 = vtanh.pop %v812
    %815 = vrot.lane.b32.xlu0 %v813, 32
    %v816 = vpop.permute.xlu0 %815
    %v818 = vmul.f32 %v800, %v816
    %819 = vmatprep.subr.mxu0 0.0
    %820 = vmatpush1.msra.mxu0 %v101
    %821 = vmatprep.subr.mxu0 0.0
    %822 = vmatpush1.msra.mxu0 %v102
    %823 = vmatprep.subr.mxu0 0.0
    %824 = vmatpush1.msra.mxu0 %v103
    %825 = vmatprep.subr.mxu0 0.0
    %826 = vmatpush1.msra.mxu0 %v104
    %827 = vmatprep.subr.mxu0 0.0
    %828 = vmatpush1.msra.mxu0 0.0
    %829 = vmatprep.subr.mxu0 0.0
    %830 = vmatpush1.msra.mxu0 0.0
    %831 = vmatprep.subr.mxu0 0.0
    %832 = vmatpush1.msra.mxu0 0.0
    %833 = vmatprep.subr.mxu0 0.0
    %834 = vmatpush1.msra.mxu0 0.0
    %835 = vmatprep.subr.mxu0 0.0
    %836 = vmatpush1.msra.mxu0 0.0
    %837 = vmatprep.subr.mxu0 0.0
    %838 = vmatpush1.msra.mxu0 0.0
    %839 = vmatprep.subr.mxu0 0.0
    %840 = vmatpush1.msra.mxu0 0.0
    %841 = vmatprep.subr.mxu0 0.0
    %842 = vmatpush1.msra.mxu0 0.0
    %843 = vmatprep.subr.mxu0 0.0
    %844 = vmatpush1.msra.mxu0 0.0
    %845 = vmatprep.subr.mxu0 0.0
    %846 = vmatpush1.msra.mxu0 0.0
    %847 = vmatprep.subr.mxu0 0.0
    %848 = vmatpush1.msra.mxu0 0.0
    %849 = vmatprep.subr.mxu0 0.0
    %850 = vmatpush1.msra.mxu0 0.0
    %851 = vmatprep.subr.mxu0 0.0
    %852 = vmatpush1.msra.mxu0 0.0
    %853 = vmatprep.subr.mxu0 0.0
    %854 = vmatpush1.msra.mxu0 0.0
    %855 = vmatprep.subr.mxu0 0.0
    %856 = vmatpush1.msra.mxu0 0.0
    %857 = vmatprep.subr.mxu0 0.0
    %858 = vmatpush1.msra.mxu0 0.0
    %859 = vmatprep.subr.mxu0 0.0
    %860 = vmatpush1.msra.mxu0 0.0
    %861 = vmatprep.subr.mxu0 0.0
    %862 = vmatpush1.msra.mxu0 0.0
    %863 = vmatprep.subr.mxu0 0.0
    %864 = vmatpush1.msra.mxu0 0.0
    %865 = vmatprep.subr.mxu0 0.0
    %866 = vmatpush1.msra.mxu0 0.0
    %867 = vmatprep.subr.mxu0 0.0
    %868 = vmatpush1.msra.mxu0 0.0
    %869 = vmatprep.subr.mxu0 0.0
    %870 = vmatpush1.msra.mxu0 0.0
    %871 = vmatprep.subr.mxu0 0.0
    %872 = vmatpush1.msra.mxu0 0.0
    %873 = vmatprep.subr.mxu0 0.0
    %874 = vmatpush1.msra.mxu0 0.0
    %875 = vmatprep.subr.mxu0 0.0
    %876 = vmatpush1.msra.mxu0 0.0
    %877 = vmatprep.subr.mxu0 0.0
    %878 = vmatpush1.msra.mxu0 0.0
    %879 = vmatprep.subr.mxu0 0.0
    %880 = vmatpush1.msra.mxu0 0.0
    %881 = vmatprep.subr.mxu0 0.0
    %882 = vmatpush1.msra.mxu0 0.0
    %883 = vmatprep.mubr.f32.mxu0 0.0
    %884 = vmatmul.mubr.f32.gmra.mrb[0].mxu0 %v646
    %v885 = vpop.f32.mrb[0].mxu0
    %v886 = vadd.f32 0.0, %v885
    %v887 = vpop.f32.mrb[0].mxu0
    %888 = vdwg.mxu0
    %v890 = vrot.slane %v886, 6
    %v891 = vrot.slane %v886, 7
    %v894 = vadd.f32 %v193, %v890
    %v895 = vadd.f32 %v198, %v891
    %v896 = vxor.u32 %v894, 2147483648
    %v897 = vxor.u32 %v895, 2147483648
    %v898 = vmul.f32 %v896, 1.442695
    %v899 = vpow.pop %v898
    %v900 = vmul.f32 %v897, 1.442695
    %v901 = vpow.pop %v900
    %v902 = vadd.f32 %v899, 1.0
    %v903 = vadd.f32 %v901, 1.0
    %v904 = vrcp.pop %v902
    %v905 = vmul.f32 1.0, %v904
    %v906 = vrcp.pop %v903
    %v907 = vmul.f32 1.0, %v906
    %v908 = vtanh.pop %v894
    %v909 = vtanh.pop %v895
    %v912 = vrot.slane %v626, 7
    %v913 = vrot.slane %v627, 7
    %v916 = vmul.f32 %v905, %v912
    %v917 = vmul.f32 %v907, %v913
    %920 = vrot.lane.b32.xlu0 %v908, 32
    %v921 = vpop.permute.xlu0 %920
    %922 = vrot.lane.b32.xlu0 %v909, 32
    %v923 = vpop.permute.xlu0 %922
    %v926 = vmul.f32 %v905, %v921
    %v927 = vmul.f32 %v907, %v923
    %930 = vrot.lane.b32.xlu0 %v926, 32
    %v931 = vpop.permute.xlu0 %930
    %932 = vrot.lane.b32.xlu0 %v927, 32
    %v933 = vpop.permute.xlu0 %932
    %v936 = vadd.f32 %v916, %v931
    %v937 = vadd.f32 %v917, %v933
    %v938 = vtanh.pop %v936
    %v939 = vtanh.pop %v937
    %942 = vrot.lane.b32.xlu0 %v938, 32
    %v943 = vpop.permute.xlu0 %942
    %944 = vrot.lane.b32.xlu0 %v939, 32
    %v945 = vpop.permute.xlu0 %944
    %v948 = vmul.f32 %v905, %v943
    %v949 = vmul.f32 %v907, %v945
    %v952 = vrot.slane %v948, 2
    %v953 = vrot.slane %v949, 1
    %v954 = vsel %vm332, %v953, %v952
    %955 = vrot.lane.b32.xlu0 %v954, 64
    %v956 = vpop.permute.xlu0 %955
    %v957 = vsel %vm201, %v956, 0
    %959 = vmatprep.subr.mxu0 0.0
    %960 = vmatpush1.msra.mxu0 %v97
    %961 = vmatprep.subr.mxu0 0.0
    %962 = vmatpush1.msra.mxu0 %v98
    %963 = vmatprep.subr.mxu0 0.0
    %964 = vmatpush1.msra.mxu0 %v99
    %965 = vmatprep.subr.mxu0 0.0
    %966 = vmatpush1.msra.mxu0 %v100
    %967 = vmatprep.subr.mxu0 0.0
    %968 = vmatpush1.msra.mxu0 0.0
    %969 = vmatprep.subr.mxu0 0.0
    %970 = vmatpush1.msra.mxu0 0.0
    %971 = vmatprep.subr.mxu0 0.0
    %972 = vmatpush1.msra.mxu0 0.0
    %973 = vmatprep.subr.mxu0 0.0
    %974 = vmatpush1.msra.mxu0 0.0
    %975 = vmatprep.subr.mxu0 0.0
    %976 = vmatpush1.msra.mxu0 0.0
    %977 = vmatprep.subr.mxu0 0.0
    %978 = vmatpush1.msra.mxu0 0.0
    %979 = vmatprep.subr.mxu0 0.0
    %980 = vmatpush1.msra.mxu0 0.0
    %981 = vmatprep.subr.mxu0 0.0
    %982 = vmatpush1.msra.mxu0 0.0
    %983 = vmatprep.subr.mxu0 0.0
    %984 = vmatpush1.msra.mxu0 0.0
    %985 = vmatprep.subr.mxu0 0.0
    %986 = vmatpush1.msra.mxu0 0.0
    %987 = vmatprep.subr.mxu0 0.0
    %988 = vmatpush1.msra.mxu0 0.0
    %989 = vmatprep.subr.mxu0 0.0
    %990 = vmatpush1.msra.mxu0 0.0
    %991 = vmatprep.subr.mxu0 0.0
    %992 = vmatpush1.msra.mxu0 0.0
    %993 = vmatprep.subr.mxu0 0.0
    %994 = vmatpush1.msra.mxu0 0.0
    %995 = vmatprep.subr.mxu0 0.0
    %996 = vmatpush1.msra.mxu0 0.0
    %997 = vmatprep.subr.mxu0 0.0
    %998 = vmatpush1.msra.mxu0 0.0
    %999 = vmatprep.subr.mxu0 0.0
    %1000 = vmatpush1.msra.mxu0 0.0
    %1001 = vmatprep.subr.mxu0 0.0
    %1002 = vmatpush1.msra.mxu0 0.0
    %1003 = vmatprep.subr.mxu0 0.0
    %1004 = vmatpush1.msra.mxu0 0.0
    %1005 = vmatprep.subr.mxu0 0.0
    %1006 = vmatpush1.msra.mxu0 0.0
    %1007 = vmatprep.subr.mxu0 0.0
    %1008 = vmatpush1.msra.mxu0 0.0
    %1009 = vmatprep.subr.mxu0 0.0
    %1010 = vmatpush1.msra.mxu0 0.0
    %1011 = vmatprep.subr.mxu0 0.0
    %1012 = vmatpush1.msra.mxu0 0.0
    %1013 = vmatprep.subr.mxu0 0.0
    %1014 = vmatpush1.msra.mxu0 0.0
    %1015 = vmatprep.subr.mxu0 0.0
    %1016 = vmatpush1.msra.mxu0 0.0
    %1017 = vmatprep.subr.mxu0 0.0
    %1018 = vmatpush1.msra.mxu0 0.0
    %1019 = vmatprep.subr.mxu0 0.0
    %1020 = vmatpush1.msra.mxu0 0.0
    %1021 = vmatprep.subr.mxu0 0.0
    %1022 = vmatpush1.msra.mxu0 0.0
    %1023 = vmatprep.mubr.f32.mxu0 0.0
    %1024 = vmatmul.mubr.f32.gmra.mrb[0].mxu0 %v957
    %v1025 = vpop.f32.mrb[0].mxu0
    %v1026 = vadd.f32 0.0, %v1025
    %v1027 = vpop.f32.mrb[0].mxu0
    %1028 = vdwg.mxu0
    %v1029 = vadd.f32 %v412, %v1026
    %1031 = vrot.lane.b32.xlu0 %v818, 64
    %v1032 = vpop.permute.xlu0 %1031
    %v1033 = vsel %vm201, %v1032, 0
    %1035 = vmatprep.subr.mxu0 0.0
    %1036 = vmatpush1.msra.mxu0 %v105
    %1037 = vmatprep.subr.mxu0 0.0
    %1038 = vmatpush1.msra.mxu0 %v106
    %1039 = vmatprep.subr.mxu0 0.0
    %1040 = vmatpush1.msra.mxu0 %v107
    %1041 = vmatprep.subr.mxu0 0.0
    %1042 = vmatpush1.msra.mxu0 %v108
    %1043 = vmatprep.subr.mxu0 0.0
    %1044 = vmatpush1.msra.mxu0 0.0
    %1045 = vmatprep.subr.mxu0 0.0
    %1046 = vmatpush1.msra.mxu0 0.0
    %1047 = vmatprep.subr.mxu0 0.0
    %1048 = vmatpush1.msra.mxu0 0.0
    %1049 = vmatprep.subr.mxu0 0.0
    %1050 = vmatpush1.msra.mxu0 0.0
    %1051 = vmatprep.subr.mxu0 0.0
    %1052 = vmatpush1.msra.mxu0 0.0
    %1053 = vmatprep.subr.mxu0 0.0
    %1054 = vmatpush1.msra.mxu0 0.0
    %1055 = vmatprep.subr.mxu0 0.0
    %1056 = vmatpush1.msra.mxu0 0.0
    %1057 = vmatprep.subr.mxu0 0.0
    %1058 = vmatpush1.msra.mxu0 0.0
    %1059 = vmatprep.subr.mxu0 0.0
    %1060 = vmatpush1.msra.mxu0 0.0
    %1061 = vmatprep.subr.mxu0 0.0
    %1062 = vmatpush1.msra.mxu0 0.0
    %1063 = vmatprep.subr.mxu0 0.0
    %1064 = vmatpush1.msra.mxu0 0.0
    %1065 = vmatprep.subr.mxu0 0.0
    %1066 = vmatpush1.msra.mxu0 0.0
    %1067 = vmatprep.subr.mxu0 0.0
    %1068 = vmatpush1.msra.mxu0 0.0
    %1069 = vmatprep.subr.mxu0 0.0
    %1070 = vmatpush1.msra.mxu0 0.0
    %1071 = vmatprep.subr.mxu0 0.0
    %1072 = vmatpush1.msra.mxu0 0.0
    %1073 = vmatprep.subr.mxu0 0.0
    %1074 = vmatpush1.msra.mxu0 0.0
    %1075 = vmatprep.subr.mxu0 0.0
    %1076 = vmatpush1.msra.mxu0 0.0
    %1077 = vmatprep.subr.mxu0 0.0
    %1078 = vmatpush1.msra.mxu0 0.0
    %1079 = vmatprep.subr.mxu0 0.0
    %1080 = vmatpush1.msra.mxu0 0.0
    %1081 = vmatprep.subr.mxu0 0.0
    %1082 = vmatpush1.msra.mxu0 0.0
    %1083 = vmatprep.subr.mxu0 0.0
    %1084 = vmatpush1.msra.mxu0 0.0
    %1085 = vmatprep.subr.mxu0 0.0
    %1086 = vmatpush1.msra.mxu0 0.0
    %1087 = vmatprep.subr.mxu0 0.0
    %1088 = vmatpush1.msra.mxu0 0.0
    %1089 = vmatprep.subr.mxu0 0.0
    %1090 = vmatpush1.msra.mxu0 0.0
    %1091 = vmatprep.subr.mxu0 0.0
    %1092 = vmatpush1.msra.mxu0 0.0
    %1093 = vmatprep.subr.mxu0 0.0
    %1094 = vmatpush1.msra.mxu0 0.0
    %1095 = vmatprep.subr.mxu0 0.0
    %1096 = vmatpush1.msra.mxu0 0.0
    %1097 = vmatprep.subr.mxu0 0.0
    %1098 = vmatpush1.msra.mxu0 0.0
    %1099 = vmatprep.mubr.f32.mxu0 0.0
    %1100 = vmatmul.mubr.f32.gmra.mrb[0].mxu0 %v1033
    %v1101 = vpop.f32.mrb[0].mxu0
    %v1102 = vadd.f32 0.0, %v1101
    %v1103 = vpop.f32.mrb[0].mxu0
    %1104 = vdwg.mxu0
    %v1105 = vadd.f32 %v1029, %v1102
    %v1106 = vxor.u32 %v1105, 2147483648
    %v1107 = vmul.f32 %v1106, 1.442695
    %v1108 = vpow.pop %v1107
    %v1109 = vadd.f32 %v1108, 1.0
    %v1110 = vrcp.pop %v1109
    %v1111 = vmul.f32 1.0, %v1110
    %v1112 = vtanh.pop %v1105
    %v1113 = vmul.f32 %v1111, %v812
    %1115 = vrot.lane.b32.xlu0 %v1112, 32
    %v1116 = vpop.permute.xlu0 %1115
    %v1118 = vmul.f32 %v1111, %v1116
    %1120 = vrot.lane.b32.xlu0 %v1118, 32
    %v1121 = vpop.permute.xlu0 %1120
    %v1123 = vadd.f32 %v1113, %v1121
    %v1124 = vtanh.pop %v1123
    %1126 = vrot.lane.b32.xlu0 %v1124, 32
    %v1127 = vpop.permute.xlu0 %1126
    %v1129 = vmul.f32 %v1111, %v1127
    %1130 = vmatprep.subr.mxu0 0.0
    %1131 = vmatpush1.msra.mxu0 %v101
    %1132 = vmatprep.subr.mxu0 0.0
    %1133 = vmatpush1.msra.mxu0 %v102
    %1134 = vmatprep.subr.mxu0 0.0
    %1135 = vmatpush1.msra.mxu0 %v103
    %1136 = vmatprep.subr.mxu0 0.0
    %1137 = vmatpush1.msra.mxu0 %v104
    %1138 = vmatprep.subr.mxu0 0.0
    %1139 = vmatpush1.msra.mxu0 0.0
    %1140 = vmatprep.subr.mxu0 0.0
    %1141 = vmatpush1.msra.mxu0 0.0
    %1142 = vmatprep.subr.mxu0 0.0
    %1143 = vmatpush1.msra.mxu0 0.0
    %1144 = vmatprep.subr.mxu0 0.0
    %1145 = vmatpush1.msra.mxu0 0.0
    %1146 = vmatprep.subr.mxu0 0.0
    %1147 = vmatpush1.msra.mxu0 0.0
    %1148 = vmatprep.subr.mxu0 0.0
    %1149 = vmatpush1.msra.mxu0 0.0
    %1150 = vmatprep.subr.mxu0 0.0
    %1151 = vmatpush1.msra.mxu0 0.0
    %1152 = vmatprep.subr.mxu0 0.0
    %1153 = vmatpush1.msra.mxu0 0.0
    %1154 = vmatprep.subr.mxu0 0.0
    %1155 = vmatpush1.msra.mxu0 0.0
    %1156 = vmatprep.subr.mxu0 0.0
    %1157 = vmatpush1.msra.mxu0 0.0
    %1158 = vmatprep.subr.mxu0 0.0
    %1159 = vmatpush1.msra.mxu0 0.0
    %1160 = vmatprep.subr.mxu0 0.0
    %1161 = vmatpush1.msra.mxu0 0.0
    %1162 = vmatprep.subr.mxu0 0.0
    %1163 = vmatpush1.msra.mxu0 0.0
    %1164 = vmatprep.subr.mxu0 0.0
    %1165 = vmatpush1.msra.mxu0 0.0
    %1166 = vmatprep.subr.mxu0 0.0
    %1167 = vmatpush1.msra.mxu0 0.0
    %1168 = vmatprep.subr.mxu0 0.0
    %1169 = vmatpush1.msra.mxu0 0.0
    %1170 = vmatprep.subr.mxu0 0.0
    %1171 = vmatpush1.msra.mxu0 0.0
    %1172 = vmatprep.subr.mxu0 0.0
    %1173 = vmatpush1.msra.mxu0 0.0
    %1174 = vmatprep.subr.mxu0 0.0
    %1175 = vmatpush1.msra.mxu0 0.0
    %1176 = vmatprep.subr.mxu0 0.0
    %1177 = vmatpush1.msra.mxu0 0.0
    %1178 = vmatprep.subr.mxu0 0.0
    %1179 = vmatpush1.msra.mxu0 0.0
    %1180 = vmatprep.subr.mxu0 0.0
    %1181 = vmatpush1.msra.mxu0 0.0
    %1182 = vmatprep.subr.mxu0 0.0
    %1183 = vmatpush1.msra.mxu0 0.0
    %1184 = vmatprep.subr.mxu0 0.0
    %1185 = vmatpush1.msra.mxu0 0.0
    %1186 = vmatprep.subr.mxu0 0.0
    %1187 = vmatpush1.msra.mxu0 0.0
    %1188 = vmatprep.subr.mxu0 0.0
    %1189 = vmatpush1.msra.mxu0 0.0
    %1190 = vmatprep.subr.mxu0 0.0
    %1191 = vmatpush1.msra.mxu0 0.0
    %1192 = vmatprep.subr.mxu0 0.0
    %1193 = vmatpush1.msra.mxu0 0.0
    %1194 = vmatprep.mubr.f32.mxu0 0.0
    %1195 = vmatmul.mubr.f32.gmra.mrb[0].mxu0 %v957
    %v1196 = vpop.f32.mrb[0].mxu0
    %v1197 = vadd.f32 0.0, %v1196
    %v1198 = vpop.f32.mrb[0].mxu0
    %1199 = vdwg.mxu0
    %v1201 = vrot.slane %v1197, 5
    %v1202 = vrot.slane %v1197, 6
    %v1205 = vadd.f32 %v193, %v1201
    %v1206 = vadd.f32 %v198, %v1202
    %v1207 = vxor.u32 %v1205, 2147483648
    %v1208 = vxor.u32 %v1206, 2147483648
    %v1209 = vmul.f32 %v1207, 1.442695
    %v1210 = vpow.pop %v1209
    %v1211 = vmul.f32 %v1208, 1.442695
    %v1212 = vpow.pop %v1211
    %v1213 = vadd.f32 %v1210, 1.0
    %v1214 = vadd.f32 %v1212, 1.0
    %v1215 = vrcp.pop %v1213
    %v1216 = vmul.f32 1.0, %v1215
    %v1217 = vrcp.pop %v1214
    %v1218 = vmul.f32 1.0, %v1217
    %v1219 = vtanh.pop %v1205
    %v1220 = vtanh.pop %v1206
    %v1223 = vrot.slane %v936, 7
    %v1224 = vrot.slane %v937, 7
    %v1227 = vmul.f32 %v1216, %v1223
    %v1228 = vmul.f32 %v1218, %v1224
    %1231 = vrot.lane.b32.xlu0 %v1219, 32
    %v1232 = vpop.permute.xlu0 %1231
    %1233 = vrot.lane.b32.xlu0 %v1220, 32
    %v1234 = vpop.permute.xlu0 %1233
    %v1237 = vmul.f32 %v1216, %v1232
    %v1238 = vmul.f32 %v1218, %v1234
    %1241 = vrot.lane.b32.xlu0 %v1237, 32
    %v1242 = vpop.permute.xlu0 %1241
    %1243 = vrot.lane.b32.xlu0 %v1238, 32
    %v1244 = vpop.permute.xlu0 %1243
    %v1247 = vadd.f32 %v1227, %v1242
    %v1248 = vadd.f32 %v1228, %v1244
    %v1249 = vtanh.pop %v1247
    %v1250 = vtanh.pop %v1248
    %1253 = vrot.lane.b32.xlu0 %v1249, 32
    %v1254 = vpop.permute.xlu0 %1253
    %1255 = vrot.lane.b32.xlu0 %v1250, 32
    %v1256 = vpop.permute.xlu0 %1255
    %v1259 = vmul.f32 %v1216, %v1254
    %v1260 = vmul.f32 %v1218, %v1256
    %v1263 = vrot.slane %v1259, 3
    %v1264 = vrot.slane %v1260, 2
    %v1265 = vsel %vm332, %v1264, %v1263
    %1266 = vrot.lane.b32.xlu0 %v1265, 64
    %v1267 = vpop.permute.xlu0 %1266
    %v1268 = vsel %vm201, %v1267, 0
    %1270 = vmatprep.subr.mxu0 0.0
    %1271 = vmatpush1.msra.mxu0 %v97
    %1272 = vmatprep.subr.mxu0 0.0
    %1273 = vmatpush1.msra.mxu0 %v98
    %1274 = vmatprep.subr.mxu0 0.0
    %1275 = vmatpush1.msra.mxu0 %v99
    %1276 = vmatprep.subr.mxu0 0.0
    %1277 = vmatpush1.msra.mxu0 %v100
    %1278 = vmatprep.subr.mxu0 0.0
    %1279 = vmatpush1.msra.mxu0 0.0
    %1280 = vmatprep.subr.mxu0 0.0
    %1281 = vmatpush1.msra.mxu0 0.0
    %1282 = vmatprep.subr.mxu0 0.0
    %1283 = vmatpush1.msra.mxu0 0.0
    %1284 = vmatprep.subr.mxu0 0.0
    %1285 = vmatpush1.msra.mxu0 0.0
    %1286 = vmatprep.subr.mxu0 0.0
    %1287 = vmatpush1.msra.mxu0 0.0
    %1288 = vmatprep.subr.mxu0 0.0
    %1289 = vmatpush1.msra.mxu0 0.0
    %1290 = vmatprep.subr.mxu0 0.0
    %1291 = vmatpush1.msra.mxu0 0.0
    %1292 = vmatprep.subr.mxu0 0.0
    %1293 = vmatpush1.msra.mxu0 0.0
    %1294 = vmatprep.subr.mxu0 0.0
    %1295 = vmatpush1.msra.mxu0 0.0
    %1296 = vmatprep.subr.mxu0 0.0
    %1297 = vmatpush1.msra.mxu0 0.0
    %1298 = vmatprep.subr.mxu0 0.0
    %1299 = vmatpush1.msra.mxu0 0.0
    %1300 = vmatprep.subr.mxu0 0.0
    %1301 = vmatpush1.msra.mxu0 0.0
    %1302 = vmatprep.subr.mxu0 0.0
    %1303 = vmatpush1.msra.mxu0 0.0
    %1304 = vmatprep.subr.mxu0 0.0
    %1305 = vmatpush1.msra.mxu0 0.0
    %1306 = vmatprep.subr.mxu0 0.0
    %1307 = vmatpush1.msra.mxu0 0.0
    %1308 = vmatprep.subr.mxu0 0.0
    %1309 = vmatpush1.msra.mxu0 0.0
    %1310 = vmatprep.subr.mxu0 0.0
    %1311 = vmatpush1.msra.mxu0 0.0
    %1312 = vmatprep.subr.mxu0 0.0
    %1313 = vmatpush1.msra.mxu0 0.0
    %1314 = vmatprep.subr.mxu0 0.0
    %1315 = vmatpush1.msra.mxu0 0.0
    %1316 = vmatprep.subr.mxu0 0.0
    %1317 = vmatpush1.msra.mxu0 0.0
    %1318 = vmatprep.subr.mxu0 0.0
    %1319 = vmatpush1.msra.mxu0 0.0
    %1320 = vmatprep.subr.mxu0 0.0
    %1321 = vmatpush1.msra.mxu0 0.0
    %1322 = vmatprep.subr.mxu0 0.0
    %1323 = vmatpush1.msra.mxu0 0.0
    %1324 = vmatprep.subr.mxu0 0.0
    %1325 = vmatpush1.msra.mxu0 0.0
    %1326 = vmatprep.subr.mxu0 0.0
    %1327 = vmatpush1.msra.mxu0 0.0
    %1328 = vmatprep.subr.mxu0 0.0
    %1329 = vmatpush1.msra.mxu0 0.0
    %1330 = vmatprep.subr.mxu0 0.0
    %1331 = vmatpush1.msra.mxu0 0.0
    %1332 = vmatprep.subr.mxu0 0.0
    %1333 = vmatpush1.msra.mxu0 0.0
    %1334 = vmatprep.mubr.f32.mxu0 0.0
    %1335 = vmatmul.mubr.f32.gmra.mrb[0].mxu0 %v1268
    %v1336 = vpop.f32.mrb[0].mxu0
    %v1337 = vadd.f32 0.0, %v1336
    %v1338 = vpop.f32.mrb[0].mxu0
    %1339 = vdwg.mxu0
    %v1340 = vadd.f32 %v412, %v1337
    %1342 = vrot.lane.b32.xlu0 %v1129, 64
    %v1343 = vpop.permute.xlu0 %1342
    %v1344 = vsel %vm201, %v1343, 0
    %1346 = vmatprep.subr.mxu0 0.0
    %1347 = vmatpush1.msra.mxu0 %v105
    %1348 = vmatprep.subr.mxu0 0.0
    %1349 = vmatpush1.msra.mxu0 %v106
    %1350 = vmatprep.subr.mxu0 0.0
    %1351 = vmatpush1.msra.mxu0 %v107
    %1352 = vmatprep.subr.mxu0 0.0
    %1353 = vmatpush1.msra.mxu0 %v108
    %1354 = vmatprep.subr.mxu0 0.0
    %1355 = vmatpush1.msra.mxu0 0.0
    %1356 = vmatprep.subr.mxu0 0.0
    %1357 = vmatpush1.msra.mxu0 0.0
    %1358 = vmatprep.subr.mxu0 0.0
    %1359 = vmatpush1.msra.mxu0 0.0
    %1360 = vmatprep.subr.mxu0 0.0
    %1361 = vmatpush1.msra.mxu0 0.0
    %1362 = vmatprep.subr.mxu0 0.0
    %1363 = vmatpush1.msra.mxu0 0.0
    %1364 = vmatprep.subr.mxu0 0.0
    %1365 = vmatpush1.msra.mxu0 0.0
    %1366 = vmatprep.subr.mxu0 0.0
    %1367 = vmatpush1.msra.mxu0 0.0
    %1368 = vmatprep.subr.mxu0 0.0
    %1369 = vmatpush1.msra.mxu0 0.0
    %1370 = vmatprep.subr.mxu0 0.0
    %1371 = vmatpush1.msra.mxu0 0.0
    %1372 = vmatprep.subr.mxu0 0.0
    %1373 = vmatpush1.msra.mxu0 0.0
    %1374 = vmatprep.subr.mxu0 0.0
    %1375 = vmatpush1.msra.mxu0 0.0
    %1376 = vmatprep.subr.mxu0 0.0
    %1377 = vmatpush1.msra.mxu0 0.0
    %1378 = vmatprep.subr.mxu0 0.0
    %1379 = vmatpush1.msra.mxu0 0.0
    %1380 = vmatprep.subr.mxu0 0.0
    %1381 = vmatpush1.msra.mxu0 0.0
    %1382 = vmatprep.subr.mxu0 0.0
    %1383 = vmatpush1.msra.mxu0 0.0
    %1384 = vmatprep.subr.mxu0 0.0
    %1385 = vmatpush1.msra.mxu0 0.0
    %1386 = vmatprep.subr.mxu0 0.0
    %1387 = vmatpush1.msra.mxu0 0.0
    %1388 = vmatprep.subr.mxu0 0.0
    %1389 = vmatpush1.msra.mxu0 0.0
    %1390 = vmatprep.subr.mxu0 0.0
    %1391 = vmatpush1.msra.mxu0 0.0
    %1392 = vmatprep.subr.mxu0 0.0
    %1393 = vmatpush1.msra.mxu0 0.0
    %1394 = vmatprep.subr.mxu0 0.0
    %1395 = vmatpush1.msra.mxu0 0.0
    %1396 = vmatprep.subr.mxu0 0.0
    %1397 = vmatpush1.msra.mxu0 0.0
    %1398 = vmatprep.subr.mxu0 0.0
    %1399 = vmatpush1.msra.mxu0 0.0
    %1400 = vmatprep.subr.mxu0 0.0
    %1401 = vmatpush1.msra.mxu0 0.0
    %1402 = vmatprep.subr.mxu0 0.0
    %1403 = vmatpush1.msra.mxu0 0.0
    %1404 = vmatprep.subr.mxu0 0.0
    %1405 = vmatpush1.msra.mxu0 0.0
    %1406 = vmatprep.subr.mxu0 0.0
    %1407 = vmatpush1.msra.mxu0 0.0
    %1408 = vmatprep.subr.mxu0 0.0
    %1409 = vmatpush1.msra.mxu0 0.0
    %1410 = vmatprep.mubr.f32.mxu0 0.0
    %1411 = vmatmul.mubr.f32.gmra.mrb[0].mxu0 %v1344
    %v1412 = vpop.f32.mrb[0].mxu0
    %v1413 = vadd.f32 0.0, %v1412
    %v1414 = vpop.f32.mrb[0].mxu0
    %1415 = vdwg.mxu0
    %v1416 = vadd.f32 %v1340, %v1413
    %v1417 = vxor.u32 %v1416, 2147483648
    %v1418 = vmul.f32 %v1417, 1.442695
    %v1419 = vpow.pop %v1418
    %v1420 = vadd.f32 %v1419, 1.0
    %v1421 = vrcp.pop %v1420
    %v1422 = vmul.f32 1.0, %v1421
    %v1423 = vtanh.pop %v1416
    %v1424 = vmul.f32 %v1422, %v1123
    %1426 = vrot.lane.b32.xlu0 %v1423, 32
    %v1427 = vpop.permute.xlu0 %1426
    %v1429 = vmul.f32 %v1422, %v1427
    %1431 = vrot.lane.b32.xlu0 %v1429, 32
    %v1432 = vpop.permute.xlu0 %1431
    %v1434 = vadd.f32 %v1424, %v1432
    %v1435 = vtanh.pop %v1434
    %1437 = vrot.lane.b32.xlu0 %v1435, 32
    %v1438 = vpop.permute.xlu0 %1437
    %v1440 = vmul.f32 %v1422, %v1438
    %1441 = vmatprep.subr.mxu0 0.0
    %1442 = vmatpush1.msra.mxu0 %v101
    %1443 = vmatprep.subr.mxu0 0.0
    %1444 = vmatpush1.msra.mxu0 %v102
    %1445 = vmatprep.subr.mxu0 0.0
    %1446 = vmatpush1.msra.mxu0 %v103
    %1447 = vmatprep.subr.mxu0 0.0
    %1448 = vmatpush1.msra.mxu0 %v104
    %1449 = vmatprep.subr.mxu0 0.0
    %1450 = vmatpush1.msra.mxu0 0.0
    %1451 = vmatprep.subr.mxu0 0.0
    %1452 = vmatpush1.msra.mxu0 0.0
    %1453 = vmatprep.subr.mxu0 0.0
    %1454 = vmatpush1.msra.mxu0 0.0
    %1455 = vmatprep.subr.mxu0 0.0
    %1456 = vmatpush1.msra.mxu0 0.0
    %1457 = vmatprep.subr.mxu0 0.0
    %1458 = vmatpush1.msra.mxu0 0.0
    %1459 = vmatprep.subr.mxu0 0.0
    %1460 = vmatpush1.msra.mxu0 0.0
    %1461 = vmatprep.subr.mxu0 0.0
    %1462 = vmatpush1.msra.mxu0 0.0
    %1463 = vmatprep.subr.mxu0 0.0
    %1464 = vmatpush1.msra.mxu0 0.0
    %1465 = vmatprep.subr.mxu0 0.0
    %1466 = vmatpush1.msra.mxu0 0.0
    %1467 = vmatprep.subr.mxu0 0.0
    %1468 = vmatpush1.msra.mxu0 0.0
    %1469 = vmatprep.subr.mxu0 0.0
    %1470 = vmatpush1.msra.mxu0 0.0
    %1471 = vmatprep.subr.mxu0 0.0
    %1472 = vmatpush1.msra.mxu0 0.0
    %1473 = vmatprep.subr.mxu0 0.0
    %1474 = vmatpush1.msra.mxu0 0.0
    %1475 = vmatprep.subr.mxu0 0.0
    %1476 = vmatpush1.msra.mxu0 0.0
    %1477 = vmatprep.subr.mxu0 0.0
    %1478 = vmatpush1.msra.mxu0 0.0
    %1479 = vmatprep.subr.mxu0 0.0
    %1480 = vmatpush1.msra.mxu0 0.0
    %1481 = vmatprep.subr.mxu0 0.0
    %1482 = vmatpush1.msra.mxu0 0.0
    %1483 = vmatprep.subr.mxu0 0.0
    %1484 = vmatpush1.msra.mxu0 0.0
    %1485 = vmatprep.subr.mxu0 0.0
    %1486 = vmatpush1.msra.mxu0 0.0
    %1487 = vmatprep.subr.mxu0 0.0
    %1488 = vmatpush1.msra.mxu0 0.0
    %1489 = vmatprep.subr.mxu0 0.0
    %1490 = vmatpush1.msra.mxu0 0.0
    %1491 = vmatprep.subr.mxu0 0.0
    %1492 = vmatpush1.msra.mxu0 0.0
    %1493 = vmatprep.subr.mxu0 0.0
    %1494 = vmatpush1.msra.mxu0 0.0
    %1495 = vmatprep.subr.mxu0 0.0
    %1496 = vmatpush1.msra.mxu0 0.0
    %1497 = vmatprep.subr.mxu0 0.0
    %1498 = vmatpush1.msra.mxu0 0.0
    %1499 = vmatprep.subr.mxu0 0.0
    %1500 = vmatpush1.msra.mxu0 0.0
    %1501 = vmatprep.subr.mxu0 0.0
    %1502 = vmatpush1.msra.mxu0 0.0
    %1503 = vmatprep.subr.mxu0 0.0
    %1504 = vmatpush1.msra.mxu0 0.0
    %1505 = vmatprep.mubr.f32.mxu0 0.0
    %1506 = vmatmul.mubr.f32.gmra.mrb[0].mxu0 %v1268
    %v1507 = vpop.f32.mrb[0].mxu0
    %v1508 = vadd.f32 0.0, %v1507
    %v1509 = vpop.f32.mrb[0].mxu0
    %1510 = vdwg.mxu0
    %v1512 = vrot.slane %v1508, 4
    %v1513 = vrot.slane %v1508, 5
    %v1516 = vadd.f32 %v193, %v1512
    %v1517 = vadd.f32 %v198, %v1513
    %v1518 = vxor.u32 %v1516, 2147483648
    %v1519 = vxor.u32 %v1517, 2147483648
    %v1520 = vmul.f32 %v1518, 1.442695
    %v1521 = vpow.pop %v1520
    %v1522 = vmul.f32 %v1519, 1.442695
    %v1523 = vpow.pop %v1522
    %v1524 = vadd.f32 %v1521, 1.0
    %v1525 = vadd.f32 %v1523, 1.0
    %v1526 = vrcp.pop %v1524
    %v1527 = vmul.f32 1.0, %v1526
    %v1528 = vrcp.pop %v1525
    %v1529 = vmul.f32 1.0, %v1528
    %v1530 = vtanh.pop %v1516
    %v1531 = vtanh.pop %v1517
    %v1534 = vrot.slane %v1247, 7
    %v1535 = vrot.slane %v1248, 7
    %v1538 = vmul.f32 %v1527, %v1534
    %v1539 = vmul.f32 %v1529, %v1535
    %1542 = vrot.lane.b32.xlu0 %v1530, 32
    %v1543 = vpop.permute.xlu0 %1542
    %1544 = vrot.lane.b32.xlu0 %v1531, 32
    %v1545 = vpop.permute.xlu0 %1544
    %v1548 = vmul.f32 %v1527, %v1543
    %v1549 = vmul.f32 %v1529, %v1545
    %1552 = vrot.lane.b32.xlu0 %v1548, 32
    %v1553 = vpop.permute.xlu0 %1552
    %1554 = vrot.lane.b32.xlu0 %v1549, 32
    %v1555 = vpop.permute.xlu0 %1554
    %v1558 = vadd.f32 %v1538, %v1553
    %v1559 = vadd.f32 %v1539, %v1555
    %v1560 = vtanh.pop %v1558
    %v1561 = vtanh.pop %v1559
    %1564 = vrot.lane.b32.xlu0 %v1560, 32
    %v1565 = vpop.permute.xlu0 %1564
    %1566 = vrot.lane.b32.xlu0 %v1561, 32
    %v1567 = vpop.permute.xlu0 %1566
    %v1570 = vmul.f32 %v1527, %v1565
    %v1571 = vmul.f32 %v1529, %v1567
    %v1574 = vrot.slane %v1570, 4
    %v1575 = vrot.slane %v1571, 3
    %v1576 = vsel %vm332, %v1575, %v1574
    %1577 = vrot.lane.b32.xlu0 %v1576, 64
    %v1578 = vpop.permute.xlu0 %1577
    %v1579 = vsel %vm201, %v1578, 0
    %1581 = vmatprep.subr.mxu0 0.0
    %1582 = vmatpush1.msra.mxu0 %v97
    %1583 = vmatprep.subr.mxu0 0.0
    %1584 = vmatpush1.msra.mxu0 %v98
    %1585 = vmatprep.subr.mxu0 0.0
    %1586 = vmatpush1.msra.mxu0 %v99
    %1587 = vmatprep.subr.mxu0 0.0
    %1588 = vmatpush1.msra.mxu0 %v100
    %1589 = vmatprep.subr.mxu0 0.0
    %1590 = vmatpush1.msra.mxu0 0.0
    %1591 = vmatprep.subr.mxu0 0.0
    %1592 = vmatpush1.msra.mxu0 0.0
    %1593 = vmatprep.subr.mxu0 0.0
    %1594 = vmatpush1.msra.mxu0 0.0
    %1595 = vmatprep.subr.mxu0 0.0
    %1596 = vmatpush1.msra.mxu0 0.0
    %1597 = vmatprep.subr.mxu0 0.0
    %1598 = vmatpush1.msra.mxu0 0.0
    %1599 = vmatprep.subr.mxu0 0.0
    %1600 = vmatpush1.msra.mxu0 0.0
    %1601 = vmatprep.subr.mxu0 0.0
    %1602 = vmatpush1.msra.mxu0 0.0
    %1603 = vmatprep.subr.mxu0 0.0
    %1604 = vmatpush1.msra.mxu0 0.0
    %1605 = vmatprep.subr.mxu0 0.0
    %1606 = vmatpush1.msra.mxu0 0.0
    %1607 = vmatprep.subr.mxu0 0.0
    %1608 = vmatpush1.msra.mxu0 0.0
    %1609 = vmatprep.subr.mxu0 0.0
    %1610 = vmatpush1.msra.mxu0 0.0
    %1611 = vmatprep.subr.mxu0 0.0
    %1612 = vmatpush1.msra.mxu0 0.0
    %1613 = vmatprep.subr.mxu0 0.0
    %1614 = vmatpush1.msra.mxu0 0.0
    %1615 = vmatprep.subr.mxu0 0.0
    %1616 = vmatpush1.msra.mxu0 0.0
    %1617 = vmatprep.subr.mxu0 0.0
    %1618 = vmatpush1.msra.mxu0 0.0
    %1619 = vmatprep.subr.mxu0 0.0
    %1620 = vmatpush1.msra.mxu0 0.0
    %1621 = vmatprep.subr.mxu0 0.0
    %1622 = vmatpush1.msra.mxu0 0.0
    %1623 = vmatprep.subr.mxu0 0.0
    %1624 = vmatpush1.msra.mxu0 0.0
    %1625 = vmatprep.subr.mxu0 0.0
    %1626 = vmatpush1.msra.mxu0 0.0
    %1627 = vmatprep.subr.mxu0 0.0
    %1628 = vmatpush1.msra.mxu0 0.0
    %1629 = vmatprep.subr.mxu0 0.0
    %1630 = vmatpush1.msra.mxu0 0.0
    %1631 = vmatprep.subr.mxu0 0.0
    %1632 = vmatpush1.msra.mxu0 0.0
    %1633 = vmatprep.subr.mxu0 0.0
    %1634 = vmatpush1.msra.mxu0 0.0
    %1635 = vmatprep.subr.mxu0 0.0
    %1636 = vmatpush1.msra.mxu0 0.0
    %1637 = vmatprep.subr.mxu0 0.0
    %1638 = vmatpush1.msra.mxu0 0.0
    %1639 = vmatprep.subr.mxu0 0.0
    %1640 = vmatpush1.msra.mxu0 0.0
    %1641 = vmatprep.subr.mxu0 0.0
    %1642 = vmatpush1.msra.mxu0 0.0
    %1643 = vmatprep.subr.mxu0 0.0
    %1644 = vmatpush1.msra.mxu0 0.0
    %1645 = vmatprep.mubr.f32.mxu0 0.0
    %1646 = vmatmul.mubr.f32.gmra.mrb[0].mxu0 %v1579
    %v1647 = vpop.f32.mrb[0].mxu0
    %v1648 = vadd.f32 0.0, %v1647
    %v1649 = vpop.f32.mrb[0].mxu0
    %1650 = vdwg.mxu0
    %v1651 = vadd.f32 %v412, %v1648
    %1653 = vrot.lane.b32.xlu0 %v1440, 64
    %v1654 = vpop.permute.xlu0 %1653
    %v1655 = vsel %vm201, %v1654, 0
    %1657 = vmatprep.subr.mxu0 0.0
    %1658 = vmatpush1.msra.mxu0 %v105
    %1659 = vmatprep.subr.mxu0 0.0
    %1660 = vmatpush1.msra.mxu0 %v106
    %1661 = vmatprep.subr.mxu0 0.0
    %1662 = vmatpush1.msra.mxu0 %v107
    %1663 = vmatprep.subr.mxu0 0.0
    %1664 = vmatpush1.msra.mxu0 %v108
    %1665 = vmatprep.subr.mxu0 0.0
    %1666 = vmatpush1.msra.mxu0 0.0
    %1667 = vmatprep.subr.mxu0 0.0
    %1668 = vmatpush1.msra.mxu0 0.0
    %1669 = vmatprep.subr.mxu0 0.0
    %1670 = vmatpush1.msra.mxu0 0.0
    %1671 = vmatprep.subr.mxu0 0.0
    %1672 = vmatpush1.msra.mxu0 0.0
    %1673 = vmatprep.subr.mxu0 0.0
    %1674 = vmatpush1.msra.mxu0 0.0
    %1675 = vmatprep.subr.mxu0 0.0
    %1676 = vmatpush1.msra.mxu0 0.0
    %1677 = vmatprep.subr.mxu0 0.0
    %1678 = vmatpush1.msra.mxu0 0.0
    %1679 = vmatprep.subr.mxu0 0.0
    %1680 = vmatpush1.msra.mxu0 0.0
    %1681 = vmatprep.subr.mxu0 0.0
    %1682 = vmatpush1.msra.mxu0 0.0
    %1683 = vmatprep.subr.mxu0 0.0
    %1684 = vmatpush1.msra.mxu0 0.0
    %1685 = vmatprep.subr.mxu0 0.0
    %1686 = vmatpush1.msra.mxu0 0.0
    %1687 = vmatprep.subr.mxu0 0.0
    %1688 = vmatpush1.msra.mxu0 0.0
    %1689 = vmatprep.subr.mxu0 0.0
    %1690 = vmatpush1.msra.mxu0 0.0
    %1691 = vmatprep.subr.mxu0 0.0
    %1692 = vmatpush1.msra.mxu0 0.0
    %1693 = vmatprep.subr.mxu0 0.0
    %1694 = vmatpush1.msra.mxu0 0.0
    %1695 = vmatprep.subr.mxu0 0.0
    %1696 = vmatpush1.msra.mxu0 0.0
    %1697 = vmatprep.subr.mxu0 0.0
    %1698 = vmatpush1.msra.mxu0 0.0
    %1699 = vmatprep.subr.mxu0 0.0
    %1700 = vmatpush1.msra.mxu0 0.0
    %1701 = vmatprep.subr.mxu0 0.0
    %1702 = vmatpush1.msra.mxu0 0.0
    %1703 = vmatprep.subr.mxu0 0.0
    %1704 = vmatpush1.msra.mxu0 0.0
    %1705 = vmatprep.subr.mxu0 0.0
    %1706 = vmatpush1.msra.mxu0 0.0
    %1707 = vmatprep.subr.mxu0 0.0
    %1708 = vmatpush1.msra.mxu0 0.0
    %1709 = vmatprep.subr.mxu0 0.0
    %1710 = vmatpush1.msra.mxu0 0.0
    %1711 = vmatprep.subr.mxu0 0.0
    %1712 = vmatpush1.msra.mxu0 0.0
    %1713 = vmatprep.subr.mxu0 0.0
    %1714 = vmatpush1.msra.mxu0 0.0
    %1715 = vmatprep.subr.mxu0 0.0
    %1716 = vmatpush1.msra.mxu0 0.0
    %1717 = vmatprep.subr.mxu0 0.0
    %1718 = vmatpush1.msra.mxu0 0.0
    %1719 = vmatprep.subr.mxu0 0.0
    %1720 = vmatpush1.msra.mxu0 0.0
    %1721 = vmatprep.mubr.f32.mxu0 0.0
    %1722 = vmatmul.mubr.f32.gmra.mrb[0].mxu0 %v1655
    %v1723 = vpop.f32.mrb[0].mxu0
    %v1724 = vadd.f32 0.0, %v1723
    %v1725 = vpop.f32.mrb[0].mxu0
    %1726 = vdwg.mxu0
    %v1727 = vadd.f32 %v1651, %v1724
    %v1728 = vxor.u32 %v1727, 2147483648
    %v1729 = vmul.f32 %v1728, 1.442695
    %v1730 = vpow.pop %v1729
    %v1731 = vadd.f32 %v1730, 1.0
    %v1732 = vrcp.pop %v1731
    %v1733 = vmul.f32 1.0, %v1732
    %v1734 = vtanh.pop %v1727
    %v1735 = vmul.f32 %v1733, %v1434
    %1737 = vrot.lane.b32.xlu0 %v1734, 32
    %v1738 = vpop.permute.xlu0 %1737
    %v1740 = vmul.f32 %v1733, %v1738
    %1742 = vrot.lane.b32.xlu0 %v1740, 32
    %v1743 = vpop.permute.xlu0 %1742
    %v1745 = vadd.f32 %v1735, %v1743
    %v1746 = vtanh.pop %v1745
    %1748 = vrot.lane.b32.xlu0 %v1746, 32
    %v1749 = vpop.permute.xlu0 %1748
    %v1751 = vmul.f32 %v1733, %v1749
    %1752 = vmatprep.subr.mxu0 0.0
    %1753 = vmatpush1.msra.mxu0 %v101
    %1754 = vmatprep.subr.mxu0 0.0
    %1755 = vmatpush1.msra.mxu0 %v102
    %1756 = vmatprep.subr.mxu0 0.0
    %1757 = vmatpush1.msra.mxu0 %v103
    %1758 = vmatprep.subr.mxu0 0.0
    %1759 = vmatpush1.msra.mxu0 %v104
    %1760 = vmatprep.subr.mxu0 0.0
    %1761 = vmatpush1.msra.mxu0 0.0
    %1762 = vmatprep.subr.mxu0 0.0
    %1763 = vmatpush1.msra.mxu0 0.0
    %1764 = vmatprep.subr.mxu0 0.0
    %1765 = vmatpush1.msra.mxu0 0.0
    %1766 = vmatprep.subr.mxu0 0.0
    %1767 = vmatpush1.msra.mxu0 0.0
    %1768 = vmatprep.subr.mxu0 0.0
    %1769 = vmatpush1.msra.mxu0 0.0
    %1770 = vmatprep.subr.mxu0 0.0
    %1771 = vmatpush1.msra.mxu0 0.0
    %1772 = vmatprep.subr.mxu0 0.0
    %1773 = vmatpush1.msra.mxu0 0.0
    %1774 = vmatprep.subr.mxu0 0.0
    %1775 = vmatpush1.msra.mxu0 0.0
    %1776 = vmatprep.subr.mxu0 0.0
    %1777 = vmatpush1.msra.mxu0 0.0
    %1778 = vmatprep.subr.mxu0 0.0
    %1779 = vmatpush1.msra.mxu0 0.0
    %1780 = vmatprep.subr.mxu0 0.0
    %1781 = vmatpush1.msra.mxu0 0.0
    %1782 = vmatprep.subr.mxu0 0.0
    %1783 = vmatpush1.msra.mxu0 0.0
    %1784 = vmatprep.subr.mxu0 0.0
    %1785 = vmatpush1.msra.mxu0 0.0
    %1786 = vmatprep.subr.mxu0 0.0
    %1787 = vmatpush1.msra.mxu0 0.0
    %1788 = vmatprep.subr.mxu0 0.0
    %1789 = vmatpush1.msra.mxu0 0.0
    %1790 = vmatprep.subr.mxu0 0.0
    %1791 = vmatpush1.msra.mxu0 0.0
    %1792 = vmatprep.subr.mxu0 0.0
    %1793 = vmatpush1.msra.mxu0 0.0
    %1794 = vmatprep.subr.mxu0 0.0
    %1795 = vmatpush1.msra.mxu0 0.0
    %1796 = vmatprep.subr.mxu0 0.0
    %1797 = vmatpush1.msra.mxu0 0.0
    %1798 = vmatprep.subr.mxu0 0.0
    %1799 = vmatpush1.msra.mxu0 0.0
    %1800 = vmatprep.subr.mxu0 0.0
    %1801 = vmatpush1.msra.mxu0 0.0
    %1802 = vmatprep.subr.mxu0 0.0
    %1803 = vmatpush1.msra.mxu0 0.0
    %1804 = vmatprep.subr.mxu0 0.0
    %1805 = vmatpush1.msra.mxu0 0.0
    %1806 = vmatprep.subr.mxu0 0.0
    %1807 = vmatpush1.msra.mxu0 0.0
    %1808 = vmatprep.subr.mxu0 0.0
    %1809 = vmatpush1.msra.mxu0 0.0
    %1810 = vmatprep.subr.mxu0 0.0
    %1811 = vmatpush1.msra.mxu0 0.0
    %1812 = vmatprep.subr.mxu0 0.0
    %1813 = vmatpush1.msra.mxu0 0.0
    %1814 = vmatprep.subr.mxu0 0.0
    %1815 = vmatpush1.msra.mxu0 0.0
    %1816 = vmatprep.mubr.f32.mxu0 0.0
    %1817 = vmatmul.mubr.f32.gmra.mrb[0].mxu0 %v1579
    %v1818 = vpop.f32.mrb[0].mxu0
    %v1819 = vadd.f32 0.0, %v1818
    %v1820 = vpop.f32.mrb[0].mxu0
    %1821 = vdwg.mxu0
    %v1823 = vrot.slane %v1819, 3
    %v1824 = vrot.slane %v1819, 4
    %v1827 = vadd.f32 %v193, %v1823
    %v1828 = vadd.f32 %v198, %v1824
    %v1829 = vxor.u32 %v1827, 2147483648
    %v1830 = vxor.u32 %v1828, 2147483648
    %v1831 = vmul.f32 %v1829, 1.442695
    %v1832 = vpow.pop %v1831
    %v1833 = vmul.f32 %v1830, 1.442695
    %v1834 = vpow.pop %v1833
    %v1835 = vadd.f32 %v1832, 1.0
    %v1836 = vadd.f32 %v1834, 1.0
    %v1837 = vrcp.pop %v1835
    %v1838 = vmul.f32 1.0, %v1837
    %v1839 = vrcp.pop %v1836
    %v1840 = vmul.f32 1.0, %v1839
    %v1841 = vtanh.pop %v1827
    %v1842 = vtanh.pop %v1828
    %v1845 = vrot.slane %v1558, 7
    %v1846 = vrot.slane %v1559, 7
    %v1849 = vmul.f32 %v1838, %v1845
    %v1850 = vmul.f32 %v1840, %v1846
    %1853 = vrot.lane.b32.xlu0 %v1841, 32
    %v1854 = vpop.permute.xlu0 %1853
    %1855 = vrot.lane.b32.xlu0 %v1842, 32
    %v1856 = vpop.permute.xlu0 %1855
    %v1859 = vmul.f32 %v1838, %v1854
    %v1860 = vmul.f32 %v1840, %v1856
    %1863 = vrot.lane.b32.xlu0 %v1859, 32
    %v1864 = vpop.permute.xlu0 %1863
    %1865 = vrot.lane.b32.xlu0 %v1860, 32
    %v1866 = vpop.permute.xlu0 %1865
    %v1869 = vadd.f32 %v1849, %v1864
    %v1870 = vadd.f32 %v1850, %v1866
    %v1871 = vtanh.pop %v1869
    %v1872 = vtanh.pop %v1870
    %1875 = vrot.lane.b32.xlu0 %v1871, 32
    %v1876 = vpop.permute.xlu0 %1875
    %1877 = vrot.lane.b32.xlu0 %v1872, 32
    %v1878 = vpop.permute.xlu0 %1877
    %v1881 = vmul.f32 %v1838, %v1876
    %v1882 = vmul.f32 %v1840, %v1878
    %v1885 = vrot.slane %v1881, 5
    %v1886 = vrot.slane %v1882, 4
    %v1887 = vsel %vm332, %v1886, %v1885
    %1888 = vrot.lane.b32.xlu0 %v1887, 64
    %v1889 = vpop.permute.xlu0 %1888
    %v1890 = vsel %vm201, %v1889, 0
    %1892 = vmatprep.subr.mxu0 0.0
    %1893 = vmatpush1.msra.mxu0 %v97
    %1894 = vmatprep.subr.mxu0 0.0
    %1895 = vmatpush1.msra.mxu0 %v98
    %1896 = vmatprep.subr.mxu0 0.0
    %1897 = vmatpush1.msra.mxu0 %v99
    %1898 = vmatprep.subr.mxu0 0.0
    %1899 = vmatpush1.msra.mxu0 %v100
    %1900 = vmatprep.subr.mxu0 0.0
    %1901 = vmatpush1.msra.mxu0 0.0
    %1902 = vmatprep.subr.mxu0 0.0
    %1903 = vmatpush1.msra.mxu0 0.0
    %1904 = vmatprep.subr.mxu0 0.0
    %1905 = vmatpush1.msra.mxu0 0.0
    %1906 = vmatprep.subr.mxu0 0.0
    %1907 = vmatpush1.msra.mxu0 0.0
    %1908 = vmatprep.subr.mxu0 0.0
    %1909 = vmatpush1.msra.mxu0 0.0
    %1910 = vmatprep.subr.mxu0 0.0
    %1911 = vmatpush1.msra.mxu0 0.0
    %1912 = vmatprep.subr.mxu0 0.0
    %1913 = vmatpush1.msra.mxu0 0.0
    %1914 = vmatprep.subr.mxu0 0.0
    %1915 = vmatpush1.msra.mxu0 0.0
    %1916 = vmatprep.subr.mxu0 0.0
    %1917 = vmatpush1.msra.mxu0 0.0
    %1918 = vmatprep.subr.mxu0 0.0
    %1919 = vmatpush1.msra.mxu0 0.0
    %1920 = vmatprep.subr.mxu0 0.0
    %1921 = vmatpush1.msra.mxu0 0.0
    %1922 = vmatprep.subr.mxu0 0.0
    %1923 = vmatpush1.msra.mxu0 0.0
    %1924 = vmatprep.subr.mxu0 0.0
    %1925 = vmatpush1.msra.mxu0 0.0
    %1926 = vmatprep.subr.mxu0 0.0
    %1927 = vmatpush1.msra.mxu0 0.0
    %1928 = vmatprep.subr.mxu0 0.0
    %1929 = vmatpush1.msra.mxu0 0.0
    %1930 = vmatprep.subr.mxu0 0.0
    %1931 = vmatpush1.msra.mxu0 0.0
    %1932 = vmatprep.subr.mxu0 0.0
    %1933 = vmatpush1.msra.mxu0 0.0
    %1934 = vmatprep.subr.mxu0 0.0
    %1935 = vmatpush1.msra.mxu0 0.0
    %1936 = vmatprep.subr.mxu0 0.0
    %1937 = vmatpush1.msra.mxu0 0.0
    %1938 = vmatprep.subr.mxu0 0.0
    %1939 = vmatpush1.msra.mxu0 0.0
    %1940 = vmatprep.subr.mxu0 0.0
    %1941 = vmatpush1.msra.mxu0 0.0
    %1942 = vmatprep.subr.mxu0 0.0
    %1943 = vmatpush1.msra.mxu0 0.0
    %1944 = vmatprep.subr.mxu0 0.0
    %1945 = vmatpush1.msra.mxu0 0.0
    %1946 = vmatprep.subr.mxu0 0.0
    %1947 = vmatpush1.msra.mxu0 0.0
    %1948 = vmatprep.subr.mxu0 0.0
    %1949 = vmatpush1.msra.mxu0 0.0
    %1950 = vmatprep.subr.mxu0 0.0
    %1951 = vmatpush1.msra.mxu0 0.0
    %1952 = vmatprep.subr.mxu0 0.0
    %1953 = vmatpush1.msra.mxu0 0.0
    %1954 = vmatprep.subr.mxu0 0.0
    %1955 = vmatpush1.msra.mxu0 0.0
    %1956 = vmatprep.mubr.f32.mxu0 0.0
    %1957 = vmatmul.mubr.f32.gmra.mrb[0].mxu0 %v1890
    %v1958 = vpop.f32.mrb[0].mxu0
    %v1959 = vadd.f32 0.0, %v1958
    %v1960 = vpop.f32.mrb[0].mxu0
    %1961 = vdwg.mxu0
    %v1962 = vadd.f32 %v412, %v1959
    %1964 = vrot.lane.b32.xlu0 %v1751, 64
    %v1965 = vpop.permute.xlu0 %1964
    %v1966 = vsel %vm201, %v1965, 0
    %1968 = vmatprep.subr.mxu0 0.0
    %1969 = vmatpush1.msra.mxu0 %v105
    %1970 = vmatprep.subr.mxu0 0.0
    %1971 = vmatpush1.msra.mxu0 %v106
    %1972 = vmatprep.subr.mxu0 0.0
    %1973 = vmatpush1.msra.mxu0 %v107
    %1974 = vmatprep.subr.mxu0 0.0
    %1975 = vmatpush1.msra.mxu0 %v108
    %1976 = vmatprep.subr.mxu0 0.0
    %1977 = vmatpush1.msra.mxu0 0.0
    %1978 = vmatprep.subr.mxu0 0.0
    %1979 = vmatpush1.msra.mxu0 0.0
    %1980 = vmatprep.subr.mxu0 0.0
    %1981 = vmatpush1.msra.mxu0 0.0
    %1982 = vmatprep.subr.mxu0 0.0
    %1983 = vmatpush1.msra.mxu0 0.0
    %1984 = vmatprep.subr.mxu0 0.0
    %1985 = vmatpush1.msra.mxu0 0.0
    %1986 = vmatprep.subr.mxu0 0.0
    %1987 = vmatpush1.msra.mxu0 0.0
    %1988 = vmatprep.subr.mxu0 0.0
    %1989 = vmatpush1.msra.mxu0 0.0
    %1990 = vmatprep.subr.mxu0 0.0
    %1991 = vmatpush1.msra.mxu0 0.0
    %1992 = vmatprep.subr.mxu0 0.0
    %1993 = vmatpush1.msra.mxu0 0.0
    %1994 = vmatprep.subr.mxu0 0.0
    %1995 = vmatpush1.msra.mxu0 0.0
    %1996 = vmatprep.subr.mxu0 0.0
    %1997 = vmatpush1.msra.mxu0 0.0
    %1998 = vmatprep.subr.mxu0 0.0
    %1999 = vmatpush1.msra.mxu0 0.0
    %2000 = vmatprep.subr.mxu0 0.0
    %2001 = vmatpush1.msra.mxu0 0.0
    %2002 = vmatprep.subr.mxu0 0.0
    %2003 = vmatpush1.msra.mxu0 0.0
    %2004 = vmatprep.subr.mxu0 0.0
    %2005 = vmatpush1.msra.mxu0 0.0
    %2006 = vmatprep.subr.mxu0 0.0
    %2007 = vmatpush1.msra.mxu0 0.0
    %2008 = vmatprep.subr.mxu0 0.0
    %2009 = vmatpush1.msra.mxu0 0.0
    %2010 = vmatprep.subr.mxu0 0.0
    %2011 = vmatpush1.msra.mxu0 0.0
    %2012 = vmatprep.subr.mxu0 0.0
    %2013 = vmatpush1.msra.mxu0 0.0
    %2014 = vmatprep.subr.mxu0 0.0
    %2015 = vmatpush1.msra.mxu0 0.0
    %2016 = vmatprep.subr.mxu0 0.0
    %2017 = vmatpush1.msra.mxu0 0.0
    %2018 = vmatprep.subr.mxu0 0.0
    %2019 = vmatpush1.msra.mxu0 0.0
    %2020 = vmatprep.subr.mxu0 0.0
    %2021 = vmatpush1.msra.mxu0 0.0
    %2022 = vmatprep.subr.mxu0 0.0
    %2023 = vmatpush1.msra.mxu0 0.0
    %2024 = vmatprep.subr.mxu0 0.0
    %2025 = vmatpush1.msra.mxu0 0.0
    %2026 = vmatprep.subr.mxu0 0.0
    %2027 = vmatpush1.msra.mxu0 0.0
    %2028 = vmatprep.subr.mxu0 0.0
    %2029 = vmatpush1.msra.mxu0 0.0
    %2030 = vmatprep.subr.mxu0 0.0
    %2031 = vmatpush1.msra.mxu0 0.0
    %2032 = vmatprep.mubr.f32.mxu0 0.0
    %2033 = vmatmul.mubr.f32.gmra.mrb[0].mxu0 %v1966
    %v2034 = vpop.f32.mrb[0].mxu0
    %v2035 = vadd.f32 0.0, %v2034
    %v2036 = vpop.f32.mrb[0].mxu0
    %2037 = vdwg.mxu0
    %v2038 = vadd.f32 %v1962, %v2035
    %v2039 = vxor.u32 %v2038, 2147483648
    %v2040 = vmul.f32 %v2039, 1.442695
    %v2041 = vpow.pop %v2040
    %v2042 = vadd.f32 %v2041, 1.0
    %v2043 = vrcp.pop %v2042
    %v2044 = vmul.f32 1.0, %v2043
    %v2045 = vtanh.pop %v2038
    %v2046 = vmul.f32 %v2044, %v1745
    %2048 = vrot.lane.b32.xlu0 %v2045, 32
    %v2049 = vpop.permute.xlu0 %2048
    %v2051 = vmul.f32 %v2044, %v2049
    %2053 = vrot.lane.b32.xlu0 %v2051, 32
    %v2054 = vpop.permute.xlu0 %2053
    %v2056 = vadd.f32 %v2046, %v2054
    %v2057 = vtanh.pop %v2056
    %2059 = vrot.lane.b32.xlu0 %v2057, 32
    %v2060 = vpop.permute.xlu0 %2059
    %v2062 = vmul.f32 %v2044, %v2060
    %2063 = vmatprep.subr.mxu0 0.0
    %2064 = vmatpush1.msra.mxu0 %v101
    %2065 = vmatprep.subr.mxu0 0.0
    %2066 = vmatpush1.msra.mxu0 %v102
    %2067 = vmatprep.subr.mxu0 0.0
    %2068 = vmatpush1.msra.mxu0 %v103
    %2069 = vmatprep.subr.mxu0 0.0
    %2070 = vmatpush1.msra.mxu0 %v104
    %2071 = vmatprep.subr.mxu0 0.0
    %2072 = vmatpush1.msra.mxu0 0.0
    %2073 = vmatprep.subr.mxu0 0.0
    %2074 = vmatpush1.msra.mxu0 0.0
    %2075 = vmatprep.subr.mxu0 0.0
    %2076 = vmatpush1.msra.mxu0 0.0
    %2077 = vmatprep.subr.mxu0 0.0
    %2078 = vmatpush1.msra.mxu0 0.0
    %2079 = vmatprep.subr.mxu0 0.0
    %2080 = vmatpush1.msra.mxu0 0.0
    %2081 = vmatprep.subr.mxu0 0.0
    %2082 = vmatpush1.msra.mxu0 0.0
    %2083 = vmatprep.subr.mxu0 0.0
    %2084 = vmatpush1.msra.mxu0 0.0
    %2085 = vmatprep.subr.mxu0 0.0
    %2086 = vmatpush1.msra.mxu0 0.0
    %2087 = vmatprep.subr.mxu0 0.0
    %2088 = vmatpush1.msra.mxu0 0.0
    %2089 = vmatprep.subr.mxu0 0.0
    %2090 = vmatpush1.msra.mxu0 0.0
    %2091 = vmatprep.subr.mxu0 0.0
    %2092 = vmatpush1.msra.mxu0 0.0
    %2093 = vmatprep.subr.mxu0 0.0
    %2094 = vmatpush1.msra.mxu0 0.0
    %2095 = vmatprep.subr.mxu0 0.0
    %2096 = vmatpush1.msra.mxu0 0.0
    %2097 = vmatprep.subr.mxu0 0.0
    %2098 = vmatpush1.msra.mxu0 0.0
    %2099 = vmatprep.subr.mxu0 0.0
    %2100 = vmatpush1.msra.mxu0 0.0
    %2101 = vmatprep.subr.mxu0 0.0
    %2102 = vmatpush1.msra.mxu0 0.0
    %2103 = vmatprep.subr.mxu0 0.0
    %2104 = vmatpush1.msra.mxu0 0.0
    %2105 = vmatprep.subr.mxu0 0.0
    %2106 = vmatpush1.msra.mxu0 0.0
    %2107 = vmatprep.subr.mxu0 0.0
    %2108 = vmatpush1.msra.mxu0 0.0
    %2109 = vmatprep.subr.mxu0 0.0
    %2110 = vmatpush1.msra.mxu0 0.0
    %2111 = vmatprep.subr.mxu0 0.0
    %2112 = vmatpush1.msra.mxu0 0.0
    %2113 = vmatprep.subr.mxu0 0.0
    %2114 = vmatpush1.msra.mxu0 0.0
    %2115 = vmatprep.subr.mxu0 0.0
    %2116 = vmatpush1.msra.mxu0 0.0
    %2117 = vmatprep.subr.mxu0 0.0
    %2118 = vmatpush1.msra.mxu0 0.0
    %2119 = vmatprep.subr.mxu0 0.0
    %2120 = vmatpush1.msra.mxu0 0.0
    %2121 = vmatprep.subr.mxu0 0.0
    %2122 = vmatpush1.msra.mxu0 0.0
    %2123 = vmatprep.subr.mxu0 0.0
    %2124 = vmatpush1.msra.mxu0 0.0
    %2125 = vmatprep.subr.mxu0 0.0
    %2126 = vmatpush1.msra.mxu0 0.0
    %2127 = vmatprep.mubr.f32.mxu0 0.0
    %2128 = vmatmul.mubr.f32.gmra.mrb[0].mxu0 %v1890
    %v2129 = vpop.f32.mrb[0].mxu0
    %v2130 = vadd.f32 0.0, %v2129
    %v2131 = vpop.f32.mrb[0].mxu0
    %2132 = vdwg.mxu0
    %v2134 = vrot.slane %v2130, 2
    %v2135 = vrot.slane %v2130, 3
    %v2138 = vadd.f32 %v193, %v2134
    %v2139 = vadd.f32 %v198, %v2135
    %v2140 = vxor.u32 %v2138, 2147483648
    %v2141 = vxor.u32 %v2139, 2147483648
    %v2142 = vmul.f32 %v2140, 1.442695
    %v2143 = vpow.pop %v2142
    %v2144 = vmul.f32 %v2141, 1.442695
    %v2145 = vpow.pop %v2144
    %v2146 = vadd.f32 %v2143, 1.0
    %v2147 = vadd.f32 %v2145, 1.0
    %v2148 = vrcp.pop %v2146
    %v2149 = vmul.f32 1.0, %v2148
    %v2150 = vrcp.pop %v2147
    %v2151 = vmul.f32 1.0, %v2150
    %v2152 = vtanh.pop %v2138
    %v2153 = vtanh.pop %v2139
    %v2156 = vrot.slane %v1869, 7
    %v2157 = vrot.slane %v1870, 7
    %v2160 = vmul.f32 %v2149, %v2156
    %v2161 = vmul.f32 %v2151, %v2157
    %2164 = vrot.lane.b32.xlu0 %v2152, 32
    %v2165 = vpop.permute.xlu0 %2164
    %2166 = vrot.lane.b32.xlu0 %v2153, 32
    %v2167 = vpop.permute.xlu0 %2166
    %v2170 = vmul.f32 %v2149, %v2165
    %v2171 = vmul.f32 %v2151, %v2167
    %2174 = vrot.lane.b32.xlu0 %v2170, 32
    %v2175 = vpop.permute.xlu0 %2174
    %2176 = vrot.lane.b32.xlu0 %v2171, 32
    %v2177 = vpop.permute.xlu0 %2176
    %v2180 = vadd.f32 %v2160, %v2175
    %v2181 = vadd.f32 %v2161, %v2177
    %v2182 = vtanh.pop %v2180
    %v2183 = vtanh.pop %v2181
    %2186 = vrot.lane.b32.xlu0 %v2182, 32
    %v2187 = vpop.permute.xlu0 %2186
    %2188 = vrot.lane.b32.xlu0 %v2183, 32
    %v2189 = vpop.permute.xlu0 %2188
    %v2192 = vmul.f32 %v2149, %v2187
    %v2193 = vmul.f32 %v2151, %v2189
    %v2196 = vrot.slane %v2192, 6
    %v2197 = vrot.slane %v2193, 5
    %v2198 = vsel %vm332, %v2197, %v2196
    %2199 = vrot.lane.b32.xlu0 %v2198, 64
    %v2200 = vpop.permute.xlu0 %2199
    %v2201 = vsel %vm201, %v2200, 0
    %2203 = vmatprep.subr.mxu0 0.0
    %2204 = vmatpush1.msra.mxu0 %v97
    %2205 = vmatprep.subr.mxu0 0.0
    %2206 = vmatpush1.msra.mxu0 %v98
    %2207 = vmatprep.subr.mxu0 0.0
    %2208 = vmatpush1.msra.mxu0 %v99
    %2209 = vmatprep.subr.mxu0 0.0
    %2210 = vmatpush1.msra.mxu0 %v100
    %2211 = vmatprep.subr.mxu0 0.0
    %2212 = vmatpush1.msra.mxu0 0.0
    %2213 = vmatprep.subr.mxu0 0.0
    %2214 = vmatpush1.msra.mxu0 0.0
    %2215 = vmatprep.subr.mxu0 0.0
    %2216 = vmatpush1.msra.mxu0 0.0
    %2217 = vmatprep.subr.mxu0 0.0
    %2218 = vmatpush1.msra.mxu0 0.0
    %2219 = vmatprep.subr.mxu0 0.0
    %2220 = vmatpush1.msra.mxu0 0.0
    %2221 = vmatprep.subr.mxu0 0.0
    %2222 = vmatpush1.msra.mxu0 0.0
    %2223 = vmatprep.subr.mxu0 0.0
    %2224 = vmatpush1.msra.mxu0 0.0
    %2225 = vmatprep.subr.mxu0 0.0
    %2226 = vmatpush1.msra.mxu0 0.0
    %2227 = vmatprep.subr.mxu0 0.0
    %2228 = vmatpush1.msra.mxu0 0.0
    %2229 = vmatprep.subr.mxu0 0.0
    %2230 = vmatpush1.msra.mxu0 0.0
    %2231 = vmatprep.subr.mxu0 0.0
    %2232 = vmatpush1.msra.mxu0 0.0
    %2233 = vmatprep.subr.mxu0 0.0
    %2234 = vmatpush1.msra.mxu0 0.0
    %2235 = vmatprep.subr.mxu0 0.0
    %2236 = vmatpush1.msra.mxu0 0.0
    %2237 = vmatprep.subr.mxu0 0.0
    %2238 = vmatpush1.msra.mxu0 0.0
    %2239 = vmatprep.subr.mxu0 0.0
    %2240 = vmatpush1.msra.mxu0 0.0
    %2241 = vmatprep.subr.mxu0 0.0
    %2242 = vmatpush1.msra.mxu0 0.0
    %2243 = vmatprep.subr.mxu0 0.0
    %2244 = vmatpush1.msra.mxu0 0.0
    %2245 = vmatprep.subr.mxu0 0.0
    %2246 = vmatpush1.msra.mxu0 0.0
    %2247 = vmatprep.subr.mxu0 0.0
    %2248 = vmatpush1.msra.mxu0 0.0
    %2249 = vmatprep.subr.mxu0 0.0
    %2250 = vmatpush1.msra.mxu0 0.0
    %2251 = vmatprep.subr.mxu0 0.0
    %2252 = vmatpush1.msra.mxu0 0.0
    %2253 = vmatprep.subr.mxu0 0.0
    %2254 = vmatpush1.msra.mxu0 0.0
    %2255 = vmatprep.subr.mxu0 0.0
    %2256 = vmatpush1.msra.mxu0 0.0
    %2257 = vmatprep.subr.mxu0 0.0
    %2258 = vmatpush1.msra.mxu0 0.0
    %2259 = vmatprep.subr.mxu0 0.0
    %2260 = vmatpush1.msra.mxu0 0.0
    %2261 = vmatprep.subr.mxu0 0.0
    %2262 = vmatpush1.msra.mxu0 0.0
    %2263 = vmatprep.subr.mxu0 0.0
    %2264 = vmatpush1.msra.mxu0 0.0
    %2265 = vmatprep.subr.mxu0 0.0
    %2266 = vmatpush1.msra.mxu0 0.0
    %2267 = vmatprep.mubr.f32.mxu0 0.0
    %2268 = vmatmul.mubr.f32.gmra.mrb[0].mxu0 %v2201
    %v2269 = vpop.f32.mrb[0].mxu0
    %v2270 = vadd.f32 0.0, %v2269
    %v2271 = vpop.f32.mrb[0].mxu0
    %2272 = vdwg.mxu0
    %v2273 = vadd.f32 %v412, %v2270
    %2275 = vrot.lane.b32.xlu0 %v2062, 64
    %v2276 = vpop.permute.xlu0 %2275
    %v2277 = vsel %vm201, %v2276, 0
    %2279 = vmatprep.subr.mxu0 0.0
    %2280 = vmatpush1.msra.mxu0 %v105
    %2281 = vmatprep.subr.mxu0 0.0
    %2282 = vmatpush1.msra.mxu0 %v106
    %2283 = vmatprep.subr.mxu0 0.0
    %2284 = vmatpush1.msra.mxu0 %v107
    %2285 = vmatprep.subr.mxu0 0.0
    %2286 = vmatpush1.msra.mxu0 %v108
    %2287 = vmatprep.subr.mxu0 0.0
    %2288 = vmatpush1.msra.mxu0 0.0
    %2289 = vmatprep.subr.mxu0 0.0
    %2290 = vmatpush1.msra.mxu0 0.0
    %2291 = vmatprep.subr.mxu0 0.0
    %2292 = vmatpush1.msra.mxu0 0.0
    %2293 = vmatprep.subr.mxu0 0.0
    %2294 = vmatpush1.msra.mxu0 0.0
    %2295 = vmatprep.subr.mxu0 0.0
    %2296 = vmatpush1.msra.mxu0 0.0
    %2297 = vmatprep.subr.mxu0 0.0
    %2298 = vmatpush1.msra.mxu0 0.0
    %2299 = vmatprep.subr.mxu0 0.0
    %2300 = vmatpush1.msra.mxu0 0.0
    %2301 = vmatprep.subr.mxu0 0.0
    %2302 = vmatpush1.msra.mxu0 0.0
    %2303 = vmatprep.subr.mxu0 0.0
    %2304 = vmatpush1.msra.mxu0 0.0
    %2305 = vmatprep.subr.mxu0 0.0
    %2306 = vmatpush1.msra.mxu0 0.0
    %2307 = vmatprep.subr.mxu0 0.0
    %2308 = vmatpush1.msra.mxu0 0.0
    %2309 = vmatprep.subr.mxu0 0.0
    %2310 = vmatpush1.msra.mxu0 0.0
    %2311 = vmatprep.subr.mxu0 0.0
    %2312 = vmatpush1.msra.mxu0 0.0
    %2313 = vmatprep.subr.mxu0 0.0
    %2314 = vmatpush1.msra.mxu0 0.0
    %2315 = vmatprep.subr.mxu0 0.0
    %2316 = vmatpush1.msra.mxu0 0.0
    %2317 = vmatprep.subr.mxu0 0.0
    %2318 = vmatpush1.msra.mxu0 0.0
    %2319 = vmatprep.subr.mxu0 0.0
    %2320 = vmatpush1.msra.mxu0 0.0
    %2321 = vmatprep.subr.mxu0 0.0
    %2322 = vmatpush1.msra.mxu0 0.0
    %2323 = vmatprep.subr.mxu0 0.0
    %2324 = vmatpush1.msra.mxu0 0.0
    %2325 = vmatprep.subr.mxu0 0.0
    %2326 = vmatpush1.msra.mxu0 0.0
    %2327 = vmatprep.subr.mxu0 0.0
    %2328 = vmatpush1.msra.mxu0 0.0
    %2329 = vmatprep.subr.mxu0 0.0
    %2330 = vmatpush1.msra.mxu0 0.0
    %2331 = vmatprep.subr.mxu0 0.0
    %2332 = vmatpush1.msra.mxu0 0.0
    %2333 = vmatprep.subr.mxu0 0.0
    %2334 = vmatpush1.msra.mxu0 0.0
    %2335 = vmatprep.subr.mxu0 0.0
    %2336 = vmatpush1.msra.mxu0 0.0
    %2337 = vmatprep.subr.mxu0 0.0
    %2338 = vmatpush1.msra.mxu0 0.0
    %2339 = vmatprep.subr.mxu0 0.0
    %2340 = vmatpush1.msra.mxu0 0.0
    %2341 = vmatprep.subr.mxu0 0.0
    %2342 = vmatpush1.msra.mxu0 0.0
    %2343 = vmatprep.mubr.f32.mxu0 0.0
    %2344 = vmatmul.mubr.f32.gmra.mrb[0].mxu0 %v2277
    %v2345 = vpop.f32.mrb[0].mxu0
    %v2346 = vadd.f32 0.0, %v2345
    %v2347 = vpop.f32.mrb[0].mxu0
    %2348 = vdwg.mxu0
    %v2349 = vadd.f32 %v2273, %v2346
    %v2350 = vxor.u32 %v2349, 2147483648
    %v2351 = vmul.f32 %v2350, 1.442695
    %v2352 = vpow.pop %v2351
    %v2353 = vadd.f32 %v2352, 1.0
    %v2354 = vrcp.pop %v2353
    %v2355 = vmul.f32 1.0, %v2354
    %v2356 = vtanh.pop %v2349
    %v2357 = vmul.f32 %v2355, %v2056
    %2359 = vrot.lane.b32.xlu0 %v2356, 32
    %v2360 = vpop.permute.xlu0 %2359
    %v2362 = vmul.f32 %v2355, %v2360
    %2364 = vrot.lane.b32.xlu0 %v2362, 32
    %v2365 = vpop.permute.xlu0 %2364
    %v2367 = vadd.f32 %v2357, %v2365
    %v2368 = vtanh.pop %v2367
    %2370 = vrot.lane.b32.xlu0 %v2368, 32
    %v2371 = vpop.permute.xlu0 %2370
    %v2373 = vmul.f32 %v2355, %v2371
    %2374 = vmatprep.subr.mxu0 0.0
    %2375 = vmatpush1.msra.mxu0 %v101
    %2376 = vmatprep.subr.mxu0 0.0
    %2377 = vmatpush1.msra.mxu0 %v102
    %2378 = vmatprep.subr.mxu0 0.0
    %2379 = vmatpush1.msra.mxu0 %v103
    %2380 = vmatprep.subr.mxu0 0.0
    %2381 = vmatpush1.msra.mxu0 %v104
    %2382 = vmatprep.subr.mxu0 0.0
    %2383 = vmatpush1.msra.mxu0 0.0
    %2384 = vmatprep.subr.mxu0 0.0
    %2385 = vmatpush1.msra.mxu0 0.0
    %2386 = vmatprep.subr.mxu0 0.0
    %2387 = vmatpush1.msra.mxu0 0.0
    %2388 = vmatprep.subr.mxu0 0.0
    %2389 = vmatpush1.msra.mxu0 0.0
    %2390 = vmatprep.subr.mxu0 0.0
    %2391 = vmatpush1.msra.mxu0 0.0
    %2392 = vmatprep.subr.mxu0 0.0
    %2393 = vmatpush1.msra.mxu0 0.0
    %2394 = vmatprep.subr.mxu0 0.0
    %2395 = vmatpush1.msra.mxu0 0.0
    %2396 = vmatprep.subr.mxu0 0.0
    %2397 = vmatpush1.msra.mxu0 0.0
    %2398 = vmatprep.subr.mxu0 0.0
    %2399 = vmatpush1.msra.mxu0 0.0
    %2400 = vmatprep.subr.mxu0 0.0
    %2401 = vmatpush1.msra.mxu0 0.0
    %2402 = vmatprep.subr.mxu0 0.0
    %2403 = vmatpush1.msra.mxu0 0.0
    %2404 = vmatprep.subr.mxu0 0.0
    %2405 = vmatpush1.msra.mxu0 0.0
    %2406 = vmatprep.subr.mxu0 0.0
    %2407 = vmatpush1.msra.mxu0 0.0
    %2408 = vmatprep.subr.mxu0 0.0
    %2409 = vmatpush1.msra.mxu0 0.0
    %2410 = vmatprep.subr.mxu0 0.0
    %2411 = vmatpush1.msra.mxu0 0.0
    %2412 = vmatprep.subr.mxu0 0.0
    %2413 = vmatpush1.msra.mxu0 0.0
    %2414 = vmatprep.subr.mxu0 0.0
    %2415 = vmatpush1.msra.mxu0 0.0
    %2416 = vmatprep.subr.mxu0 0.0
    %2417 = vmatpush1.msra.mxu0 0.0
    %2418 = vmatprep.subr.mxu0 0.0
    %2419 = vmatpush1.msra.mxu0 0.0
    %2420 = vmatprep.subr.mxu0 0.0
    %2421 = vmatpush1.msra.mxu0 0.0
    %2422 = vmatprep.subr.mxu0 0.0
    %2423 = vmatpush1.msra.mxu0 0.0
    %2424 = vmatprep.subr.mxu0 0.0
    %2425 = vmatpush1.msra.mxu0 0.0
    %2426 = vmatprep.subr.mxu0 0.0
    %2427 = vmatpush1.msra.mxu0 0.0
    %2428 = vmatprep.subr.mxu0 0.0
    %2429 = vmatpush1.msra.mxu0 0.0
    %2430 = vmatprep.subr.mxu0 0.0
    %2431 = vmatpush1.msra.mxu0 0.0
    %2432 = vmatprep.subr.mxu0 0.0
    %2433 = vmatpush1.msra.mxu0 0.0
    %2434 = vmatprep.subr.mxu0 0.0
    %2435 = vmatpush1.msra.mxu0 0.0
    %2436 = vmatprep.subr.mxu0 0.0
    %2437 = vmatpush1.msra.mxu0 0.0
    %2438 = vmatprep.mubr.f32.mxu0 0.0
    %2439 = vmatmul.mubr.f32.gmra.mrb[0].mxu0 %v2201
    %v2440 = vpop.f32.mrb[0].mxu0
    %v2441 = vadd.f32 0.0, %v2440
    %v2442 = vpop.f32.mrb[0].mxu0
    %2443 = vdwg.mxu0
    %v2445 = vrot.slane %v2441, 1
    %v2446 = vrot.slane %v2441, 2
    %v2449 = vadd.f32 %v193, %v2445
    %v2450 = vadd.f32 %v198, %v2446
    %v2451 = vxor.u32 %v2449, 2147483648
    %v2452 = vxor.u32 %v2450, 2147483648
    %v2453 = vmul.f32 %v2451, 1.442695
    %v2454 = vpow.pop %v2453
    %v2455 = vmul.f32 %v2452, 1.442695
    %v2456 = vpow.pop %v2455
    %v2457 = vadd.f32 %v2454, 1.0
    %v2458 = vadd.f32 %v2456, 1.0
    %v2459 = vrcp.pop %v2457
    %v2460 = vmul.f32 1.0, %v2459
    %v2461 = vrcp.pop %v2458
    %v2462 = vmul.f32 1.0, %v2461
    %v2463 = vtanh.pop %v2449
    %v2464 = vtanh.pop %v2450
    %v2467 = vrot.slane %v2180, 7
    %v2468 = vrot.slane %v2181, 7
    %v2471 = vmul.f32 %v2460, %v2467
    %v2472 = vmul.f32 %v2462, %v2468
    %2475 = vrot.lane.b32.xlu0 %v2463, 32
    %v2476 = vpop.permute.xlu0 %2475
    %2477 = vrot.lane.b32.xlu0 %v2464, 32
    %v2478 = vpop.permute.xlu0 %2477
    %v2481 = vmul.f32 %v2460, %v2476
    %v2482 = vmul.f32 %v2462, %v2478
    %2485 = vrot.lane.b32.xlu0 %v2481, 32
    %v2486 = vpop.permute.xlu0 %2485
    %2487 = vrot.lane.b32.xlu0 %v2482, 32
    %v2488 = vpop.permute.xlu0 %2487
    %v2491 = vadd.f32 %v2471, %v2486
    %v2492 = vadd.f32 %v2472, %v2488
    %v2493 = vtanh.pop %v2491
    %v2494 = vtanh.pop %v2492
    %2497 = vrot.lane.b32.xlu0 %v2493, 32
    %v2498 = vpop.permute.xlu0 %2497
    %2499 = vrot.lane.b32.xlu0 %v2494, 32
    %v2500 = vpop.permute.xlu0 %2499
    %v2503 = vmul.f32 %v2460, %v2498
    %v2504 = vmul.f32 %v2462, %v2500
    %v2507 = vrot.slane %v2503, 7
    %v2508 = vrot.slane %v2504, 6
    %v2509 = vsel %vm332, %v2508, %v2507
    %2510 = vrot.lane.b32.xlu0 %v2509, 64
    %v2511 = vpop.permute.xlu0 %2510
    %v2512 = vsel %vm201, %v2511, 0
    %2514 = vmatprep.subr.mxu0 0.0
    %2515 = vmatpush1.msra.mxu0 %v97
    %2516 = vmatprep.subr.mxu0 0.0
    %2517 = vmatpush1.msra.mxu0 %v98
    %2518 = vmatprep.subr.mxu0 0.0
    %2519 = vmatpush1.msra.mxu0 %v99
    %2520 = vmatprep.subr.mxu0 0.0
    %2521 = vmatpush1.msra.mxu0 %v100
    %2522 = vmatprep.subr.mxu0 0.0
    %2523 = vmatpush1.msra.mxu0 0.0
    %2524 = vmatprep.subr.mxu0 0.0
    %2525 = vmatpush1.msra.mxu0 0.0
    %2526 = vmatprep.subr.mxu0 0.0
    %2527 = vmatpush1.msra.mxu0 0.0
    %2528 = vmatprep.subr.mxu0 0.0
    %2529 = vmatpush1.msra.mxu0 0.0
    %2530 = vmatprep.subr.mxu0 0.0
    %2531 = vmatpush1.msra.mxu0 0.0
    %2532 = vmatprep.subr.mxu0 0.0
    %2533 = vmatpush1.msra.mxu0 0.0
    %2534 = vmatprep.subr.mxu0 0.0
    %2535 = vmatpush1.msra.mxu0 0.0
    %2536 = vmatprep.subr.mxu0 0.0
    %2537 = vmatpush1.msra.mxu0 0.0
    %2538 = vmatprep.subr.mxu0 0.0
    %2539 = vmatpush1.msra.mxu0 0.0
    %2540 = vmatprep.subr.mxu0 0.0
    %2541 = vmatpush1.msra.mxu0 0.0
    %2542 = vmatprep.subr.mxu0 0.0
    %2543 = vmatpush1.msra.mxu0 0.0
    %2544 = vmatprep.subr.mxu0 0.0
    %2545 = vmatpush1.msra.mxu0 0.0
    %2546 = vmatprep.subr.mxu0 0.0
    %2547 = vmatpush1.msra.mxu0 0.0
    %2548 = vmatprep.subr.mxu0 0.0
    %2549 = vmatpush1.msra.mxu0 0.0
    %2550 = vmatprep.subr.mxu0 0.0
    %2551 = vmatpush1.msra.mxu0 0.0
    %2552 = vmatprep.subr.mxu0 0.0
    %2553 = vmatpush1.msra.mxu0 0.0
    %2554 = vmatprep.subr.mxu0 0.0
    %2555 = vmatpush1.msra.mxu0 0.0
    %2556 = vmatprep.subr.mxu0 0.0
    %2557 = vmatpush1.msra.mxu0 0.0
    %2558 = vmatprep.subr.mxu0 0.0
    %2559 = vmatpush1.msra.mxu0 0.0
    %2560 = vmatprep.subr.mxu0 0.0
    %2561 = vmatpush1.msra.mxu0 0.0
    %2562 = vmatprep.subr.mxu0 0.0
    %2563 = vmatpush1.msra.mxu0 0.0
    %2564 = vmatprep.subr.mxu0 0.0
    %2565 = vmatpush1.msra.mxu0 0.0
    %2566 = vmatprep.subr.mxu0 0.0
    %2567 = vmatpush1.msra.mxu0 0.0
    %2568 = vmatprep.subr.mxu0 0.0
    %2569 = vmatpush1.msra.mxu0 0.0
    %2570 = vmatprep.subr.mxu0 0.0
    %2571 = vmatpush1.msra.mxu0 0.0
    %2572 = vmatprep.subr.mxu0 0.0
    %2573 = vmatpush1.msra.mxu0 0.0
    %2574 = vmatprep.subr.mxu0 0.0
    %2575 = vmatpush1.msra.mxu0 0.0
    %2576 = vmatprep.subr.mxu0 0.0
    %2577 = vmatpush1.msra.mxu0 0.0
    %2578 = vmatprep.mubr.f32.mxu0 0.0
    %2579 = vmatmul.mubr.f32.gmra.mrb[0].mxu0 %v2512
    %v2580 = vpop.f32.mrb[0].mxu0
    %v2581 = vadd.f32 0.0, %v2580
    %v2582 = vpop.f32.mrb[0].mxu0
    %2583 = vdwg.mxu0
    %v2584 = vadd.f32 %v412, %v2581
    %2586 = vrot.lane.b32.xlu0 %v2373, 64
    %v2587 = vpop.permute.xlu0 %2586
    %v2588 = vsel %vm201, %v2587, 0
    %2590 = vmatprep.subr.mxu0 0.0
    %2591 = vmatpush1.msra.mxu0 %v105
    %2592 = vmatprep.subr.mxu0 0.0
    %2593 = vmatpush1.msra.mxu0 %v106
    %2594 = vmatprep.subr.mxu0 0.0
    %2595 = vmatpush1.msra.mxu0 %v107
    %2596 = vmatprep.subr.mxu0 0.0
    %2597 = vmatpush1.msra.mxu0 %v108
    %2598 = vmatprep.subr.mxu0 0.0
    %2599 = vmatpush1.msra.mxu0 0.0
    %2600 = vmatprep.subr.mxu0 0.0
    %2601 = vmatpush1.msra.mxu0 0.0
    %2602 = vmatprep.subr.mxu0 0.0
    %2603 = vmatpush1.msra.mxu0 0.0
    %2604 = vmatprep.subr.mxu0 0.0
    %2605 = vmatpush1.msra.mxu0 0.0
    %2606 = vmatprep.subr.mxu0 0.0
    %2607 = vmatpush1.msra.mxu0 0.0
    %2608 = vmatprep.subr.mxu0 0.0
    %2609 = vmatpush1.msra.mxu0 0.0
    %2610 = vmatprep.subr.mxu0 0.0
    %2611 = vmatpush1.msra.mxu0 0.0
    %2612 = vmatprep.subr.mxu0 0.0
    %2613 = vmatpush1.msra.mxu0 0.0
    %2614 = vmatprep.subr.mxu0 0.0
    %2615 = vmatpush1.msra.mxu0 0.0
    %2616 = vmatprep.subr.mxu0 0.0
    %2617 = vmatpush1.msra.mxu0 0.0
    %2618 = vmatprep.subr.mxu0 0.0
    %2619 = vmatpush1.msra.mxu0 0.0
    %2620 = vmatprep.subr.mxu0 0.0
    %2621 = vmatpush1.msra.mxu0 0.0
    %2622 = vmatprep.subr.mxu0 0.0
    %2623 = vmatpush1.msra.mxu0 0.0
    %2624 = vmatprep.subr.mxu0 0.0
    %2625 = vmatpush1.msra.mxu0 0.0
    %2626 = vmatprep.subr.mxu0 0.0
    %2627 = vmatpush1.msra.mxu0 0.0
    %2628 = vmatprep.subr.mxu0 0.0
    %2629 = vmatpush1.msra.mxu0 0.0
    %2630 = vmatprep.subr.mxu0 0.0
    %2631 = vmatpush1.msra.mxu0 0.0
    %2632 = vmatprep.subr.mxu0 0.0
    %2633 = vmatpush1.msra.mxu0 0.0
    %2634 = vmatprep.subr.mxu0 0.0
    %2635 = vmatpush1.msra.mxu0 0.0
    %2636 = vmatprep.subr.mxu0 0.0
    %2637 = vmatpush1.msra.mxu0 0.0
    %2638 = vmatprep.subr.mxu0 0.0
    %2639 = vmatpush1.msra.mxu0 0.0
    %2640 = vmatprep.subr.mxu0 0.0
    %2641 = vmatpush1.msra.mxu0 0.0
    %2642 = vmatprep.subr.mxu0 0.0
    %2643 = vmatpush1.msra.mxu0 0.0
    %2644 = vmatprep.subr.mxu0 0.0
    %2645 = vmatpush1.msra.mxu0 0.0
    %2646 = vmatprep.subr.mxu0 0.0
    %2647 = vmatpush1.msra.mxu0 0.0
    %2648 = vmatprep.subr.mxu0 0.0
    %2649 = vmatpush1.msra.mxu0 0.0
    %2650 = vmatprep.subr.mxu0 0.0
    %2651 = vmatpush1.msra.mxu0 0.0
    %2652 = vmatprep.subr.mxu0 0.0
    %2653 = vmatpush1.msra.mxu0 0.0
    %2654 = vmatprep.mubr.f32.mxu0 0.0
    %2655 = vmatmul.mubr.f32.gmra.mrb[0].mxu0 %v2588
    %v2656 = vpop.f32.mrb[0].mxu0
    %v2657 = vadd.f32 0.0, %v2656
    %v2658 = vpop.f32.mrb[0].mxu0
    %2659 = vdwg.mxu0
    %v2660 = vadd.f32 %v2584, %v2657
    %v2661 = vxor.u32 %v2660, 2147483648
    %v2662 = vmul.f32 %v2661, 1.442695
    %v2663 = vpow.pop %v2662
    %v2664 = vadd.f32 %v2663, 1.0
    %v2665 = vrcp.pop %v2664
    %v2666 = vmul.f32 1.0, %v2665
    %v2667 = vtanh.pop %v2660
    %v2668 = vmul.f32 %v2666, %v2367
    %2670 = vrot.lane.b32.xlu0 %v2667, 32
    %v2671 = vpop.permute.xlu0 %2670
    %v2673 = vmul.f32 %v2666, %v2671
    %2675 = vrot.lane.b32.xlu0 %v2673, 32
    %v2676 = vpop.permute.xlu0 %2675
    %v2678 = vadd.f32 %v2668, %v2676
    %v2679 = vtanh.pop %v2678
    %2681 = vrot.lane.b32.xlu0 %v2679, 32
    %v2682 = vpop.permute.xlu0 %2681
    %v2684 = vmul.f32 %v2666, %v2682
    %v2685 = vmax.f32 %v2684, 0.0
    %v2686 = vld [vmem:[#allocation8] sm:$0xff]
    %v2687 = vld [vmem:[#allocation8 + $0x8] sm:$0xff]
    %v2688 = vld [vmem:[#allocation8 + $0x10] sm:$0xff]
    %v2689 = vld [vmem:[#allocation8 + $0x18] sm:$0xff]
    %v2690 = vld [vmem:[%s8] sm:$0x1]
    %v2692 = vlaneseq
    %v2693 = vshrl.u32 %v2692, 7
    %v2694 = vsub.s32 0, %v2693
    %v2695 = vrot.slane %v2690, %v2694
    %2698 = vrot.lane.b32.xlu0 %v2685, 64
    %v2699 = vpop.permute.xlu0 %2698
    %v2700 = vsel %vm201, %v2699, 0
    %2702 = vmatprep.subr.mxu0 0.0
    %2703 = vmatpush1.msra.mxu0 %v2686
    %2704 = vmatprep.subr.mxu0 0.0
    %2705 = vmatpush1.msra.mxu0 %v2687
    %2706 = vmatprep.subr.mxu0 0.0
    %2707 = vmatpush1.msra.mxu0 %v2688
    %2708 = vmatprep.subr.mxu0 0.0
    %2709 = vmatpush1.msra.mxu0 %v2689
    %2710 = vmatprep.subr.mxu0 0.0
    %2711 = vmatpush1.msra.mxu0 0.0
    %2712 = vmatprep.subr.mxu0 0.0
    %2713 = vmatpush1.msra.mxu0 0.0
    %2714 = vmatprep.subr.mxu0 0.0
    %2715 = vmatpush1.msra.mxu0 0.0
    %2716 = vmatprep.subr.mxu0 0.0
    %2717 = vmatpush1.msra.mxu0 0.0
    %2718 = vmatprep.subr.mxu0 0.0
    %2719 = vmatpush1.msra.mxu0 0.0
    %2720 = vmatprep.subr.mxu0 0.0
    %2721 = vmatpush1.msra.mxu0 0.0
    %2722 = vmatprep.subr.mxu0 0.0
    %2723 = vmatpush1.msra.mxu0 0.0
    %2724 = vmatprep.subr.mxu0 0.0
    %2725 = vmatpush1.msra.mxu0 0.0
    %2726 = vmatprep.subr.mxu0 0.0
    %2727 = vmatpush1.msra.mxu0 0.0
    %2728 = vmatprep.subr.mxu0 0.0
    %2729 = vmatpush1.msra.mxu0 0.0
    %2730 = vmatprep.subr.mxu0 0.0
    %2731 = vmatpush1.msra.mxu0 0.0
    %2732 = vmatprep.subr.mxu0 0.0
    %2733 = vmatpush1.msra.mxu0 0.0
    %2734 = vmatprep.subr.mxu0 0.0
    %2735 = vmatpush1.msra.mxu0 0.0
    %2736 = vmatprep.subr.mxu0 0.0
    %2737 = vmatpush1.msra.mxu0 0.0
    %2738 = vmatprep.subr.mxu0 0.0
    %2739 = vmatpush1.msra.mxu0 0.0
    %2740 = vmatprep.subr.mxu0 0.0
    %2741 = vmatpush1.msra.mxu0 0.0
    %2742 = vmatprep.subr.mxu0 0.0
    %2743 = vmatpush1.msra.mxu0 0.0
    %2744 = vmatprep.subr.mxu0 0.0
    %2745 = vmatpush1.msra.mxu0 0.0
    %2746 = vmatprep.subr.mxu0 0.0
    %2747 = vmatpush1.msra.mxu0 0.0
    %2748 = vmatprep.subr.mxu0 0.0
    %2749 = vmatpush1.msra.mxu0 0.0
    %2750 = vmatprep.subr.mxu0 0.0
    %2751 = vmatpush1.msra.mxu0 0.0
    %2752 = vmatprep.subr.mxu0 0.0
    %2753 = vmatpush1.msra.mxu0 0.0
    %2754 = vmatprep.subr.mxu0 0.0
    %2755 = vmatpush1.msra.mxu0 0.0
    %2756 = vmatprep.subr.mxu0 0.0
    %2757 = vmatpush1.msra.mxu0 0.0
    %2758 = vmatprep.subr.mxu0 0.0
    %2759 = vmatpush1.msra.mxu0 0.0
    %2760 = vmatprep.subr.mxu0 0.0
    %2761 = vmatpush1.msra.mxu0 0.0
    %2762 = vmatprep.subr.mxu0 0.0
    %2763 = vmatpush1.msra.mxu0 0.0
    %2764 = vmatprep.subr.mxu0 0.0
    %2765 = vmatpush1.msra.mxu0 0.0
    %2766 = vmatprep.mubr.f32.mxu0 0.0
    %2767 = vmatmul.mubr.f32.gmra.mrb[0].mxu0 %v2700
    %v2768 = vpop.f32.mrb[0].mxu0
    %v2769 = vadd.f32 %v2695, %v2768
    %v2770 = vpop.f32.mrb[0].mxu0
    %2771 = vdwg.mxu0
    %v2772 = vmax.f32 %v2769, 0.0
    %v2773 = vld [vmem:[%s9] sm:$0xff]
    %v2774 = vld [vmem:[%s9 + $0x8] sm:$0xff]
    %v2775 = vld [vmem:[%s9 + $0x10] sm:$0xff]
    %v2776 = vld [vmem:[%s9 + $0x18] sm:$0xff]
    %v2777 = vld [vmem:[#allocation2] sm:$0x1]
    %v2779 = vlaneseq
    %v2780 = vshrl.u32 %v2779, 7
    %v2781 = vsub.s32 0, %v2780
    %v2782 = vrot.slane %v2777, %v2781
    %v2785 = vsel %vm201, %v2772, 0
    %2787 = vmatprep.subr.mxu0 0.0
    %2788 = vmatpush1.msra.mxu0 %v2773
    %2789 = vmatprep.subr.mxu0 0.0
    %2790 = vmatpush1.msra.mxu0 %v2774
    %2791 = vmatprep.subr.mxu0 0.0
    %2792 = vmatpush1.msra.mxu0 %v2775
    %2793 = vmatprep.subr.mxu0 0.0
    %2794 = vmatpush1.msra.mxu0 %v2776
    %2795 = vmatprep.subr.mxu0 0.0
    %2796 = vmatpush1.msra.mxu0 0.0
    %2797 = vmatprep.subr.mxu0 0.0
    %2798 = vmatpush1.msra.mxu0 0.0
    %2799 = vmatprep.subr.mxu0 0.0
    %2800 = vmatpush1.msra.mxu0 0.0
    %2801 = vmatprep.subr.mxu0 0.0
    %2802 = vmatpush1.msra.mxu0 0.0
    %2803 = vmatprep.subr.mxu0 0.0
    %2804 = vmatpush1.msra.mxu0 0.0
    %2805 = vmatprep.subr.mxu0 0.0
    %2806 = vmatpush1.msra.mxu0 0.0
    %2807 = vmatprep.subr.mxu0 0.0
    %2808 = vmatpush1.msra.mxu0 0.0
    %2809 = vmatprep.subr.mxu0 0.0
    %2810 = vmatpush1.msra.mxu0 0.0
    %2811 = vmatprep.subr.mxu0 0.0
    %2812 = vmatpush1.msra.mxu0 0.0
    %2813 = vmatprep.subr.mxu0 0.0
    %2814 = vmatpush1.msra.mxu0 0.0
    %2815 = vmatprep.subr.mxu0 0.0
    %2816 = vmatpush1.msra.mxu0 0.0
    %2817 = vmatprep.subr.mxu0 0.0
    %2818 = vmatpush1.msra.mxu0 0.0
    %2819 = vmatprep.subr.mxu0 0.0
    %2820 = vmatpush1.msra.mxu0 0.0
    %2821 = vmatprep.subr.mxu0 0.0
    %2822 = vmatpush1.msra.mxu0 0.0
    %2823 = vmatprep.subr.mxu0 0.0
    %2824 = vmatpush1.msra.mxu0 0.0
    %2825 = vmatprep.subr.mxu0 0.0
    %2826 = vmatpush1.msra.mxu0 0.0
    %2827 = vmatprep.subr.mxu0 0.0
    %2828 = vmatpush1.msra.mxu0 0.0
    %2829 = vmatprep.subr.mxu0 0.0
    %2830 = vmatpush1.msra.mxu0 0.0
    %2831 = vmatprep.subr.mxu0 0.0
    %2832 = vmatpush1.msra.mxu0 0.0
    %2833 = vmatprep.subr.mxu0 0.0
    %2834 = vmatpush1.msra.mxu0 0.0
    %2835 = vmatprep.subr.mxu0 0.0
    %2836 = vmatpush1.msra.mxu0 0.0
    %2837 = vmatprep.subr.mxu0 0.0
    %2838 = vmatpush1.msra.mxu0 0.0
    %2839 = vmatprep.subr.mxu0 0.0
    %2840 = vmatpush1.msra.mxu0 0.0
    %2841 = vmatprep.subr.mxu0 0.0
    %2842 = vmatpush1.msra.mxu0 0.0
    %2843 = vmatprep.subr.mxu0 0.0
    %2844 = vmatpush1.msra.mxu0 0.0
    %2845 = vmatprep.subr.mxu0 0.0
    %2846 = vmatpush1.msra.mxu0 0.0
    %2847 = vmatprep.subr.mxu0 0.0
    %2848 = vmatpush1.msra.mxu0 0.0
    %2849 = vmatprep.subr.mxu0 0.0
    %2850 = vmatpush1.msra.mxu0 0.0
    %2851 = vmatprep.mubr.f32.mxu0 0.0
    %2852 = vmatmul.mubr.f32.gmra.mrb[0].mxu0 %v2785
    %v2853 = vpop.f32.mrb[0].mxu0
    %v2854 = vadd.f32 %v2782, %v2853
    %v2855 = vpop.f32.mrb[0].mxu0
    %2856 = vdwg.mxu0
    %vm2857 = vcmask 1024
    %2858 = vst.msk [vmem:[%s11] sm:$0x3] %vm2857, %v2854
    // Predicated region
    $region62: #{enhanced_lstm_forward.1} parent=1 // pred_check
      _
    $region63: #{enhanced_lstm_forward.1} parent=1 // pred_check_branch
      %2860 = sbr.rel (0) target = $region65
    $region64: #{enhanced_lstm_forward.1} parent=1 // pred_region
      _
    $region65: #{enhanced_lstm_forward.1} parent=1 // pred_fallthru
      _
    // Predicated region
    $region66: #{enhanced_lstm_forward.1} parent=1 // pred_check
      _
    $region67: #{enhanced_lstm_forward.1} parent=1 // pred_check_branch
      %2862 = sbr.rel (0) target = $region69
    $region68: #{enhanced_lstm_forward.1} parent=1 // pred_region
      _
    $region69: #{enhanced_lstm_forward.1} parent=1 // pred_fallthru
      _
    %2863 = vsyncpa [#allocation4], 1
    %2864 = vsyncpa [#allocation6], 1
    %2865 = vsyncpa [#allocation9], 1

</llo_original>
